<compile_context>
chip_gen: v5e
topology: v5e:2x2
jax: 0.10.0
libtpu: 0.0.40
codegen_flags: <defaults>
</compile_context>

<pallas_src>
import functools
import math

import jax
import jax.numpy as jnp
from jax.experimental import pallas as pl
from jax.experimental.pallas import tpu as pltpu


# Order in which packed parameter arrays are passed to the kernel.
_PACKED_KEYS = (
    "attn_wq", "attn_wk", "attn_wv", "attn_bq", "attn_bk", "attn_bv",
    "attn_wo", "attn_bo", "attn_ln_g", "attn_ln_b",
    "ffn_w1", "ffn_b1", "ffn_w2", "ffn_b2", "ffn_ln_g", "ffn_ln_b",
    "final_ln_g", "final_ln_b",
)


def _const_index_map(ndim):
    def im(b):
        return (0,) * ndim
    return im


# ----------------------------------------------------------------------------
# Fused whole-stack kernel (one invocation per batch element)
# ----------------------------------------------------------------------------

def _decoder_stack_kernel(*refs, n_layers, n_heads, scale,
                          tgt_mode, src_mode, compute_dtype):
    it = iter(refs)
    x_ref = next(it)          # (1, Sq, D)
    mem_ref = next(it)        # (1, Sk, D)
    tmask_ref = next(it) if tgt_mode == "array" else None
    smask_ref = next(it) if src_mode == "array" else None
    (wq_ref, wk_ref, wv_ref, bq_ref, bk_ref, bv_ref, wo_ref, bo_ref,
     alng_ref, alnb_ref, w1_ref, b1_ref, w2_ref, b2_ref, flng_ref, flnb_ref,
     ling_ref, linb_ref) = [next(it) for _ in range(18)]
    o_ref = next(it)          # (1, Sq, D)

    x = x_ref[0]              # (Sq, D) f32
    mem = mem_ref[0]          # (Sk, D) f32
    Sq, D = x.shape
    Sk = mem.shape[0]
    H = n_heads

    def layer_norm(z, g, b):
        # LayerNorm over the last axis, eps=1e-5, biased variance (PyTorch).
        m = jnp.mean(z, axis=-1, keepdims=True)
        v = jnp.mean((z - m) ** 2, axis=-1, keepdims=True)
        return (z - m) * jax.lax.rsqrt(v + 1e-5) * g + b

    def make_bias(mode, mref, sq, sk):
        if mode == "none":
            return None
        if mode == "causal":
            row = jax.lax.broadcasted_iota(jnp.int32, (sq, sk), 0)
            col = jax.lax.broadcasted_iota(jnp.int32, (sq, sk), 1)
            return jnp.where(col <= row, 0.0, -1e9).astype(jnp.float32)
        return mref[...]      # pre-converted additive mask (sq, sk)

    tgt_bias = make_bias(tgt_mode, tmask_ref, Sq, Sq)
    src_bias = make_bias(src_mode, smask_ref, Sq, Sk)

    def bmm(a, b, cdims):
        # leading-batch 3-D matmul (head axis = batch dim 0), f32 accumulation
        return jax.lax.dot_general(a, b, (cdims, ((0,), (0,))),
                                   preferred_element_type=jnp.float32)

    def mha(xq, xkv, wq, wk, wv, bq, bk, bv, wo, bo, bias):
        # wq/wk/wv: (H, D, dk)   bq/bk/bv: (H, 1, dk)
        # wo: (H, dk, D)         bo: (1, D)
        sq = xq.shape[0]
        sk = xkv.shape[0]
        xq_b = jnp.broadcast_to(xq.astype(compute_dtype)[None], (H, sq, D))
        xkv_b = jnp.broadcast_to(xkv.astype(compute_dtype)[None], (H, sk, D))
        q3 = bmm(xq_b, wq, ((2,), (1,))) + bq          # (H, sq, dk)
        k3 = bmm(xkv_b, wk, ((2,), (1,))) + bk         # (H, sk, dk)
        v3 = bmm(xkv_b, wv, ((2,), (1,))) + bv         # (H, sk, dk)
        s = bmm(q3.astype(compute_dtype), k3.astype(compute_dtype),
                ((2,), (2,))) * scale                  # (H, sq, sk)
        if bias is not None:
            s = s + bias[None]
        # softmax statistics stay in f32; exact normalization for parity
        s = s - jnp.max(s, axis=-1, keepdims=True)
        p = jnp.exp(s)
        p = p / jnp.sum(p, axis=-1, keepdims=True)
        ctx = bmm(p.astype(compute_dtype), v3.astype(compute_dtype),
                  ((2,), (1,)))                        # (H, sq, dk)
        # head merge == sum over heads of per-head output projections
        proj = bmm(ctx.astype(compute_dtype), wo, ((2,), (1,)))   # (H, sq, D)
        return jnp.sum(proj, axis=0) + bo              # (sq, D)

    h = x
    for l in range(n_layers):
        i_self, i_cross = 2 * l, 2 * l + 1
        # --- self attention + residual + LayerNorm -------------------------
        y = mha(h, h, wq_ref[i_self], wk_ref[i_self], wv_ref[i_self],
                bq_ref[i_self], bk_ref[i_self], bv_ref[i_self],
                wo_ref[i_self], bo_ref[i_self], tgt_bias)
        h = layer_norm(h + y, alng_ref[i_self], alnb_ref[i_self])
        # --- cross attention + residual + LayerNorm ------------------------
        y = mha(h, mem, wq_ref[i_cross], wk_ref[i_cross], wv_ref[i_cross],
                bq_ref[i_cross], bk_ref[i_cross], bv_ref[i_cross],
                wo_ref[i_cross], bo_ref[i_cross], src_bias)
        h = layer_norm(h + y, alng_ref[i_cross], alnb_ref[i_cross])
        # --- feed-forward + residual + LayerNorm ---------------------------
        a = jnp.dot(h.astype(compute_dtype), w1_ref[l],
                    preferred_element_type=jnp.float32) + b1_ref[l]
        a = jnp.maximum(a, 0.0)
        y = jnp.dot(a.astype(compute_dtype), w2_ref[l],
                    preferred_element_type=jnp.float32) + b2_ref[l]
        h = layer_norm(h + y, flng_ref[l], flnb_ref[l])

    # final LayerNorm fused into the same kernel (no extra launch)
    o_ref[0] = layer_norm(h, ling_ref[...], linb_ref[...])


# ----------------------------------------------------------------------------
# Wrapper: one pallas_call per forward pass
# ----------------------------------------------------------------------------

def decoder_forward(packed, x, memory, *, tgt_mask=None, src_mask=None,
                    n_heads, compute_dtype=jnp.float32):
    """x: (B, Sq, D); memory: (B, Sk, D); masks: None | 'causal' | (Sq, S) array."""
    B, Sq, D = x.shape
    Sk = memory.shape[1]
    n_layers = packed["ffn_w1"].shape[0]
    scale = 1.0 / math.sqrt(D // n_heads)

    def mode_of(m):
        if m is None:
            return "none"
        if isinstance(m, str):
            assert m == "causal", f"unknown mask mode {m}"
            return "causal"
        return "array"

    tgt_mode, src_mode = mode_of(tgt_mask), mode_of(src_mask)

    args = [x, memory]
    in_specs = [pl.BlockSpec((1, Sq, D), lambda b: (b, 0, 0)),
                pl.BlockSpec((1, Sk, D), lambda b: (b, 0, 0))]
    if tgt_mode == "array":
        add = jnp.where(tgt_mask == 0, -1e9, 0.0).astype(jnp.float32)
        args.append(add.reshape(Sq, Sq))
        in_specs.append(pl.BlockSpec((Sq, Sq), lambda b: (0, 0)))
    if src_mode == "array":
        add = jnp.where(src_mask == 0, -1e9, 0.0).astype(jnp.float32)
        args.append(add.reshape(Sq, Sk))
        in_specs.append(pl.BlockSpec((Sq, Sk), lambda b: (0, 0)))
    for key in _PACKED_KEYS:
        arr = packed[key]
        args.append(arr)
        in_specs.append(pl.BlockSpec(arr.shape, _const_index_map(arr.ndim)))

    kernel = functools.partial(
        _decoder_stack_kernel, n_layers=n_layers, n_heads=n_heads, scale=scale,
        tgt_mode=tgt_mode, src_mode=src_mode, compute_dtype=compute_dtype)

    return pl.pallas_call(
        kernel,
        out_shape=jax.ShapeDtypeStruct((B, Sq, D), jnp.float32),
        grid=(B,),
        in_specs=in_specs,
        out_specs=pl.BlockSpec((1, Sq, D), lambda b: (b, 0, 0)),
        compiler_params=pltpu.CompilerParams(
            dimension_semantics=("parallel",),
            vmem_limit_bytes=32 * 1024 * 1024),
    )(*args)


# ----------------------------------------------------------------------------
# One-time parameter packing (head-major weights, per-layer stacking)
# ----------------------------------------------------------------------------

def pack_params(raw, n_heads, compute_dtype=jnp.float32):
    layers = raw["layers"]
    L = len(layers)
    D = raw["ln_g"].shape[0]
    dk = D // n_heads
    roles = ("self_attn", "cross_attn")

    def head_in(w):    # (D, D) -> (H, D, dk)   column slice per head
        return jnp.transpose(w.reshape(D, n_heads, dk), (1, 0, 2))

    def head_bias(b):  # (D,)   -> (H, 1, dk)
        return b.reshape(n_heads, 1, dk)

    def head_out(w):   # (D, D) -> (H, dk, D)   row slice per head
        return w.reshape(n_heads, dk, D)

    def attn_stack(fn, field, dtype):
        return jnp.stack([fn(layers[l][r][field])
                          for l in range(L) for r in roles]).astype(dtype)

    packed = {
        "attn_wq": attn_stack(head_in, "wq", compute_dtype),    # (2L,H,D,dk)
        "attn_wk": attn_stack(head_in, "wk", compute_dtype),
        "attn_wv": attn_stack(head_in, "wv", compute_dtype),
        "attn_bq": attn_stack(head_bias, "bq", jnp.float32),    # (2L,H,1,dk)
        "attn_bk": attn_stack(head_bias, "bk", jnp.float32),
        "attn_bv": attn_stack(head_bias, "bv", jnp.float32),
        "attn_wo": attn_stack(head_out, "wo", compute_dtype),   # (2L,H,dk,D)
        "attn_bo": attn_stack(lambda b: b.reshape(1, D), "bo", jnp.float32),
        "attn_ln_g": jnp.stack([layers[l][g].reshape(1, D)
                                for l in range(L) for g in ("ln1_g", "ln2_g")]),
        "attn_ln_b": jnp.stack([layers[l][g].reshape(1, D)
                                for l in range(L) for g in ("ln1_b", "ln2_b")]),
        "ffn_w1": jnp.stack([layers[l]["ffn_w1"] for l in range(L)]
                            ).astype(compute_dtype),            # (L,D,F)
        "ffn_b1": jnp.stack([layers[l]["ffn_b1"].reshape(1, -1) for l in range(L)]),
        "ffn_w2": jnp.stack([layers[l]["ffn_w2"] for l in range(L)]
                            ).astype(compute_dtype),            # (L,F,D)
        "ffn_b2": jnp.stack([layers[l]["ffn_b2"].reshape(1, D) for l in range(L)]),
        "ffn_ln_g": jnp.stack([layers[l]["ln3_g"].reshape(1, D) for l in range(L)]),
        "ffn_ln_b": jnp.stack([layers[l]["ln3_b"].reshape(1, D) for l in range(L)]),
        "final_ln_g": raw["ln_g"].reshape(1, D),
        "final_ln_b": raw["ln_b"].reshape(1, D),
    }
    return packed


# ----------------------------------------------------------------------------
# Deterministic parameter init (matches shapes of the PyTorch module)
# ----------------------------------------------------------------------------

def init_params(key, d_model, n_heads, d_ff, n_layers):
    def lin(key, fan_in, fan_out):
        kw, kb = jax.random.split(key)
        w = jax.random.normal(kw, (fan_in, fan_out), jnp.float32) / math.sqrt(fan_in)
        b = jax.random.normal(kb, (fan_out,), jnp.float32) * 0.02
        return w, b

    layers = []
    for _ in range(n_layers):
        keys = jax.random.split(key, 9)
        key = keys[0]
        sa_wq, sa_bq = lin(keys[1], d_model, d_model)
        sa_wk, sa_bk = lin(keys[2], d_model, d_model)
        sa_wv, sa_bv = lin(keys[3], d_model, d_model)
        sa_wo, sa_bo = lin(keys[4], d_model, d_model)
        ca_wq, ca_bq = lin(keys[5], d_model, d_model)
        ca_wk, ca_bk = lin(keys[6], d_model, d_model)
        ca_wv, ca_bv = lin(keys[7], d_model, d_model)
        ca_wo, ca_bo = lin(keys[8], d_model, d_model)
        key, k1, k2 = jax.random.split(key, 3)
        w1, b1 = lin(k1, d_model, d_ff)
        w2, b2 = lin(k2, d_ff, d_model)
        layers.append(dict(
            self_attn=dict(wq=sa_wq, bq=sa_bq, wk=sa_wk, bk=sa_bk,
                           wv=sa_wv, bv=sa_bv, wo=sa_wo, bo=sa_bo),
            cross_attn=dict(wq=ca_wq, bq=ca_bq, wk=ca_wk, bk=ca_bk,
                            wv=ca_wv, bv=ca_bv, wo=ca_wo, bo=ca_bo),
            ffn_w1=w1, ffn_b1=b1, ffn_w2=w2, ffn_b2=b2,
            ln1_g=jnp.ones((d_model,), jnp.float32), ln1_b=jnp.zeros((d_model,), jnp.float32),
            ln2_g=jnp.ones((d_model,), jnp.float32), ln2_b=jnp.zeros((d_model,), jnp.float32),
            ln3_g=jnp.ones((d_model,), jnp.float32), ln3_b=jnp.zeros((d_model,), jnp.float32),
        ))
    return dict(layers=layers,
                ln_g=jnp.ones((d_model,), jnp.float32),
                ln_b=jnp.zeros((d_model,), jnp.float32))


# ----------------------------------------------------------------------------
# Pure-JAX reference (mirrors the PyTorch forward, dropout = identity)
# ----------------------------------------------------------------------------

def _ref_mha(p, q, k, v, mask, n_heads):
    B, Sq, d_model = q.shape
    d_k = d_model // n_heads

    def proj(x, w, b):
        return (x @ w + b).reshape(B, -1, n_heads, d_k).transpose(0, 2, 1, 3)

    qh = proj(q, p["wq"], p["bq"])
    kh = proj(k, p["wk"], p["bk"])
    vh = proj(v, p["wv"], p["bv"])
    s = jnp.einsum("bhqd,bhkd->bhqk", qh, kh) / math.sqrt(d_k)
    if mask is not None:
        s = jnp.where(mask == 0, -1e9, s)
    a = jax.nn.softmax(s, axis=-1)
    o = jnp.einsum("bhqk,bhkd->bhqd", a, vh).transpose(0, 2, 1, 3).reshape(B, -1, d_model)
    return o @ p["wo"] + p["bo"]


def _ref_ln(x, g, b):
    m = jnp.mean(x, axis=-1, keepdims=True)
    v = jnp.mean((x - m) ** 2, axis=-1, keepdims=True)
    return (x - m) * jax.lax.rsqrt(v + 1e-5) * g + b


def ref_decoder(params, x, memory, src_mask, tgt_mask, n_heads):
    for p in params["layers"]:
        x = _ref_ln(x + _ref_mha(p["self_attn"], x, x, x, tgt_mask, n_heads),
                    p["ln1_g"], p["ln1_b"])
        x = _ref_ln(x + _ref_mha(p["cross_attn"], x, memory, memory, src_mask, n_heads),
                    p["ln2_g"], p["ln2_b"])
        h = jnp.maximum(x @ p["ffn_w1"] + p["ffn_b1"], 0.0)
        x = _ref_ln(x + (h @ p["ffn_w2"] + p["ffn_b2"]), p["ln3_g"], p["ln3_b"])
    return _ref_ln(x, params["ln_g"], params["ln_b"])


# ----------------------------------------------------------------------------
# Main
# ----------------------------------------------------------------------------

if __name__ == "__main__":
    d_model, n_heads, d_ff, n_layers = 32, 4, 64, 2
    batch, tgt_seq, src_seq = 2, 8, 8

    key = jax.random.PRNGKey(0)
    kp, kx, km = jax.random.split(key, 3)
    raw_params = init_params(kp, d_model, n_heads, d_ff, n_layers)
    # One-time preprocessing: head-major weights, per-layer stacks.
    packed = pack_params(raw_params, n_heads, compute_dtype=jnp.float32)

    x = jax.random.normal(kx, (batch, tgt_seq, d_model), jnp.float32)
    memory = jax.random.normal(km, (batch, src_seq, d_model), jnp.float32)

    # causal target mask generated in-kernel; no source mask
    fwd = jax.jit(functools.partial(decoder_forward, n_heads=n_heads,
                                    tgt_mask="causal", src_mask=None))
    out = jax.block_until_ready(fwd(packed, x, memory))

    tgt_mask = jnp.tril(jnp.ones((tgt_seq, tgt_seq), jnp.float32))
    ref = ref_decoder(raw_params, x, memory, None, tgt_mask, n_heads)

    assert out.shape == (batch, tgt_seq, d_model)
    assert jnp.allclose(out, ref, atol=5e-3, rtol=5e-3), "mismatch vs reference"

    print("KERNEL_OK")
</pallas_src>

<mosaic_0001>
module attributes {stable_mosaic.version = 11 : i64} {
  func.func @_decoder_stack_kernel(%arg0: i32, %arg1: memref<1x8x32xf32, #tpu.memory_space<vmem>>, %arg2: memref<1x8x32xf32, #tpu.memory_space<vmem>>, %arg3: memref<4x4x32x8xf32, #tpu.memory_space<vmem>>, %arg4: memref<4x4x32x8xf32, #tpu.memory_space<vmem>>, %arg5: memref<4x4x32x8xf32, #tpu.memory_space<vmem>>, %arg6: memref<4x4x1x8xf32, #tpu.memory_space<vmem>>, %arg7: memref<4x4x1x8xf32, #tpu.memory_space<vmem>>, %arg8: memref<4x4x1x8xf32, #tpu.memory_space<vmem>>, %arg9: memref<4x4x8x32xf32, #tpu.memory_space<vmem>>, %arg10: memref<4x1x32xf32, #tpu.memory_space<vmem>>, %arg11: memref<4x1x32xf32, #tpu.memory_space<vmem>>, %arg12: memref<4x1x32xf32, #tpu.memory_space<vmem>>, %arg13: memref<2x32x64xf32, #tpu.memory_space<vmem>>, %arg14: memref<2x1x64xf32, #tpu.memory_space<vmem>>, %arg15: memref<2x64x32xf32, #tpu.memory_space<vmem>>, %arg16: memref<2x1x32xf32, #tpu.memory_space<vmem>>, %arg17: memref<2x1x32xf32, #tpu.memory_space<vmem>>, %arg18: memref<2x1x32xf32, #tpu.memory_space<vmem>>, %arg19: memref<1x32xf32, #tpu.memory_space<vmem>>, %arg20: memref<1x32xf32, #tpu.memory_space<vmem>>, %arg21: memref<1x8x32xf32, #tpu.memory_space<vmem>>) attributes {dimension_semantics = [#tpu.dimension_semantics<parallel>], iteration_bounds = array<i64: 2>, scalar_prefetch = 0 : i64, scratch_operands = 0 : i64, tpu.core_type = #tpu.core_type<tc>, window_params = [{transform_indices = @transform_0, window_bounds = array<i64: 1, 8, 32>}, {transform_indices = @transform_1, window_bounds = array<i64: 1, 8, 32>}, {pipeline_mode = #tpu.pipeline_mode<synchronous>, transform_indices = @transform_2, window_bounds = array<i64: 4, 4, 32, 8>}, {pipeline_mode = #tpu.pipeline_mode<synchronous>, transform_indices = @transform_3, window_bounds = array<i64: 4, 4, 32, 8>}, {pipeline_mode = #tpu.pipeline_mode<synchronous>, transform_indices = @transform_4, window_bounds = array<i64: 4, 4, 32, 8>}, {pipeline_mode = #tpu.pipeline_mode<synchronous>, transform_indices = @transform_5, window_bounds = array<i64: 4, 4, 1, 8>}, {pipeline_mode = #tpu.pipeline_mode<synchronous>, transform_indices = @transform_6, window_bounds = array<i64: 4, 4, 1, 8>}, {pipeline_mode = #tpu.pipeline_mode<synchronous>, transform_indices = @transform_7, window_bounds = array<i64: 4, 4, 1, 8>}, {pipeline_mode = #tpu.pipeline_mode<synchronous>, transform_indices = @transform_8, window_bounds = array<i64: 4, 4, 8, 32>}, {pipeline_mode = #tpu.pipeline_mode<synchronous>, transform_indices = @transform_9, window_bounds = array<i64: 4, 1, 32>}, {pipeline_mode = #tpu.pipeline_mode<synchronous>, transform_indices = @transform_10, window_bounds = array<i64: 4, 1, 32>}, {pipeline_mode = #tpu.pipeline_mode<synchronous>, transform_indices = @transform_11, window_bounds = array<i64: 4, 1, 32>}, {pipeline_mode = #tpu.pipeline_mode<synchronous>, transform_indices = @transform_12, window_bounds = array<i64: 2, 32, 64>}, {pipeline_mode = #tpu.pipeline_mode<synchronous>, transform_indices = @transform_13, window_bounds = array<i64: 2, 1, 64>}, {pipeline_mode = #tpu.pipeline_mode<synchronous>, transform_indices = @transform_14, window_bounds = array<i64: 2, 64, 32>}, {pipeline_mode = #tpu.pipeline_mode<synchronous>, transform_indices = @transform_15, window_bounds = array<i64: 2, 1, 32>}, {pipeline_mode = #tpu.pipeline_mode<synchronous>, transform_indices = @transform_16, window_bounds = array<i64: 2, 1, 32>}, {pipeline_mode = #tpu.pipeline_mode<synchronous>, transform_indices = @transform_17, window_bounds = array<i64: 2, 1, 32>}, {pipeline_mode = #tpu.pipeline_mode<synchronous>, transform_indices = @transform_18, window_bounds = array<i64: 1, 32>}, {pipeline_mode = #tpu.pipeline_mode<synchronous>, transform_indices = @transform_19, window_bounds = array<i64: 1, 32>}, {transform_indices = @transform_20, window_bounds = array<i64: 1, 8, 32>}]} {
    %c0 = arith.constant 0 : index
    %c0_0 = arith.constant 0 : index
    %c0_1 = arith.constant 0 : index
    %0 = vector.load %arg1[%c0, %c0_0, %c0_1] : memref<1x8x32xf32, #tpu.memory_space<vmem>>, vector<1x8x32xf32>
    %1 = vector.shape_cast %0 : vector<1x8x32xf32> to vector<8x32xf32>
    %c0_2 = arith.constant 0 : index
    %c0_3 = arith.constant 0 : index
    %c0_4 = arith.constant 0 : index
    %2 = vector.load %arg2[%c0_2, %c0_3, %c0_4] : memref<1x8x32xf32, #tpu.memory_space<vmem>>, vector<1x8x32xf32>
    %3 = vector.shape_cast %2 : vector<1x8x32xf32> to vector<8x32xf32>
    %4 = tpu.iota {dimensions = array<i32: 0>} : vector<8x8xi32>
    %5 = tpu.iota {dimensions = array<i32: 1>} : vector<8x8xi32>
    %6 = arith.cmpi sle, %5, %4 : vector<8x8xi32>
    %cst = arith.constant 0.000000e+00 : f32
    %cst_5 = arith.constant -1.000000e+09 : f32
    %7 = vector.broadcast %cst : f32 to vector<8x8xf32>
    %8 = vector.broadcast %cst_5 : f32 to vector<8x8xf32>
    %9 = arith.select %6, %7, %8 : vector<8x8xi1>, vector<8x8xf32>
    %c0_6 = arith.constant 0 : index
    %c0_7 = arith.constant 0 : index
    %c0_8 = arith.constant 0 : index
    %c0_9 = arith.constant 0 : index
    %10 = vector.load %arg3[%c0_6, %c0_7, %c0_8, %c0_9] : memref<4x4x32x8xf32, #tpu.memory_space<vmem>>, vector<1x4x32x8xf32>
    %11 = vector.shape_cast %10 : vector<1x4x32x8xf32> to vector<4x32x8xf32>
    %c0_10 = arith.constant 0 : index
    %c0_11 = arith.constant 0 : index
    %c0_12 = arith.constant 0 : index
    %c0_13 = arith.constant 0 : index
    %12 = vector.load %arg4[%c0_10, %c0_11, %c0_12, %c0_13] : memref<4x4x32x8xf32, #tpu.memory_space<vmem>>, vector<1x4x32x8xf32>
    %13 = vector.shape_cast %12 : vector<1x4x32x8xf32> to vector<4x32x8xf32>
    %c0_14 = arith.constant 0 : index
    %c0_15 = arith.constant 0 : index
    %c0_16 = arith.constant 0 : index
    %c0_17 = arith.constant 0 : index
    %14 = vector.load %arg5[%c0_14, %c0_15, %c0_16, %c0_17] : memref<4x4x32x8xf32, #tpu.memory_space<vmem>>, vector<1x4x32x8xf32>
    %15 = vector.shape_cast %14 : vector<1x4x32x8xf32> to vector<4x32x8xf32>
    %c0_18 = arith.constant 0 : index
    %c0_19 = arith.constant 0 : index
    %c0_20 = arith.constant 0 : index
    %c0_21 = arith.constant 0 : index
    %16 = vector.load %arg6[%c0_18, %c0_19, %c0_20, %c0_21] : memref<4x4x1x8xf32, #tpu.memory_space<vmem>>, vector<1x4x1x8xf32>
    %17 = vector.shape_cast %16 : vector<1x4x1x8xf32> to vector<4x1x8xf32>
    %c0_22 = arith.constant 0 : index
    %c0_23 = arith.constant 0 : index
    %c0_24 = arith.constant 0 : index
    %c0_25 = arith.constant 0 : index
    %18 = vector.load %arg7[%c0_22, %c0_23, %c0_24, %c0_25] : memref<4x4x1x8xf32, #tpu.memory_space<vmem>>, vector<1x4x1x8xf32>
    %19 = vector.shape_cast %18 : vector<1x4x1x8xf32> to vector<4x1x8xf32>
    %c0_26 = arith.constant 0 : index
    %c0_27 = arith.constant 0 : index
    %c0_28 = arith.constant 0 : index
    %c0_29 = arith.constant 0 : index
    %20 = vector.load %arg8[%c0_26, %c0_27, %c0_28, %c0_29] : memref<4x4x1x8xf32, #tpu.memory_space<vmem>>, vector<1x4x1x8xf32>
    %21 = vector.shape_cast %20 : vector<1x4x1x8xf32> to vector<4x1x8xf32>
    %c0_30 = arith.constant 0 : index
    %c0_31 = arith.constant 0 : index
    %c0_32 = arith.constant 0 : index
    %c0_33 = arith.constant 0 : index
    %22 = vector.load %arg9[%c0_30, %c0_31, %c0_32, %c0_33] : memref<4x4x8x32xf32, #tpu.memory_space<vmem>>, vector<1x4x8x32xf32>
    %23 = vector.shape_cast %22 : vector<1x4x8x32xf32> to vector<4x8x32xf32>
    %c0_34 = arith.constant 0 : index
    %c0_35 = arith.constant 0 : index
    %c0_36 = arith.constant 0 : index
    %24 = vector.load %arg10[%c0_34, %c0_35, %c0_36] : memref<4x1x32xf32, #tpu.memory_space<vmem>>, vector<1x1x32xf32>
    %25 = vector.shape_cast %24 : vector<1x1x32xf32> to vector<1x32xf32>
    %26 = vector.shape_cast %1 : vector<8x32xf32> to vector<1x8x32xf32>
    %27 = vector.shape_cast %26 : vector<1x8x32xf32> to vector<1x8x32xf32>
    %28 = vector.broadcast %27 : vector<1x8x32xf32> to vector<4x8x32xf32>
    %29 = vector.shape_cast %1 : vector<8x32xf32> to vector<1x8x32xf32>
    %30 = vector.shape_cast %29 : vector<1x8x32xf32> to vector<1x8x32xf32>
    %31 = vector.broadcast %30 : vector<1x8x32xf32> to vector<4x8x32xf32>
    %cst_37 = arith.constant dense<0.000000e+00> : vector<4x8x8xf32>
    %32 = tpu.matmul %28, %11, %cst_37 {dimension_numbers = #tpu.dot_dimension_numbers<[2], [1], [1], [2], [0, 0, 0, 1, 1, 2], [0], [0]>} : vector<4x8x32xf32>, vector<4x32x8xf32>, vector<4x8x8xf32> -> vector<4x8x8xf32>
    %33 = vector.broadcast %17 : vector<4x1x8xf32> to vector<4x8x8xf32>
    %34 = arith.addf %32, %33 : vector<4x8x8xf32>
    %cst_38 = arith.constant dense<0.000000e+00> : vector<4x8x8xf32>
    %35 = tpu.matmul %31, %13, %cst_38 {dimension_numbers = #tpu.dot_dimension_numbers<[2], [1], [1], [2], [0, 0, 0, 1, 1, 2], [0], [0]>} : vector<4x8x32xf32>, vector<4x32x8xf32>, vector<4x8x8xf32> -> vector<4x8x8xf32>
    %36 = vector.broadcast %19 : vector<4x1x8xf32> to vector<4x8x8xf32>
    %37 = arith.addf %35, %36 : vector<4x8x8xf32>
    %cst_39 = arith.constant dense<0.000000e+00> : vector<4x8x8xf32>
    %38 = tpu.matmul %31, %15, %cst_39 {dimension_numbers = #tpu.dot_dimension_numbers<[2], [1], [1], [2], [0, 0, 0, 1, 1, 2], [0], [0]>} : vector<4x8x32xf32>, vector<4x32x8xf32>, vector<4x8x8xf32> -> vector<4x8x8xf32>
    %39 = vector.broadcast %21 : vector<4x1x8xf32> to vector<4x8x8xf32>
    %40 = arith.addf %38, %39 : vector<4x8x8xf32>
    %cst_40 = arith.constant dense<0.000000e+00> : vector<4x8x8xf32>
    %41 = tpu.matmul %34, %37, %cst_40 {dimension_numbers = #tpu.dot_dimension_numbers<[2], [2], [1], [1], [0, 0, 0, 1, 1, 1], [0], [0]>} : vector<4x8x8xf32>, vector<4x8x8xf32>, vector<4x8x8xf32> -> vector<4x8x8xf32>
    %cst_41 = arith.constant 0.353553385 : f32
    %42 = vector.broadcast %cst_41 : f32 to vector<4x8x8xf32>
    %43 = arith.mulf %41, %42 : vector<4x8x8xf32>
    %44 = vector.shape_cast %9 : vector<8x8xf32> to vector<1x8x8xf32>
    %45 = vector.broadcast %44 : vector<1x8x8xf32> to vector<4x8x8xf32>
    %46 = arith.addf %43, %45 : vector<4x8x8xf32>
    %cst_42 = arith.constant dense<0xFF800000> : vector<4x8xf32>
    %47 = vector.multi_reduction <maximumf>, %46, %cst_42 [2] : vector<4x8x8xf32> to vector<4x8xf32>
    %48 = vector.shape_cast %47 : vector<4x8xf32> to vector<4x8x1xf32>
    %49 = vector.broadcast %48 : vector<4x8x1xf32> to vector<4x8x8xf32>
    %50 = arith.subf %46, %49 : vector<4x8x8xf32>
    %51 = math.exp %50 : vector<4x8x8xf32>
    %cst_43 = arith.constant dense<0.000000e+00> : vector<4x8xf32>
    %52 = vector.multi_reduction <add>, %51, %cst_43 [2] : vector<4x8x8xf32> to vector<4x8xf32>
    %53 = vector.shape_cast %52 : vector<4x8xf32> to vector<4x8x1xf32>
    %54 = vector.broadcast %53 : vector<4x8x1xf32> to vector<4x8x8xf32>
    %55 = arith.divf %51, %54 : vector<4x8x8xf32>
    %cst_44 = arith.constant dense<0.000000e+00> : vector<4x8x8xf32>
    %56 = tpu.matmul %55, %40, %cst_44 {dimension_numbers = #tpu.dot_dimension_numbers<[2], [1], [1], [2], [0, 0, 0, 1, 1, 2], [0], [0]>} : vector<4x8x8xf32>, vector<4x8x8xf32>, vector<4x8x8xf32> -> vector<4x8x8xf32>
    %cst_45 = arith.constant dense<0.000000e+00> : vector<4x8x32xf32>
    %57 = tpu.matmul %56, %23, %cst_45 {dimension_numbers = #tpu.dot_dimension_numbers<[2], [1], [1], [2], [0, 0, 0, 1, 1, 2], [0], [0]>} : vector<4x8x8xf32>, vector<4x8x32xf32>, vector<4x8x32xf32> -> vector<4x8x32xf32>
    %cst_46 = arith.constant dense<0.000000e+00> : vector<8x32xf32>
    %58 = vector.multi_reduction <add>, %57, %cst_46 [0] : vector<4x8x32xf32> to vector<8x32xf32>
    %59 = vector.broadcast %25 : vector<1x32xf32> to vector<8x32xf32>
    %60 = arith.addf %58, %59 : vector<8x32xf32>
    %61 = arith.addf %1, %60 : vector<8x32xf32>
    %c0_47 = arith.constant 0 : index
    %c0_48 = arith.constant 0 : index
    %c0_49 = arith.constant 0 : index
    %62 = vector.load %arg11[%c0_47, %c0_48, %c0_49] : memref<4x1x32xf32, #tpu.memory_space<vmem>>, vector<1x1x32xf32>
    %63 = vector.shape_cast %62 : vector<1x1x32xf32> to vector<1x32xf32>
    %c0_50 = arith.constant 0 : index
    %c0_51 = arith.constant 0 : index
    %c0_52 = arith.constant 0 : index
    %64 = vector.load %arg12[%c0_50, %c0_51, %c0_52] : memref<4x1x32xf32, #tpu.memory_space<vmem>>, vector<1x1x32xf32>
    %65 = vector.shape_cast %64 : vector<1x1x32xf32> to vector<1x32xf32>
    %cst_53 = arith.constant dense<0.000000e+00> : vector<8xf32>
    %66 = vector.multi_reduction <add>, %61, %cst_53 [1] : vector<8x32xf32> to vector<8xf32>
    %67 = vector.shape_cast %66 : vector<8xf32> to vector<8x1xf32>
    %cst_54 = arith.constant 3.200000e+01 : f32
    %68 = vector.broadcast %cst_54 : f32 to vector<8x1xf32>
    %69 = arith.divf %67, %68 : vector<8x1xf32>
    %70 = vector.broadcast %69 : vector<8x1xf32> to vector<8x32xf32>
    %71 = arith.subf %61, %70 : vector<8x32xf32>
    %72 = arith.mulf %71, %71 : vector<8x32xf32>
    %cst_55 = arith.constant dense<0.000000e+00> : vector<8xf32>
    %73 = vector.multi_reduction <add>, %72, %cst_55 [1] : vector<8x32xf32> to vector<8xf32>
    %74 = vector.shape_cast %73 : vector<8xf32> to vector<8x1xf32>
    %cst_56 = arith.constant 3.200000e+01 : f32
    %75 = vector.broadcast %cst_56 : f32 to vector<8x1xf32>
    %76 = arith.divf %74, %75 : vector<8x1xf32>
    %77 = vector.broadcast %69 : vector<8x1xf32> to vector<8x32xf32>
    %78 = arith.subf %61, %77 : vector<8x32xf32>
    %cst_57 = arith.constant 9.99999974E-6 : f32
    %79 = vector.broadcast %cst_57 : f32 to vector<8x1xf32>
    %80 = arith.addf %76, %79 : vector<8x1xf32>
    %81 = math.rsqrt %80 : vector<8x1xf32>
    %82 = vector.broadcast %81 : vector<8x1xf32> to vector<8x32xf32>
    %83 = arith.mulf %78, %82 : vector<8x32xf32>
    %84 = vector.broadcast %63 : vector<1x32xf32> to vector<8x32xf32>
    %85 = arith.mulf %83, %84 : vector<8x32xf32>
    %86 = vector.broadcast %65 : vector<1x32xf32> to vector<8x32xf32>
    %87 = arith.addf %85, %86 : vector<8x32xf32>
    %c1 = arith.constant 1 : index
    %c0_58 = arith.constant 0 : index
    %c0_59 = arith.constant 0 : index
    %c0_60 = arith.constant 0 : index
    %88 = vector.load %arg3[%c1, %c0_58, %c0_59, %c0_60] : memref<4x4x32x8xf32, #tpu.memory_space<vmem>>, vector<1x4x32x8xf32>
    %89 = vector.shape_cast %88 : vector<1x4x32x8xf32> to vector<4x32x8xf32>
    %c1_61 = arith.constant 1 : index
    %c0_62 = arith.constant 0 : index
    %c0_63 = arith.constant 0 : index
    %c0_64 = arith.constant 0 : index
    %90 = vector.load %arg4[%c1_61, %c0_62, %c0_63, %c0_64] : memref<4x4x32x8xf32, #tpu.memory_space<vmem>>, vector<1x4x32x8xf32>
    %91 = vector.shape_cast %90 : vector<1x4x32x8xf32> to vector<4x32x8xf32>
    %c1_65 = arith.constant 1 : index
    %c0_66 = arith.constant 0 : index
    %c0_67 = arith.constant 0 : index
    %c0_68 = arith.constant 0 : index
    %92 = vector.load %arg5[%c1_65, %c0_66, %c0_67, %c0_68] : memref<4x4x32x8xf32, #tpu.memory_space<vmem>>, vector<1x4x32x8xf32>
    %93 = vector.shape_cast %92 : vector<1x4x32x8xf32> to vector<4x32x8xf32>
    %c1_69 = arith.constant 1 : index
    %c0_70 = arith.constant 0 : index
    %c0_71 = arith.constant 0 : index
    %c0_72 = arith.constant 0 : index
    %94 = vector.load %arg6[%c1_69, %c0_70, %c0_71, %c0_72] : memref<4x4x1x8xf32, #tpu.memory_space<vmem>>, vector<1x4x1x8xf32>
    %95 = vector.shape_cast %94 : vector<1x4x1x8xf32> to vector<4x1x8xf32>
    %c1_73 = arith.constant 1 : index
    %c0_74 = arith.constant 0 : index
    %c0_75 = arith.constant 0 : index
    %c0_76 = arith.constant 0 : index
    %96 = vector.load %arg7[%c1_73, %c0_74, %c0_75, %c0_76] : memref<4x4x1x8xf32, #tpu.memory_space<vmem>>, vector<1x4x1x8xf32>
    %97 = vector.shape_cast %96 : vector<1x4x1x8xf32> to vector<4x1x8xf32>
    %c1_77 = arith.constant 1 : index
    %c0_78 = arith.constant 0 : index
    %c0_79 = arith.constant 0 : index
    %c0_80 = arith.constant 0 : index
    %98 = vector.load %arg8[%c1_77, %c0_78, %c0_79, %c0_80] : memref<4x4x1x8xf32, #tpu.memory_space<vmem>>, vector<1x4x1x8xf32>
    %99 = vector.shape_cast %98 : vector<1x4x1x8xf32> to vector<4x1x8xf32>
    %c1_81 = arith.constant 1 : index
    %c0_82 = arith.constant 0 : index
    %c0_83 = arith.constant 0 : index
    %c0_84 = arith.constant 0 : index
    %100 = vector.load %arg9[%c1_81, %c0_82, %c0_83, %c0_84] : memref<4x4x8x32xf32, #tpu.memory_space<vmem>>, vector<1x4x8x32xf32>
    %101 = vector.shape_cast %100 : vector<1x4x8x32xf32> to vector<4x8x32xf32>
    %c1_85 = arith.constant 1 : index
    %c0_86 = arith.constant 0 : index
    %c0_87 = arith.constant 0 : index
    %102 = vector.load %arg10[%c1_85, %c0_86, %c0_87] : memref<4x1x32xf32, #tpu.memory_space<vmem>>, vector<1x1x32xf32>
    %103 = vector.shape_cast %102 : vector<1x1x32xf32> to vector<1x32xf32>
    %104 = vector.shape_cast %87 : vector<8x32xf32> to vector<1x8x32xf32>
    %105 = vector.shape_cast %104 : vector<1x8x32xf32> to vector<1x8x32xf32>
    %106 = vector.broadcast %105 : vector<1x8x32xf32> to vector<4x8x32xf32>
    %107 = vector.shape_cast %3 : vector<8x32xf32> to vector<1x8x32xf32>
    %108 = vector.shape_cast %107 : vector<1x8x32xf32> to vector<1x8x32xf32>
    %109 = vector.broadcast %108 : vector<1x8x32xf32> to vector<4x8x32xf32>
    %cst_88 = arith.constant dense<0.000000e+00> : vector<4x8x8xf32>
    %110 = tpu.matmul %106, %89, %cst_88 {dimension_numbers = #tpu.dot_dimension_numbers<[2], [1], [1], [2], [0, 0, 0, 1, 1, 2], [0], [0]>} : vector<4x8x32xf32>, vector<4x32x8xf32>, vector<4x8x8xf32> -> vector<4x8x8xf32>
    %111 = vector.broadcast %95 : vector<4x1x8xf32> to vector<4x8x8xf32>
    %112 = arith.addf %110, %111 : vector<4x8x8xf32>
    %cst_89 = arith.constant dense<0.000000e+00> : vector<4x8x8xf32>
    %113 = tpu.matmul %109, %91, %cst_89 {dimension_numbers = #tpu.dot_dimension_numbers<[2], [1], [1], [2], [0, 0, 0, 1, 1, 2], [0], [0]>} : vector<4x8x32xf32>, vector<4x32x8xf32>, vector<4x8x8xf32> -> vector<4x8x8xf32>
    %114 = vector.broadcast %97 : vector<4x1x8xf32> to vector<4x8x8xf32>
    %115 = arith.addf %113, %114 : vector<4x8x8xf32>
    %cst_90 = arith.constant dense<0.000000e+00> : vector<4x8x8xf32>
    %116 = tpu.matmul %109, %93, %cst_90 {dimension_numbers = #tpu.dot_dimension_numbers<[2], [1], [1], [2], [0, 0, 0, 1, 1, 2], [0], [0]>} : vector<4x8x32xf32>, vector<4x32x8xf32>, vector<4x8x8xf32> -> vector<4x8x8xf32>
    %117 = vector.broadcast %99 : vector<4x1x8xf32> to vector<4x8x8xf32>
    %118 = arith.addf %116, %117 : vector<4x8x8xf32>
    %cst_91 = arith.constant dense<0.000000e+00> : vector<4x8x8xf32>
    %119 = tpu.matmul %112, %115, %cst_91 {dimension_numbers = #tpu.dot_dimension_numbers<[2], [2], [1], [1], [0, 0, 0, 1, 1, 1], [0], [0]>} : vector<4x8x8xf32>, vector<4x8x8xf32>, vector<4x8x8xf32> -> vector<4x8x8xf32>
    %cst_92 = arith.constant 0.353553385 : f32
    %120 = vector.broadcast %cst_92 : f32 to vector<4x8x8xf32>
    %121 = arith.mulf %119, %120 : vector<4x8x8xf32>
    %cst_93 = arith.constant dense<0xFF800000> : vector<4x8xf32>
    %122 = vector.multi_reduction <maximumf>, %121, %cst_93 [2] : vector<4x8x8xf32> to vector<4x8xf32>
    %123 = vector.shape_cast %122 : vector<4x8xf32> to vector<4x8x1xf32>
    %124 = vector.broadcast %123 : vector<4x8x1xf32> to vector<4x8x8xf32>
    %125 = arith.subf %121, %124 : vector<4x8x8xf32>
    %126 = math.exp %125 : vector<4x8x8xf32>
    %cst_94 = arith.constant dense<0.000000e+00> : vector<4x8xf32>
    %127 = vector.multi_reduction <add>, %126, %cst_94 [2] : vector<4x8x8xf32> to vector<4x8xf32>
    %128 = vector.shape_cast %127 : vector<4x8xf32> to vector<4x8x1xf32>
    %129 = vector.broadcast %128 : vector<4x8x1xf32> to vector<4x8x8xf32>
    %130 = arith.divf %126, %129 : vector<4x8x8xf32>
    %cst_95 = arith.constant dense<0.000000e+00> : vector<4x8x8xf32>
    %131 = tpu.matmul %130, %118, %cst_95 {dimension_numbers = #tpu.dot_dimension_numbers<[2], [1], [1], [2], [0, 0, 0, 1, 1, 2], [0], [0]>} : vector<4x8x8xf32>, vector<4x8x8xf32>, vector<4x8x8xf32> -> vector<4x8x8xf32>
    %cst_96 = arith.constant dense<0.000000e+00> : vector<4x8x32xf32>
    %132 = tpu.matmul %131, %101, %cst_96 {dimension_numbers = #tpu.dot_dimension_numbers<[2], [1], [1], [2], [0, 0, 0, 1, 1, 2], [0], [0]>} : vector<4x8x8xf32>, vector<4x8x32xf32>, vector<4x8x32xf32> -> vector<4x8x32xf32>
    %cst_97 = arith.constant dense<0.000000e+00> : vector<8x32xf32>
    %133 = vector.multi_reduction <add>, %132, %cst_97 [0] : vector<4x8x32xf32> to vector<8x32xf32>
    %134 = vector.broadcast %103 : vector<1x32xf32> to vector<8x32xf32>
    %135 = arith.addf %133, %134 : vector<8x32xf32>
    %136 = arith.addf %87, %135 : vector<8x32xf32>
    %c1_98 = arith.constant 1 : index
    %c0_99 = arith.constant 0 : index
    %c0_100 = arith.constant 0 : index
    %137 = vector.load %arg11[%c1_98, %c0_99, %c0_100] : memref<4x1x32xf32, #tpu.memory_space<vmem>>, vector<1x1x32xf32>
    %138 = vector.shape_cast %137 : vector<1x1x32xf32> to vector<1x32xf32>
    %c1_101 = arith.constant 1 : index
    %c0_102 = arith.constant 0 : index
    %c0_103 = arith.constant 0 : index
    %139 = vector.load %arg12[%c1_101, %c0_102, %c0_103] : memref<4x1x32xf32, #tpu.memory_space<vmem>>, vector<1x1x32xf32>
    %140 = vector.shape_cast %139 : vector<1x1x32xf32> to vector<1x32xf32>
    %cst_104 = arith.constant dense<0.000000e+00> : vector<8xf32>
    %141 = vector.multi_reduction <add>, %136, %cst_104 [1] : vector<8x32xf32> to vector<8xf32>
    %142 = vector.shape_cast %141 : vector<8xf32> to vector<8x1xf32>
    %cst_105 = arith.constant 3.200000e+01 : f32
    %143 = vector.broadcast %cst_105 : f32 to vector<8x1xf32>
    %144 = arith.divf %142, %143 : vector<8x1xf32>
    %145 = vector.broadcast %144 : vector<8x1xf32> to vector<8x32xf32>
    %146 = arith.subf %136, %145 : vector<8x32xf32>
    %147 = arith.mulf %146, %146 : vector<8x32xf32>
    %cst_106 = arith.constant dense<0.000000e+00> : vector<8xf32>
    %148 = vector.multi_reduction <add>, %147, %cst_106 [1] : vector<8x32xf32> to vector<8xf32>
    %149 = vector.shape_cast %148 : vector<8xf32> to vector<8x1xf32>
    %cst_107 = arith.constant 3.200000e+01 : f32
    %150 = vector.broadcast %cst_107 : f32 to vector<8x1xf32>
    %151 = arith.divf %149, %150 : vector<8x1xf32>
    %152 = vector.broadcast %144 : vector<8x1xf32> to vector<8x32xf32>
    %153 = arith.subf %136, %152 : vector<8x32xf32>
    %cst_108 = arith.constant 9.99999974E-6 : f32
    %154 = vector.broadcast %cst_108 : f32 to vector<8x1xf32>
    %155 = arith.addf %151, %154 : vector<8x1xf32>
    %156 = math.rsqrt %155 : vector<8x1xf32>
    %157 = vector.broadcast %156 : vector<8x1xf32> to vector<8x32xf32>
    %158 = arith.mulf %153, %157 : vector<8x32xf32>
    %159 = vector.broadcast %138 : vector<1x32xf32> to vector<8x32xf32>
    %160 = arith.mulf %158, %159 : vector<8x32xf32>
    %161 = vector.broadcast %140 : vector<1x32xf32> to vector<8x32xf32>
    %162 = arith.addf %160, %161 : vector<8x32xf32>
    %c0_109 = arith.constant 0 : index
    %c0_110 = arith.constant 0 : index
    %c0_111 = arith.constant 0 : index
    %163 = vector.load %arg13[%c0_109, %c0_110, %c0_111] : memref<2x32x64xf32, #tpu.memory_space<vmem>>, vector<1x32x64xf32>
    %164 = vector.shape_cast %163 : vector<1x32x64xf32> to vector<32x64xf32>
    %cst_112 = arith.constant dense<0.000000e+00> : vector<8x64xf32>
    %165 = tpu.matmul %162, %164, %cst_112 {dimension_numbers = #tpu.dot_dimension_numbers<[1], [0], [0], [1], [0, 0, 1, 1], [], []>} : vector<8x32xf32>, vector<32x64xf32>, vector<8x64xf32> -> vector<8x64xf32>
    %c0_113 = arith.constant 0 : index
    %c0_114 = arith.constant 0 : index
    %c0_115 = arith.constant 0 : index
    %166 = vector.load %arg14[%c0_113, %c0_114, %c0_115] : memref<2x1x64xf32, #tpu.memory_space<vmem>>, vector<1x1x64xf32>
    %167 = vector.shape_cast %166 : vector<1x1x64xf32> to vector<1x64xf32>
    %168 = vector.broadcast %167 : vector<1x64xf32> to vector<8x64xf32>
    %169 = arith.addf %165, %168 : vector<8x64xf32>
    %cst_116 = arith.constant 0.000000e+00 : f32
    %170 = vector.broadcast %cst_116 : f32 to vector<8x64xf32>
    %171 = arith.maximumf %169, %170 : vector<8x64xf32>
    %c0_117 = arith.constant 0 : index
    %c0_118 = arith.constant 0 : index
    %c0_119 = arith.constant 0 : index
    %172 = vector.load %arg15[%c0_117, %c0_118, %c0_119] : memref<2x64x32xf32, #tpu.memory_space<vmem>>, vector<1x64x32xf32>
    %173 = vector.shape_cast %172 : vector<1x64x32xf32> to vector<64x32xf32>
    %cst_120 = arith.constant dense<0.000000e+00> : vector<8x32xf32>
    %174 = tpu.matmul %171, %173, %cst_120 {dimension_numbers = #tpu.dot_dimension_numbers<[1], [0], [0], [1], [0, 0, 1, 1], [], []>} : vector<8x64xf32>, vector<64x32xf32>, vector<8x32xf32> -> vector<8x32xf32>
    %c0_121 = arith.constant 0 : index
    %c0_122 = arith.constant 0 : index
    %c0_123 = arith.constant 0 : index
    %175 = vector.load %arg16[%c0_121, %c0_122, %c0_123] : memref<2x1x32xf32, #tpu.memory_space<vmem>>, vector<1x1x32xf32>
    %176 = vector.shape_cast %175 : vector<1x1x32xf32> to vector<1x32xf32>
    %177 = vector.broadcast %176 : vector<1x32xf32> to vector<8x32xf32>
    %178 = arith.addf %174, %177 : vector<8x32xf32>
    %179 = arith.addf %162, %178 : vector<8x32xf32>
    %c0_124 = arith.constant 0 : index
    %c0_125 = arith.constant 0 : index
    %c0_126 = arith.constant 0 : index
    %180 = vector.load %arg17[%c0_124, %c0_125, %c0_126] : memref<2x1x32xf32, #tpu.memory_space<vmem>>, vector<1x1x32xf32>
    %181 = vector.shape_cast %180 : vector<1x1x32xf32> to vector<1x32xf32>
    %c0_127 = arith.constant 0 : index
    %c0_128 = arith.constant 0 : index
    %c0_129 = arith.constant 0 : index
    %182 = vector.load %arg18[%c0_127, %c0_128, %c0_129] : memref<2x1x32xf32, #tpu.memory_space<vmem>>, vector<1x1x32xf32>
    %183 = vector.shape_cast %182 : vector<1x1x32xf32> to vector<1x32xf32>
    %cst_130 = arith.constant dense<0.000000e+00> : vector<8xf32>
    %184 = vector.multi_reduction <add>, %179, %cst_130 [1] : vector<8x32xf32> to vector<8xf32>
    %185 = vector.shape_cast %184 : vector<8xf32> to vector<8x1xf32>
    %cst_131 = arith.constant 3.200000e+01 : f32
    %186 = vector.broadcast %cst_131 : f32 to vector<8x1xf32>
    %187 = arith.divf %185, %186 : vector<8x1xf32>
    %188 = vector.broadcast %187 : vector<8x1xf32> to vector<8x32xf32>
    %189 = arith.subf %179, %188 : vector<8x32xf32>
    %190 = arith.mulf %189, %189 : vector<8x32xf32>
    %cst_132 = arith.constant dense<0.000000e+00> : vector<8xf32>
    %191 = vector.multi_reduction <add>, %190, %cst_132 [1] : vector<8x32xf32> to vector<8xf32>
    %192 = vector.shape_cast %191 : vector<8xf32> to vector<8x1xf32>
    %cst_133 = arith.constant 3.200000e+01 : f32
    %193 = vector.broadcast %cst_133 : f32 to vector<8x1xf32>
    %194 = arith.divf %192, %193 : vector<8x1xf32>
    %195 = vector.broadcast %187 : vector<8x1xf32> to vector<8x32xf32>
    %196 = arith.subf %179, %195 : vector<8x32xf32>
    %cst_134 = arith.constant 9.99999974E-6 : f32
    %197 = vector.broadcast %cst_134 : f32 to vector<8x1xf32>
    %198 = arith.addf %194, %197 : vector<8x1xf32>
    %199 = math.rsqrt %198 : vector<8x1xf32>
    %200 = vector.broadcast %199 : vector<8x1xf32> to vector<8x32xf32>
    %201 = arith.mulf %196, %200 : vector<8x32xf32>
    %202 = vector.broadcast %181 : vector<1x32xf32> to vector<8x32xf32>
    %203 = arith.mulf %201, %202 : vector<8x32xf32>
    %204 = vector.broadcast %183 : vector<1x32xf32> to vector<8x32xf32>
    %205 = arith.addf %203, %204 : vector<8x32xf32>
    %c2 = arith.constant 2 : index
    %c0_135 = arith.constant 0 : index
    %c0_136 = arith.constant 0 : index
    %c0_137 = arith.constant 0 : index
    %206 = vector.load %arg3[%c2, %c0_135, %c0_136, %c0_137] : memref<4x4x32x8xf32, #tpu.memory_space<vmem>>, vector<1x4x32x8xf32>
    %207 = vector.shape_cast %206 : vector<1x4x32x8xf32> to vector<4x32x8xf32>
    %c2_138 = arith.constant 2 : index
    %c0_139 = arith.constant 0 : index
    %c0_140 = arith.constant 0 : index
    %c0_141 = arith.constant 0 : index
    %208 = vector.load %arg4[%c2_138, %c0_139, %c0_140, %c0_141] : memref<4x4x32x8xf32, #tpu.memory_space<vmem>>, vector<1x4x32x8xf32>
    %209 = vector.shape_cast %208 : vector<1x4x32x8xf32> to vector<4x32x8xf32>
    %c2_142 = arith.constant 2 : index
    %c0_143 = arith.constant 0 : index
    %c0_144 = arith.constant 0 : index
    %c0_145 = arith.constant 0 : index
    %210 = vector.load %arg5[%c2_142, %c0_143, %c0_144, %c0_145] : memref<4x4x32x8xf32, #tpu.memory_space<vmem>>, vector<1x4x32x8xf32>
    %211 = vector.shape_cast %210 : vector<1x4x32x8xf32> to vector<4x32x8xf32>
    %c2_146 = arith.constant 2 : index
    %c0_147 = arith.constant 0 : index
    %c0_148 = arith.constant 0 : index
    %c0_149 = arith.constant 0 : index
    %212 = vector.load %arg6[%c2_146, %c0_147, %c0_148, %c0_149] : memref<4x4x1x8xf32, #tpu.memory_space<vmem>>, vector<1x4x1x8xf32>
    %213 = vector.shape_cast %212 : vector<1x4x1x8xf32> to vector<4x1x8xf32>
    %c2_150 = arith.constant 2 : index
    %c0_151 = arith.constant 0 : index
    %c0_152 = arith.constant 0 : index
    %c0_153 = arith.constant 0 : index
    %214 = vector.load %arg7[%c2_150, %c0_151, %c0_152, %c0_153] : memref<4x4x1x8xf32, #tpu.memory_space<vmem>>, vector<1x4x1x8xf32>
    %215 = vector.shape_cast %214 : vector<1x4x1x8xf32> to vector<4x1x8xf32>
    %c2_154 = arith.constant 2 : index
    %c0_155 = arith.constant 0 : index
    %c0_156 = arith.constant 0 : index
    %c0_157 = arith.constant 0 : index
    %216 = vector.load %arg8[%c2_154, %c0_155, %c0_156, %c0_157] : memref<4x4x1x8xf32, #tpu.memory_space<vmem>>, vector<1x4x1x8xf32>
    %217 = vector.shape_cast %216 : vector<1x4x1x8xf32> to vector<4x1x8xf32>
    %c2_158 = arith.constant 2 : index
    %c0_159 = arith.constant 0 : index
    %c0_160 = arith.constant 0 : index
    %c0_161 = arith.constant 0 : index
    %218 = vector.load %arg9[%c2_158, %c0_159, %c0_160, %c0_161] : memref<4x4x8x32xf32, #tpu.memory_space<vmem>>, vector<1x4x8x32xf32>
    %219 = vector.shape_cast %218 : vector<1x4x8x32xf32> to vector<4x8x32xf32>
    %c2_162 = arith.constant 2 : index
    %c0_163 = arith.constant 0 : index
    %c0_164 = arith.constant 0 : index
    %220 = vector.load %arg10[%c2_162, %c0_163, %c0_164] : memref<4x1x32xf32, #tpu.memory_space<vmem>>, vector<1x1x32xf32>
    %221 = vector.shape_cast %220 : vector<1x1x32xf32> to vector<1x32xf32>
    %222 = vector.shape_cast %205 : vector<8x32xf32> to vector<1x8x32xf32>
    %223 = vector.shape_cast %222 : vector<1x8x32xf32> to vector<1x8x32xf32>
    %224 = vector.broadcast %223 : vector<1x8x32xf32> to vector<4x8x32xf32>
    %225 = vector.shape_cast %205 : vector<8x32xf32> to vector<1x8x32xf32>
    %226 = vector.shape_cast %225 : vector<1x8x32xf32> to vector<1x8x32xf32>
    %227 = vector.broadcast %226 : vector<1x8x32xf32> to vector<4x8x32xf32>
    %cst_165 = arith.constant dense<0.000000e+00> : vector<4x8x8xf32>
    %228 = tpu.matmul %224, %207, %cst_165 {dimension_numbers = #tpu.dot_dimension_numbers<[2], [1], [1], [2], [0, 0, 0, 1, 1, 2], [0], [0]>} : vector<4x8x32xf32>, vector<4x32x8xf32>, vector<4x8x8xf32> -> vector<4x8x8xf32>
    %229 = vector.broadcast %213 : vector<4x1x8xf32> to vector<4x8x8xf32>
    %230 = arith.addf %228, %229 : vector<4x8x8xf32>
    %cst_166 = arith.constant dense<0.000000e+00> : vector<4x8x8xf32>
    %231 = tpu.matmul %227, %209, %cst_166 {dimension_numbers = #tpu.dot_dimension_numbers<[2], [1], [1], [2], [0, 0, 0, 1, 1, 2], [0], [0]>} : vector<4x8x32xf32>, vector<4x32x8xf32>, vector<4x8x8xf32> -> vector<4x8x8xf32>
    %232 = vector.broadcast %215 : vector<4x1x8xf32> to vector<4x8x8xf32>
    %233 = arith.addf %231, %232 : vector<4x8x8xf32>
    %cst_167 = arith.constant dense<0.000000e+00> : vector<4x8x8xf32>
    %234 = tpu.matmul %227, %211, %cst_167 {dimension_numbers = #tpu.dot_dimension_numbers<[2], [1], [1], [2], [0, 0, 0, 1, 1, 2], [0], [0]>} : vector<4x8x32xf32>, vector<4x32x8xf32>, vector<4x8x8xf32> -> vector<4x8x8xf32>
    %235 = vector.broadcast %217 : vector<4x1x8xf32> to vector<4x8x8xf32>
    %236 = arith.addf %234, %235 : vector<4x8x8xf32>
    %cst_168 = arith.constant dense<0.000000e+00> : vector<4x8x8xf32>
    %237 = tpu.matmul %230, %233, %cst_168 {dimension_numbers = #tpu.dot_dimension_numbers<[2], [2], [1], [1], [0, 0, 0, 1, 1, 1], [0], [0]>} : vector<4x8x8xf32>, vector<4x8x8xf32>, vector<4x8x8xf32> -> vector<4x8x8xf32>
    %cst_169 = arith.constant 0.353553385 : f32
    %238 = vector.broadcast %cst_169 : f32 to vector<4x8x8xf32>
    %239 = arith.mulf %237, %238 : vector<4x8x8xf32>
    %240 = vector.shape_cast %9 : vector<8x8xf32> to vector<1x8x8xf32>
    %241 = vector.broadcast %240 : vector<1x8x8xf32> to vector<4x8x8xf32>
    %242 = arith.addf %239, %241 : vector<4x8x8xf32>
    %cst_170 = arith.constant dense<0xFF800000> : vector<4x8xf32>
    %243 = vector.multi_reduction <maximumf>, %242, %cst_170 [2] : vector<4x8x8xf32> to vector<4x8xf32>
    %244 = vector.shape_cast %243 : vector<4x8xf32> to vector<4x8x1xf32>
    %245 = vector.broadcast %244 : vector<4x8x1xf32> to vector<4x8x8xf32>
    %246 = arith.subf %242, %245 : vector<4x8x8xf32>
    %247 = math.exp %246 : vector<4x8x8xf32>
    %cst_171 = arith.constant dense<0.000000e+00> : vector<4x8xf32>
    %248 = vector.multi_reduction <add>, %247, %cst_171 [2] : vector<4x8x8xf32> to vector<4x8xf32>
    %249 = vector.shape_cast %248 : vector<4x8xf32> to vector<4x8x1xf32>
    %250 = vector.broadcast %249 : vector<4x8x1xf32> to vector<4x8x8xf32>
    %251 = arith.divf %247, %250 : vector<4x8x8xf32>
    %cst_172 = arith.constant dense<0.000000e+00> : vector<4x8x8xf32>
    %252 = tpu.matmul %251, %236, %cst_172 {dimension_numbers = #tpu.dot_dimension_numbers<[2], [1], [1], [2], [0, 0, 0, 1, 1, 2], [0], [0]>} : vector<4x8x8xf32>, vector<4x8x8xf32>, vector<4x8x8xf32> -> vector<4x8x8xf32>
    %cst_173 = arith.constant dense<0.000000e+00> : vector<4x8x32xf32>
    %253 = tpu.matmul %252, %219, %cst_173 {dimension_numbers = #tpu.dot_dimension_numbers<[2], [1], [1], [2], [0, 0, 0, 1, 1, 2], [0], [0]>} : vector<4x8x8xf32>, vector<4x8x32xf32>, vector<4x8x32xf32> -> vector<4x8x32xf32>
    %cst_174 = arith.constant dense<0.000000e+00> : vector<8x32xf32>
    %254 = vector.multi_reduction <add>, %253, %cst_174 [0] : vector<4x8x32xf32> to vector<8x32xf32>
    %255 = vector.broadcast %221 : vector<1x32xf32> to vector<8x32xf32>
    %256 = arith.addf %254, %255 : vector<8x32xf32>
    %257 = arith.addf %205, %256 : vector<8x32xf32>
    %c2_175 = arith.constant 2 : index
    %c0_176 = arith.constant 0 : index
    %c0_177 = arith.constant 0 : index
    %258 = vector.load %arg11[%c2_175, %c0_176, %c0_177] : memref<4x1x32xf32, #tpu.memory_space<vmem>>, vector<1x1x32xf32>
    %259 = vector.shape_cast %258 : vector<1x1x32xf32> to vector<1x32xf32>
    %c2_178 = arith.constant 2 : index
    %c0_179 = arith.constant 0 : index
    %c0_180 = arith.constant 0 : index
    %260 = vector.load %arg12[%c2_178, %c0_179, %c0_180] : memref<4x1x32xf32, #tpu.memory_space<vmem>>, vector<1x1x32xf32>
    %261 = vector.shape_cast %260 : vector<1x1x32xf32> to vector<1x32xf32>
    %cst_181 = arith.constant dense<0.000000e+00> : vector<8xf32>
    %262 = vector.multi_reduction <add>, %257, %cst_181 [1] : vector<8x32xf32> to vector<8xf32>
    %263 = vector.shape_cast %262 : vector<8xf32> to vector<8x1xf32>
    %cst_182 = arith.constant 3.200000e+01 : f32
    %264 = vector.broadcast %cst_182 : f32 to vector<8x1xf32>
    %265 = arith.divf %263, %264 : vector<8x1xf32>
    %266 = vector.broadcast %265 : vector<8x1xf32> to vector<8x32xf32>
    %267 = arith.subf %257, %266 : vector<8x32xf32>
    %268 = arith.mulf %267, %267 : vector<8x32xf32>
    %cst_183 = arith.constant dense<0.000000e+00> : vector<8xf32>
    %269 = vector.multi_reduction <add>, %268, %cst_183 [1] : vector<8x32xf32> to vector<8xf32>
    %270 = vector.shape_cast %269 : vector<8xf32> to vector<8x1xf32>
    %cst_184 = arith.constant 3.200000e+01 : f32
    %271 = vector.broadcast %cst_184 : f32 to vector<8x1xf32>
    %272 = arith.divf %270, %271 : vector<8x1xf32>
    %273 = vector.broadcast %265 : vector<8x1xf32> to vector<8x32xf32>
    %274 = arith.subf %257, %273 : vector<8x32xf32>
    %cst_185 = arith.constant 9.99999974E-6 : f32
    %275 = vector.broadcast %cst_185 : f32 to vector<8x1xf32>
    %276 = arith.addf %272, %275 : vector<8x1xf32>
    %277 = math.rsqrt %276 : vector<8x1xf32>
    %278 = vector.broadcast %277 : vector<8x1xf32> to vector<8x32xf32>
    %279 = arith.mulf %274, %278 : vector<8x32xf32>
    %280 = vector.broadcast %259 : vector<1x32xf32> to vector<8x32xf32>
    %281 = arith.mulf %279, %280 : vector<8x32xf32>
    %282 = vector.broadcast %261 : vector<1x32xf32> to vector<8x32xf32>
    %283 = arith.addf %281, %282 : vector<8x32xf32>
    %c3 = arith.constant 3 : index
    %c0_186 = arith.constant 0 : index
    %c0_187 = arith.constant 0 : index
    %c0_188 = arith.constant 0 : index
    %284 = vector.load %arg3[%c3, %c0_186, %c0_187, %c0_188] : memref<4x4x32x8xf32, #tpu.memory_space<vmem>>, vector<1x4x32x8xf32>
    %285 = vector.shape_cast %284 : vector<1x4x32x8xf32> to vector<4x32x8xf32>
    %c3_189 = arith.constant 3 : index
    %c0_190 = arith.constant 0 : index
    %c0_191 = arith.constant 0 : index
    %c0_192 = arith.constant 0 : index
    %286 = vector.load %arg4[%c3_189, %c0_190, %c0_191, %c0_192] : memref<4x4x32x8xf32, #tpu.memory_space<vmem>>, vector<1x4x32x8xf32>
    %287 = vector.shape_cast %286 : vector<1x4x32x8xf32> to vector<4x32x8xf32>
    %c3_193 = arith.constant 3 : index
    %c0_194 = arith.constant 0 : index
    %c0_195 = arith.constant 0 : index
    %c0_196 = arith.constant 0 : index
    %288 = vector.load %arg5[%c3_193, %c0_194, %c0_195, %c0_196] : memref<4x4x32x8xf32, #tpu.memory_space<vmem>>, vector<1x4x32x8xf32>
    %289 = vector.shape_cast %288 : vector<1x4x32x8xf32> to vector<4x32x8xf32>
    %c3_197 = arith.constant 3 : index
    %c0_198 = arith.constant 0 : index
    %c0_199 = arith.constant 0 : index
    %c0_200 = arith.constant 0 : index
    %290 = vector.load %arg6[%c3_197, %c0_198, %c0_199, %c0_200] : memref<4x4x1x8xf32, #tpu.memory_space<vmem>>, vector<1x4x1x8xf32>
    %291 = vector.shape_cast %290 : vector<1x4x1x8xf32> to vector<4x1x8xf32>
    %c3_201 = arith.constant 3 : index
    %c0_202 = arith.constant 0 : index
    %c0_203 = arith.constant 0 : index
    %c0_204 = arith.constant 0 : index
    %292 = vector.load %arg7[%c3_201, %c0_202, %c0_203, %c0_204] : memref<4x4x1x8xf32, #tpu.memory_space<vmem>>, vector<1x4x1x8xf32>
    %293 = vector.shape_cast %292 : vector<1x4x1x8xf32> to vector<4x1x8xf32>
    %c3_205 = arith.constant 3 : index
    %c0_206 = arith.constant 0 : index
    %c0_207 = arith.constant 0 : index
    %c0_208 = arith.constant 0 : index
    %294 = vector.load %arg8[%c3_205, %c0_206, %c0_207, %c0_208] : memref<4x4x1x8xf32, #tpu.memory_space<vmem>>, vector<1x4x1x8xf32>
    %295 = vector.shape_cast %294 : vector<1x4x1x8xf32> to vector<4x1x8xf32>
    %c3_209 = arith.constant 3 : index
    %c0_210 = arith.constant 0 : index
    %c0_211 = arith.constant 0 : index
    %c0_212 = arith.constant 0 : index
    %296 = vector.load %arg9[%c3_209, %c0_210, %c0_211, %c0_212] : memref<4x4x8x32xf32, #tpu.memory_space<vmem>>, vector<1x4x8x32xf32>
    %297 = vector.shape_cast %296 : vector<1x4x8x32xf32> to vector<4x8x32xf32>
    %c3_213 = arith.constant 3 : index
    %c0_214 = arith.constant 0 : index
    %c0_215 = arith.constant 0 : index
    %298 = vector.load %arg10[%c3_213, %c0_214, %c0_215] : memref<4x1x32xf32, #tpu.memory_space<vmem>>, vector<1x1x32xf32>
    %299 = vector.shape_cast %298 : vector<1x1x32xf32> to vector<1x32xf32>
    %300 = vector.shape_cast %283 : vector<8x32xf32> to vector<1x8x32xf32>
    %301 = vector.shape_cast %300 : vector<1x8x32xf32> to vector<1x8x32xf32>
    %302 = vector.broadcast %301 : vector<1x8x32xf32> to vector<4x8x32xf32>
    %303 = vector.shape_cast %3 : vector<8x32xf32> to vector<1x8x32xf32>
    %304 = vector.shape_cast %303 : vector<1x8x32xf32> to vector<1x8x32xf32>
    %305 = vector.broadcast %304 : vector<1x8x32xf32> to vector<4x8x32xf32>
    %cst_216 = arith.constant dense<0.000000e+00> : vector<4x8x8xf32>
    %306 = tpu.matmul %302, %285, %cst_216 {dimension_numbers = #tpu.dot_dimension_numbers<[2], [1], [1], [2], [0, 0, 0, 1, 1, 2], [0], [0]>} : vector<4x8x32xf32>, vector<4x32x8xf32>, vector<4x8x8xf32> -> vector<4x8x8xf32>
    %307 = vector.broadcast %291 : vector<4x1x8xf32> to vector<4x8x8xf32>
    %308 = arith.addf %306, %307 : vector<4x8x8xf32>
    %cst_217 = arith.constant dense<0.000000e+00> : vector<4x8x8xf32>
    %309 = tpu.matmul %305, %287, %cst_217 {dimension_numbers = #tpu.dot_dimension_numbers<[2], [1], [1], [2], [0, 0, 0, 1, 1, 2], [0], [0]>} : vector<4x8x32xf32>, vector<4x32x8xf32>, vector<4x8x8xf32> -> vector<4x8x8xf32>
    %310 = vector.broadcast %293 : vector<4x1x8xf32> to vector<4x8x8xf32>
    %311 = arith.addf %309, %310 : vector<4x8x8xf32>
    %cst_218 = arith.constant dense<0.000000e+00> : vector<4x8x8xf32>
    %312 = tpu.matmul %305, %289, %cst_218 {dimension_numbers = #tpu.dot_dimension_numbers<[2], [1], [1], [2], [0, 0, 0, 1, 1, 2], [0], [0]>} : vector<4x8x32xf32>, vector<4x32x8xf32>, vector<4x8x8xf32> -> vector<4x8x8xf32>
    %313 = vector.broadcast %295 : vector<4x1x8xf32> to vector<4x8x8xf32>
    %314 = arith.addf %312, %313 : vector<4x8x8xf32>
    %cst_219 = arith.constant dense<0.000000e+00> : vector<4x8x8xf32>
    %315 = tpu.matmul %308, %311, %cst_219 {dimension_numbers = #tpu.dot_dimension_numbers<[2], [2], [1], [1], [0, 0, 0, 1, 1, 1], [0], [0]>} : vector<4x8x8xf32>, vector<4x8x8xf32>, vector<4x8x8xf32> -> vector<4x8x8xf32>
    %cst_220 = arith.constant 0.353553385 : f32
    %316 = vector.broadcast %cst_220 : f32 to vector<4x8x8xf32>
    %317 = arith.mulf %315, %316 : vector<4x8x8xf32>
    %cst_221 = arith.constant dense<0xFF800000> : vector<4x8xf32>
    %318 = vector.multi_reduction <maximumf>, %317, %cst_221 [2] : vector<4x8x8xf32> to vector<4x8xf32>
    %319 = vector.shape_cast %318 : vector<4x8xf32> to vector<4x8x1xf32>
    %320 = vector.broadcast %319 : vector<4x8x1xf32> to vector<4x8x8xf32>
    %321 = arith.subf %317, %320 : vector<4x8x8xf32>
    %322 = math.exp %321 : vector<4x8x8xf32>
    %cst_222 = arith.constant dense<0.000000e+00> : vector<4x8xf32>
    %323 = vector.multi_reduction <add>, %322, %cst_222 [2] : vector<4x8x8xf32> to vector<4x8xf32>
    %324 = vector.shape_cast %323 : vector<4x8xf32> to vector<4x8x1xf32>
    %325 = vector.broadcast %324 : vector<4x8x1xf32> to vector<4x8x8xf32>
    %326 = arith.divf %322, %325 : vector<4x8x8xf32>
    %cst_223 = arith.constant dense<0.000000e+00> : vector<4x8x8xf32>
    %327 = tpu.matmul %326, %314, %cst_223 {dimension_numbers = #tpu.dot_dimension_numbers<[2], [1], [1], [2], [0, 0, 0, 1, 1, 2], [0], [0]>} : vector<4x8x8xf32>, vector<4x8x8xf32>, vector<4x8x8xf32> -> vector<4x8x8xf32>
    %cst_224 = arith.constant dense<0.000000e+00> : vector<4x8x32xf32>
    %328 = tpu.matmul %327, %297, %cst_224 {dimension_numbers = #tpu.dot_dimension_numbers<[2], [1], [1], [2], [0, 0, 0, 1, 1, 2], [0], [0]>} : vector<4x8x8xf32>, vector<4x8x32xf32>, vector<4x8x32xf32> -> vector<4x8x32xf32>
    %cst_225 = arith.constant dense<0.000000e+00> : vector<8x32xf32>
    %329 = vector.multi_reduction <add>, %328, %cst_225 [0] : vector<4x8x32xf32> to vector<8x32xf32>
    %330 = vector.broadcast %299 : vector<1x32xf32> to vector<8x32xf32>
    %331 = arith.addf %329, %330 : vector<8x32xf32>
    %332 = arith.addf %283, %331 : vector<8x32xf32>
    %c3_226 = arith.constant 3 : index
    %c0_227 = arith.constant 0 : index
    %c0_228 = arith.constant 0 : index
    %333 = vector.load %arg11[%c3_226, %c0_227, %c0_228] : memref<4x1x32xf32, #tpu.memory_space<vmem>>, vector<1x1x32xf32>
    %334 = vector.shape_cast %333 : vector<1x1x32xf32> to vector<1x32xf32>
    %c3_229 = arith.constant 3 : index
    %c0_230 = arith.constant 0 : index
    %c0_231 = arith.constant 0 : index
    %335 = vector.load %arg12[%c3_229, %c0_230, %c0_231] : memref<4x1x32xf32, #tpu.memory_space<vmem>>, vector<1x1x32xf32>
    %336 = vector.shape_cast %335 : vector<1x1x32xf32> to vector<1x32xf32>
    %cst_232 = arith.constant dense<0.000000e+00> : vector<8xf32>
    %337 = vector.multi_reduction <add>, %332, %cst_232 [1] : vector<8x32xf32> to vector<8xf32>
    %338 = vector.shape_cast %337 : vector<8xf32> to vector<8x1xf32>
    %cst_233 = arith.constant 3.200000e+01 : f32
    %339 = vector.broadcast %cst_233 : f32 to vector<8x1xf32>
    %340 = arith.divf %338, %339 : vector<8x1xf32>
    %341 = vector.broadcast %340 : vector<8x1xf32> to vector<8x32xf32>
    %342 = arith.subf %332, %341 : vector<8x32xf32>
    %343 = arith.mulf %342, %342 : vector<8x32xf32>
    %cst_234 = arith.constant dense<0.000000e+00> : vector<8xf32>
    %344 = vector.multi_reduction <add>, %343, %cst_234 [1] : vector<8x32xf32> to vector<8xf32>
    %345 = vector.shape_cast %344 : vector<8xf32> to vector<8x1xf32>
    %cst_235 = arith.constant 3.200000e+01 : f32
    %346 = vector.broadcast %cst_235 : f32 to vector<8x1xf32>
    %347 = arith.divf %345, %346 : vector<8x1xf32>
    %348 = vector.broadcast %340 : vector<8x1xf32> to vector<8x32xf32>
    %349 = arith.subf %332, %348 : vector<8x32xf32>
    %cst_236 = arith.constant 9.99999974E-6 : f32
    %350 = vector.broadcast %cst_236 : f32 to vector<8x1xf32>
    %351 = arith.addf %347, %350 : vector<8x1xf32>
    %352 = math.rsqrt %351 : vector<8x1xf32>
    %353 = vector.broadcast %352 : vector<8x1xf32> to vector<8x32xf32>
    %354 = arith.mulf %349, %353 : vector<8x32xf32>
    %355 = vector.broadcast %334 : vector<1x32xf32> to vector<8x32xf32>
    %356 = arith.mulf %354, %355 : vector<8x32xf32>
    %357 = vector.broadcast %336 : vector<1x32xf32> to vector<8x32xf32>
    %358 = arith.addf %356, %357 : vector<8x32xf32>
    %c1_237 = arith.constant 1 : index
    %c0_238 = arith.constant 0 : index
    %c0_239 = arith.constant 0 : index
    %359 = vector.load %arg13[%c1_237, %c0_238, %c0_239] : memref<2x32x64xf32, #tpu.memory_space<vmem>>, vector<1x32x64xf32>
    %360 = vector.shape_cast %359 : vector<1x32x64xf32> to vector<32x64xf32>
    %cst_240 = arith.constant dense<0.000000e+00> : vector<8x64xf32>
    %361 = tpu.matmul %358, %360, %cst_240 {dimension_numbers = #tpu.dot_dimension_numbers<[1], [0], [0], [1], [0, 0, 1, 1], [], []>} : vector<8x32xf32>, vector<32x64xf32>, vector<8x64xf32> -> vector<8x64xf32>
    %c1_241 = arith.constant 1 : index
    %c0_242 = arith.constant 0 : index
    %c0_243 = arith.constant 0 : index
    %362 = vector.load %arg14[%c1_241, %c0_242, %c0_243] : memref<2x1x64xf32, #tpu.memory_space<vmem>>, vector<1x1x64xf32>
    %363 = vector.shape_cast %362 : vector<1x1x64xf32> to vector<1x64xf32>
    %364 = vector.broadcast %363 : vector<1x64xf32> to vector<8x64xf32>
    %365 = arith.addf %361, %364 : vector<8x64xf32>
    %cst_244 = arith.constant 0.000000e+00 : f32
    %366 = vector.broadcast %cst_244 : f32 to vector<8x64xf32>
    %367 = arith.maximumf %365, %366 : vector<8x64xf32>
    %c1_245 = arith.constant 1 : index
    %c0_246 = arith.constant 0 : index
    %c0_247 = arith.constant 0 : index
    %368 = vector.load %arg15[%c1_245, %c0_246, %c0_247] : memref<2x64x32xf32, #tpu.memory_space<vmem>>, vector<1x64x32xf32>
    %369 = vector.shape_cast %368 : vector<1x64x32xf32> to vector<64x32xf32>
    %cst_248 = arith.constant dense<0.000000e+00> : vector<8x32xf32>
    %370 = tpu.matmul %367, %369, %cst_248 {dimension_numbers = #tpu.dot_dimension_numbers<[1], [0], [0], [1], [0, 0, 1, 1], [], []>} : vector<8x64xf32>, vector<64x32xf32>, vector<8x32xf32> -> vector<8x32xf32>
    %c1_249 = arith.constant 1 : index
    %c0_250 = arith.constant 0 : index
    %c0_251 = arith.constant 0 : index
    %371 = vector.load %arg16[%c1_249, %c0_250, %c0_251] : memref<2x1x32xf32, #tpu.memory_space<vmem>>, vector<1x1x32xf32>
    %372 = vector.shape_cast %371 : vector<1x1x32xf32> to vector<1x32xf32>
    %373 = vector.broadcast %372 : vector<1x32xf32> to vector<8x32xf32>
    %374 = arith.addf %370, %373 : vector<8x32xf32>
    %375 = arith.addf %358, %374 : vector<8x32xf32>
    %c1_252 = arith.constant 1 : index
    %c0_253 = arith.constant 0 : index
    %c0_254 = arith.constant 0 : index
    %376 = vector.load %arg17[%c1_252, %c0_253, %c0_254] : memref<2x1x32xf32, #tpu.memory_space<vmem>>, vector<1x1x32xf32>
    %377 = vector.shape_cast %376 : vector<1x1x32xf32> to vector<1x32xf32>
    %c1_255 = arith.constant 1 : index
    %c0_256 = arith.constant 0 : index
    %c0_257 = arith.constant 0 : index
    %378 = vector.load %arg18[%c1_255, %c0_256, %c0_257] : memref<2x1x32xf32, #tpu.memory_space<vmem>>, vector<1x1x32xf32>
    %379 = vector.shape_cast %378 : vector<1x1x32xf32> to vector<1x32xf32>
    %cst_258 = arith.constant dense<0.000000e+00> : vector<8xf32>
    %380 = vector.multi_reduction <add>, %375, %cst_258 [1] : vector<8x32xf32> to vector<8xf32>
    %381 = vector.shape_cast %380 : vector<8xf32> to vector<8x1xf32>
    %cst_259 = arith.constant 3.200000e+01 : f32
    %382 = vector.broadcast %cst_259 : f32 to vector<8x1xf32>
    %383 = arith.divf %381, %382 : vector<8x1xf32>
    %384 = vector.broadcast %383 : vector<8x1xf32> to vector<8x32xf32>
    %385 = arith.subf %375, %384 : vector<8x32xf32>
    %386 = arith.mulf %385, %385 : vector<8x32xf32>
    %cst_260 = arith.constant dense<0.000000e+00> : vector<8xf32>
    %387 = vector.multi_reduction <add>, %386, %cst_260 [1] : vector<8x32xf32> to vector<8xf32>
    %388 = vector.shape_cast %387 : vector<8xf32> to vector<8x1xf32>
    %cst_261 = arith.constant 3.200000e+01 : f32
    %389 = vector.broadcast %cst_261 : f32 to vector<8x1xf32>
    %390 = arith.divf %388, %389 : vector<8x1xf32>
    %391 = vector.broadcast %383 : vector<8x1xf32> to vector<8x32xf32>
    %392 = arith.subf %375, %391 : vector<8x32xf32>
    %cst_262 = arith.constant 9.99999974E-6 : f32
    %393 = vector.broadcast %cst_262 : f32 to vector<8x1xf32>
    %394 = arith.addf %390, %393 : vector<8x1xf32>
    %395 = math.rsqrt %394 : vector<8x1xf32>
    %396 = vector.broadcast %395 : vector<8x1xf32> to vector<8x32xf32>
    %397 = arith.mulf %392, %396 : vector<8x32xf32>
    %398 = vector.broadcast %377 : vector<1x32xf32> to vector<8x32xf32>
    %399 = arith.mulf %397, %398 : vector<8x32xf32>
    %400 = vector.broadcast %379 : vector<1x32xf32> to vector<8x32xf32>
    %401 = arith.addf %399, %400 : vector<8x32xf32>
    %c0_263 = arith.constant 0 : index
    %c0_264 = arith.constant 0 : index
    %402 = vector.load %arg19[%c0_263, %c0_264] : memref<1x32xf32, #tpu.memory_space<vmem>>, vector<1x32xf32>
    %c0_265 = arith.constant 0 : index
    %c0_266 = arith.constant 0 : index
    %403 = vector.load %arg20[%c0_265, %c0_266] : memref<1x32xf32, #tpu.memory_space<vmem>>, vector<1x32xf32>
    %cst_267 = arith.constant dense<0.000000e+00> : vector<8xf32>
    %404 = vector.multi_reduction <add>, %401, %cst_267 [1] : vector<8x32xf32> to vector<8xf32>
    %405 = vector.shape_cast %404 : vector<8xf32> to vector<8x1xf32>
    %cst_268 = arith.constant 3.200000e+01 : f32
    %406 = vector.broadcast %cst_268 : f32 to vector<8x1xf32>
    %407 = arith.divf %405, %406 : vector<8x1xf32>
    %408 = vector.broadcast %407 : vector<8x1xf32> to vector<8x32xf32>
    %409 = arith.subf %401, %408 : vector<8x32xf32>
    %410 = arith.mulf %409, %409 : vector<8x32xf32>
    %cst_269 = arith.constant dense<0.000000e+00> : vector<8xf32>
    %411 = vector.multi_reduction <add>, %410, %cst_269 [1] : vector<8x32xf32> to vector<8xf32>
    %412 = vector.shape_cast %411 : vector<8xf32> to vector<8x1xf32>
    %cst_270 = arith.constant 3.200000e+01 : f32
    %413 = vector.broadcast %cst_270 : f32 to vector<8x1xf32>
    %414 = arith.divf %412, %413 : vector<8x1xf32>
    %415 = vector.broadcast %407 : vector<8x1xf32> to vector<8x32xf32>
    %416 = arith.subf %401, %415 : vector<8x32xf32>
    %cst_271 = arith.constant 9.99999974E-6 : f32
    %417 = vector.broadcast %cst_271 : f32 to vector<8x1xf32>
    %418 = arith.addf %414, %417 : vector<8x1xf32>
    %419 = math.rsqrt %418 : vector<8x1xf32>
    %420 = vector.broadcast %419 : vector<8x1xf32> to vector<8x32xf32>
    %421 = arith.mulf %416, %420 : vector<8x32xf32>
    %422 = vector.broadcast %402 : vector<1x32xf32> to vector<8x32xf32>
    %423 = arith.mulf %421, %422 : vector<8x32xf32>
    %424 = vector.broadcast %403 : vector<1x32xf32> to vector<8x32xf32>
    %425 = arith.addf %423, %424 : vector<8x32xf32>
    %c0_272 = arith.constant 0 : index
    %c0_273 = arith.constant 0 : index
    %c0_274 = arith.constant 0 : index
    %426 = vector.load %arg21[%c0_272, %c0_273, %c0_274] : memref<1x8x32xf32, #tpu.memory_space<vmem>>, vector<1x8x32xf32>
    %427 = vector.shape_cast %426 : vector<1x8x32xf32> to vector<8x32xf32>
    %428 = vector.shape_cast %425 : vector<8x32xf32> to vector<1x8x32xf32>
    tpu.vector_store %arg21[%c0_272, %c0_273, %c0_274], %428 {strides = array<i32>} : memref<1x8x32xf32, #tpu.memory_space<vmem>>, vector<1x8x32xf32>,
    return
  }
  func.func @transform_0(%arg0: i32) -> (i32, i32, i32) {
    %c0_i32 = arith.constant 0 : i32
    %c0_i32_0 = arith.constant 0 : i32
    %c0_i32_1 = arith.constant 0 : i32
    return %arg0, %c0_i32, %c0_i32_0 : i32, i32, i32
  }
  func.func @transform_1(%arg0: i32) -> (i32, i32, i32) {
    %c0_i32 = arith.constant 0 : i32
    %c0_i32_0 = arith.constant 0 : i32
    %c0_i32_1 = arith.constant 0 : i32
    return %arg0, %c0_i32, %c0_i32_0 : i32, i32, i32
  }
  func.func @transform_2(%arg0: i32) -> (i32, i32, i32, i32) {
    %c0_i32 = arith.constant 0 : i32
    %c0_i32_0 = arith.constant 0 : i32
    %c0_i32_1 = arith.constant 0 : i32
    %c0_i32_2 = arith.constant 0 : i32
    %c0_i32_3 = arith.constant 0 : i32
    return %c0_i32, %c0_i32_0, %c0_i32_1, %c0_i32_2 : i32, i32, i32, i32
  }
  func.func @transform_3(%arg0: i32) -> (i32, i32, i32, i32) {
    %c0_i32 = arith.constant 0 : i32
    %c0_i32_0 = arith.constant 0 : i32
    %c0_i32_1 = arith.constant 0 : i32
    %c0_i32_2 = arith.constant 0 : i32
    %c0_i32_3 = arith.constant 0 : i32
    return %c0_i32, %c0_i32_0, %c0_i32_1, %c0_i32_2 : i32, i32, i32, i32
  }
  func.func @transform_4(%arg0: i32) -> (i32, i32, i32, i32) {
    %c0_i32 = arith.constant 0 : i32
    %c0_i32_0 = arith.constant 0 : i32
    %c0_i32_1 = arith.constant 0 : i32
    %c0_i32_2 = arith.constant 0 : i32
    %c0_i32_3 = arith.constant 0 : i32
    return %c0_i32, %c0_i32_0, %c0_i32_1, %c0_i32_2 : i32, i32, i32, i32
  }
  func.func @transform_5(%arg0: i32) -> (i32, i32, i32, i32) {
    %c0_i32 = arith.constant 0 : i32
    %c0_i32_0 = arith.constant 0 : i32
    %c0_i32_1 = arith.constant 0 : i32
    %c0_i32_2 = arith.constant 0 : i32
    %c0_i32_3 = arith.constant 0 : i32
    return %c0_i32, %c0_i32_0, %c0_i32_1, %c0_i32_2 : i32, i32, i32, i32
  }
  func.func @transform_6(%arg0: i32) -> (i32, i32, i32, i32) {
    %c0_i32 = arith.constant 0 : i32
    %c0_i32_0 = arith.constant 0 : i32
    %c0_i32_1 = arith.constant 0 : i32
    %c0_i32_2 = arith.constant 0 : i32
    %c0_i32_3 = arith.constant 0 : i32
    return %c0_i32, %c0_i32_0, %c0_i32_1, %c0_i32_2 : i32, i32, i32, i32
  }
  func.func @transform_7(%arg0: i32) -> (i32, i32, i32, i32) {
    %c0_i32 = arith.constant 0 : i32
    %c0_i32_0 = arith.constant 0 : i32
    %c0_i32_1 = arith.constant 0 : i32
    %c0_i32_2 = arith.constant 0 : i32
    %c0_i32_3 = arith.constant 0 : i32
    return %c0_i32, %c0_i32_0, %c0_i32_1, %c0_i32_2 : i32, i32, i32, i32
  }
  func.func @transform_8(%arg0: i32) -> (i32, i32, i32, i32) {
    %c0_i32 = arith.constant 0 : i32
    %c0_i32_0 = arith.constant 0 : i32
    %c0_i32_1 = arith.constant 0 : i32
    %c0_i32_2 = arith.constant 0 : i32
    %c0_i32_3 = arith.constant 0 : i32
    return %c0_i32, %c0_i32_0, %c0_i32_1, %c0_i32_2 : i32, i32, i32, i32
  }
  func.func @transform_9(%arg0: i32) -> (i32, i32, i32) {
    %c0_i32 = arith.constant 0 : i32
    %c0_i32_0 = arith.constant 0 : i32
    %c0_i32_1 = arith.constant 0 : i32
    %c0_i32_2 = arith.constant 0 : i32
    return %c0_i32, %c0_i32_0, %c0_i32_1 : i32, i32, i32
  }
  func.func @transform_10(%arg0: i32) -> (i32, i32, i32) {
    %c0_i32 = arith.constant 0 : i32
    %c0_i32_0 = arith.constant 0 : i32
    %c0_i32_1 = arith.constant 0 : i32
    %c0_i32_2 = arith.constant 0 : i32
    return %c0_i32, %c0_i32_0, %c0_i32_1 : i32, i32, i32
  }
  func.func @transform_11(%arg0: i32) -> (i32, i32, i32) {
    %c0_i32 = arith.constant 0 : i32
    %c0_i32_0 = arith.constant 0 : i32
    %c0_i32_1 = arith.constant 0 : i32
    %c0_i32_2 = arith.constant 0 : i32
    return %c0_i32, %c0_i32_0, %c0_i32_1 : i32, i32, i32
  }
  func.func @transform_12(%arg0: i32) -> (i32, i32, i32) {
    %c0_i32 = arith.constant 0 : i32
    %c0_i32_0 = arith.constant 0 : i32
    %c0_i32_1 = arith.constant 0 : i32
    %c0_i32_2 = arith.constant 0 : i32
    return %c0_i32, %c0_i32_0, %c0_i32_1 : i32, i32, i32
  }
  func.func @transform_13(%arg0: i32) -> (i32, i32, i32) {
    %c0_i32 = arith.constant 0 : i32
    %c0_i32_0 = arith.constant 0 : i32
    %c0_i32_1 = arith.constant 0 : i32
    %c0_i32_2 = arith.constant 0 : i32
    return %c0_i32, %c0_i32_0, %c0_i32_1 : i32, i32, i32
  }
  func.func @transform_14(%arg0: i32) -> (i32, i32, i32) {
    %c0_i32 = arith.constant 0 : i32
    %c0_i32_0 = arith.constant 0 : i32
    %c0_i32_1 = arith.constant 0 : i32
    %c0_i32_2 = arith.constant 0 : i32
    return %c0_i32, %c0_i32_0, %c0_i32_1 : i32, i32, i32
  }
  func.func @transform_15(%arg0: i32) -> (i32, i32, i32) {
    %c0_i32 = arith.constant 0 : i32
    %c0_i32_0 = arith.constant 0 : i32
    %c0_i32_1 = arith.constant 0 : i32
    %c0_i32_2 = arith.constant 0 : i32
    return %c0_i32, %c0_i32_0, %c0_i32_1 : i32, i32, i32
  }
  func.func @transform_16(%arg0: i32) -> (i32, i32, i32) {
    %c0_i32 = arith.constant 0 : i32
    %c0_i32_0 = arith.constant 0 : i32
    %c0_i32_1 = arith.constant 0 : i32
    %c0_i32_2 = arith.constant 0 : i32
    return %c0_i32, %c0_i32_0, %c0_i32_1 : i32, i32, i32
  }
  func.func @transform_17(%arg0: i32) -> (i32, i32, i32) {
    %c0_i32 = arith.constant 0 : i32
    %c0_i32_0 = arith.constant 0 : i32
    %c0_i32_1 = arith.constant 0 : i32
    %c0_i32_2 = arith.constant 0 : i32
    return %c0_i32, %c0_i32_0, %c0_i32_1 : i32, i32, i32
  }
  func.func @transform_18(%arg0: i32) -> (i32, i32) {
    %c0_i32 = arith.constant 0 : i32
    %c0_i32_0 = arith.constant 0 : i32
    %c0_i32_1 = arith.constant 0 : i32
    return %c0_i32, %c0_i32_0 : i32, i32
  }
  func.func @transform_19(%arg0: i32) -> (i32, i32) {
    %c0_i32 = arith.constant 0 : i32
    %c0_i32_0 = arith.constant 0 : i32
    %c0_i32_1 = arith.constant 0 : i32
    return %c0_i32, %c0_i32_0 : i32, i32
  }
  func.func @transform_20(%arg0: i32) -> (i32, i32, i32) {
    %c0_i32 = arith.constant 0 : i32
    %c0_i32_0 = arith.constant 0 : i32
    %c0_i32_1 = arith.constant 0 : i32
    return %arg0, %c0_i32, %c0_i32_0 : i32, i32, i32
  }
}

</mosaic_0001>

<llo_original>
// kernel: decoder_forward.1
$region0: #{decoder_forward.1}
  #allocation0 [shape = 'u32[]', space=smem, size = 0x4, offset = 0x4, fixed_abs, tag = 'smem constant byte address 0x4 - core index']
  #allocation1 [shape = 'u32[72,128]{1,0:T(1,128)}', space=vmem, size = 0x9000, scoped, tag = 'internal scratch']
  %s0 = inlined_call_operand.vmem [shape: f32[2,8,32], index: 0, kind: input, shape index: {}]
  %s1 = inlined_call_operand.vmem [shape: f32[2,8,32], index: 1, kind: input, shape index: {}]
  %s2 = inlined_call_operand.vmem [shape: f32[4,4,32,8], index: 2, kind: input, shape index: {}]
  %s3 = inlined_call_operand.vmem [shape: f32[4,4,32,8], index: 3, kind: input, shape index: {}]
  %s4 = inlined_call_operand.vmem [shape: f32[4,4,32,8], index: 4, kind: input, shape index: {}]
  %s5 = inlined_call_operand.vmem [shape: f32[4,4,1,8], index: 5, kind: input, shape index: {}]
  %s6 = inlined_call_operand.vmem [shape: f32[4,4,1,8], index: 6, kind: input, shape index: {}]
  %s7 = inlined_call_operand.vmem [shape: f32[4,4,1,8], index: 7, kind: input, shape index: {}]
  %s8 = inlined_call_operand.vmem [shape: f32[4,4,8,32], index: 8, kind: input, shape index: {}]
  %s9 = inlined_call_operand.vmem [shape: f32[4,1,32], index: 9, kind: input, shape index: {}]
  %s10 = inlined_call_operand.vmem [shape: f32[4,1,32], index: 10, kind: input, shape index: {}]
  %s11 = inlined_call_operand.vmem [shape: f32[4,1,32], index: 11, kind: input, shape index: {}]
  %s12 = inlined_call_operand.vmem [shape: f32[2,32,64], index: 12, kind: input, shape index: {}]
  %s13 = inlined_call_operand.vmem [shape: f32[2,1,64], index: 13, kind: input, shape index: {}]
  %s14 = inlined_call_operand.vmem [shape: f32[2,64,32], index: 14, kind: input, shape index: {}]
  %s15 = inlined_call_operand.vmem [shape: f32[2,1,32], index: 15, kind: input, shape index: {}]
  %s16 = inlined_call_operand.vmem [shape: f32[2,1,32], index: 16, kind: input, shape index: {}]
  %s17 = inlined_call_operand.vmem [shape: f32[2,1,32], index: 17, kind: input, shape index: {}]
  %s18 = inlined_call_operand.vmem [shape: f32[1,32], index: 18, kind: input, shape index: {}]
  %s19 = inlined_call_operand.vmem [shape: f32[1,32], index: 19, kind: input, shape index: {}]
  %s20 = inlined_call_operand.hbm [shape: f32[2,8,32], index: 20, kind: output, shape index: {}]
  %s21 = sld [smem:[#allocation0]]
  $region113: #{decoder_forward.1} parent=0
    _
  %s23 = ssub.s32 1, %s21
  %s24 = scalar_select 0, %s23, %s21
  $region1: #{decoder_forward.1} parent=0
    #allocation2 [shape = 'u8[8192]{0}', space=vmem, size = 0x2000, scoped, tag = 'output window, operand 0']
    #allocation3 [shape = 's32[2]{0}', space=sflag, size = 0x8, scoped, tag = 'scoped memory for decoder_forward.1']
    %25 = vsyncpa [#allocation3], 0
    %s26 = scalar_lea.sflag [#allocation3], 1
    %27 = vsyncpa %s26, 0
    loop: start=0, step=1, limit=4
    $region2: #{decoder_forward.1} parent=1 // loop_pre_header
      _
    $region3: #{decoder_forward.1} parent=1 // loop_header
      %s29 = sphi 0, %s33
      %p30 = scmp.ge.s32.totalorder %s29, 4
      %s39 = sphi 0, %s41
      %s42 = sphi 0, %s39
      %s43 = sphi 0, %s42
      %s59 = sphi 0, %s43
      %s65 = sphi 0, %s67
      %s68 = sphi 0, %s65
      %s69 = sphi 0, %s68
      %s85 = sphi 0, %s69
      %s89 = sphi 0, %s89
      %s91 = sphi 0, %s89
      %s92 = sphi 0, %s91
      %s106 = sphi 0, %s92
      %s110 = sphi 0, %s110
      %s112 = sphi 0, %s110
      %s113 = sphi 0, %s112
      %s127 = sphi 0, %s113
      %s131 = sphi 0, %s131
      %s133 = sphi 0, %s131
      %s134 = sphi 0, %s133
      %s148 = sphi 0, %s134
      %s152 = sphi 0, %s152
      %s154 = sphi 0, %s152
      %s155 = sphi 0, %s154
      %s169 = sphi 0, %s155
      %s173 = sphi 0, %s173
      %s175 = sphi 0, %s173
      %s176 = sphi 0, %s175
      %s190 = sphi 0, %s176
      %s194 = sphi 0, %s194
      %s196 = sphi 0, %s194
      %s197 = sphi 0, %s196
      %s211 = sphi 0, %s197
      %s215 = sphi 0, %s215
      %s217 = sphi 0, %s215
      %s218 = sphi 0, %s217
      %s232 = sphi 0, %s218
      %s236 = sphi 0, %s236
      %s238 = sphi 0, %s236
      %s239 = sphi 0, %s238
      %s253 = sphi 0, %s239
      %s257 = sphi 0, %s257
      %s259 = sphi 0, %s257
      %s260 = sphi 0, %s259
      %s274 = sphi 0, %s260
      %s278 = sphi 0, %s278
      %s280 = sphi 0, %s278
      %s281 = sphi 0, %s280
      %s295 = sphi 0, %s281
      %s299 = sphi 0, %s299
      %s301 = sphi 0, %s299
      %s302 = sphi 0, %s301
      %s316 = sphi 0, %s302
      %s320 = sphi 0, %s320
      %s322 = sphi 0, %s320
      %s323 = sphi 0, %s322
      %s337 = sphi 0, %s323
      %s341 = sphi 0, %s341
      %s343 = sphi 0, %s341
      %s344 = sphi 0, %s343
      %s358 = sphi 0, %s344
      %s362 = sphi 0, %s362
      %s364 = sphi 0, %s362
      %s365 = sphi 0, %s364
      %s379 = sphi 0, %s365
      %s383 = sphi 0, %s383
      %s385 = sphi 0, %s383
      %s386 = sphi 0, %s385
      %s400 = sphi 0, %s386
      %s404 = sphi 0, %s404
      %s406 = sphi 0, %s404
      %s407 = sphi 0, %s406
      %s421 = sphi 0, %s407
      %s425 = sphi 0, %s425
      %s427 = sphi 0, %s425
      %s428 = sphi 0, %s427
      %s442 = sphi 0, %s428
      %s446 = sphi 0, %s446
      %s448 = sphi 0, %s446
      %s449 = sphi 0, %s448
      %s463 = sphi 0, %s449
      %s469 = sphi 0, %s471
      %s472 = sphi 0, %s469
      %s473 = sphi 0, %s472
      %s489 = sphi 0, %s473
    $region4: #{decoder_forward.1} parent=1 // loop_header_branch
      %32 = sbr.rel (%p30) target = $region8
    $region5: #{decoder_forward.1} parent=1 // loop_body
      %s34 = ssub.s32 %s29, 1
      %s35 = ssub.s32 %s29, 2
      %s36 = sadd.s32 %s29, 1
      %s37 = ssub.s32 %s29, %s36
      %p38 = scmp.eq.s32.totalorder %s37, 0
      %s40 = sadd.s32 %s39, 1
      %s41 = scalar_select %p38, %s39, %s40
      %p44 = pneg %p38
      %p45 = scmp.eq.s32.totalorder %s29, 1
      %p46 = por %p44, %p45
      %p47 = scmp.ne.s32.totalorder %s39, %s42
      %p48 = scmp.eq.s32.totalorder %s29, 0
      %p49 = por %p47, %p48
      %p50 = scmp.ne.s32.totalorder %s39, %s42
      %p51 = scmp.eq.s32.totalorder %s34, 1
      %p52 = por %p50, %p51
      %p53 = scmp.ne.s32.totalorder %s42, %s43
      %p54 = scmp.eq.s32.totalorder %s34, 0
      %p55 = por %p53, %p54
      %p56 = scmp.ne.s32.totalorder %s42, %s43
      %p57 = scmp.eq.s32.totalorder %s35, 1
      %p58 = por %p56, %p57
      %p60 = scmp.ne.s32.totalorder %s43, %s59
      %p61 = scmp.eq.s32.totalorder %s35, 0
      %p62 = por %p60, %p61
      %s63 = ssub.s32 %s29, %s36
      %p64 = scmp.eq.s32.totalorder %s63, 0
      %s66 = sadd.s32 %s65, 1
      %s67 = scalar_select %p64, %s65, %s66
      %p70 = pneg %p64
      %p71 = scmp.eq.s32.totalorder %s29, 1
      %p72 = por %p70, %p71
      %p73 = scmp.ne.s32.totalorder %s65, %s68
      %p74 = scmp.eq.s32.totalorder %s29, 0
      %p75 = por %p73, %p74
      %p76 = scmp.ne.s32.totalorder %s65, %s68
      %p77 = scmp.eq.s32.totalorder %s34, 1
      %p78 = por %p76, %p77
      %p79 = scmp.ne.s32.totalorder %s68, %s69
      %p80 = scmp.eq.s32.totalorder %s34, 0
      %p81 = por %p79, %p80
      %p82 = scmp.ne.s32.totalorder %s68, %s69
      %p83 = scmp.eq.s32.totalorder %s35, 1
      %p84 = por %p82, %p83
      %p86 = scmp.ne.s32.totalorder %s69, %s85
      %p87 = scmp.eq.s32.totalorder %s35, 0
      %p88 = por %p86, %p87
      %s90 = sadd.s32 %s89, 1
      %p93 = scmp.eq.s32.totalorder %s29, 1
      %p94 = scmp.ne.s32.totalorder %s89, %s91
      %p95 = scmp.eq.s32.totalorder %s29, 0
      %p96 = por %p94, %p95
      %p97 = scmp.ne.s32.totalorder %s89, %s91
      %p98 = scmp.eq.s32.totalorder %s34, 1
      %p99 = por %p97, %p98
      %p100 = scmp.ne.s32.totalorder %s91, %s92
      %p101 = scmp.eq.s32.totalorder %s34, 0
      %p102 = por %p100, %p101
      %p103 = scmp.ne.s32.totalorder %s91, %s92
      %p104 = scmp.eq.s32.totalorder %s35, 1
      %p105 = por %p103, %p104
      %p107 = scmp.ne.s32.totalorder %s92, %s106
      %p108 = scmp.eq.s32.totalorder %s35, 0
      %p109 = por %p107, %p108
      %s111 = sadd.s32 %s110, 1
      %p114 = scmp.eq.s32.totalorder %s29, 1
      %p115 = scmp.ne.s32.totalorder %s110, %s112
      %p116 = scmp.eq.s32.totalorder %s29, 0
      %p117 = por %p115, %p116
      %p118 = scmp.ne.s32.totalorder %s110, %s112
      %p119 = scmp.eq.s32.totalorder %s34, 1
      %p120 = por %p118, %p119
      %p121 = scmp.ne.s32.totalorder %s112, %s113
      %p122 = scmp.eq.s32.totalorder %s34, 0
      %p123 = por %p121, %p122
      %p124 = scmp.ne.s32.totalorder %s112, %s113
      %p125 = scmp.eq.s32.totalorder %s35, 1
      %p126 = por %p124, %p125
      %p128 = scmp.ne.s32.totalorder %s113, %s127
      %p129 = scmp.eq.s32.totalorder %s35, 0
      %p130 = por %p128, %p129
      %s132 = sadd.s32 %s131, 1
      %p135 = scmp.eq.s32.totalorder %s29, 1
      %p136 = scmp.ne.s32.totalorder %s131, %s133
      %p137 = scmp.eq.s32.totalorder %s29, 0
      %p138 = por %p136, %p137
      %p139 = scmp.ne.s32.totalorder %s131, %s133
      %p140 = scmp.eq.s32.totalorder %s34, 1
      %p141 = por %p139, %p140
      %p142 = scmp.ne.s32.totalorder %s133, %s134
      %p143 = scmp.eq.s32.totalorder %s34, 0
      %p144 = por %p142, %p143
      %p145 = scmp.ne.s32.totalorder %s133, %s134
      %p146 = scmp.eq.s32.totalorder %s35, 1
      %p147 = por %p145, %p146
      %p149 = scmp.ne.s32.totalorder %s134, %s148
      %p150 = scmp.eq.s32.totalorder %s35, 0
      %p151 = por %p149, %p150
      %s153 = sadd.s32 %s152, 1
      %p156 = scmp.eq.s32.totalorder %s29, 1
      %p157 = scmp.ne.s32.totalorder %s152, %s154
      %p158 = scmp.eq.s32.totalorder %s29, 0
      %p159 = por %p157, %p158
      %p160 = scmp.ne.s32.totalorder %s152, %s154
      %p161 = scmp.eq.s32.totalorder %s34, 1
      %p162 = por %p160, %p161
      %p163 = scmp.ne.s32.totalorder %s154, %s155
      %p164 = scmp.eq.s32.totalorder %s34, 0
      %p165 = por %p163, %p164
      %p166 = scmp.ne.s32.totalorder %s154, %s155
      %p167 = scmp.eq.s32.totalorder %s35, 1
      %p168 = por %p166, %p167
      %p170 = scmp.ne.s32.totalorder %s155, %s169
      %p171 = scmp.eq.s32.totalorder %s35, 0
      %p172 = por %p170, %p171
      %s174 = sadd.s32 %s173, 1
      %p177 = scmp.eq.s32.totalorder %s29, 1
      %p178 = scmp.ne.s32.totalorder %s173, %s175
      %p179 = scmp.eq.s32.totalorder %s29, 0
      %p180 = por %p178, %p179
      %p181 = scmp.ne.s32.totalorder %s173, %s175
      %p182 = scmp.eq.s32.totalorder %s34, 1
      %p183 = por %p181, %p182
      %p184 = scmp.ne.s32.totalorder %s175, %s176
      %p185 = scmp.eq.s32.totalorder %s34, 0
      %p186 = por %p184, %p185
      %p187 = scmp.ne.s32.totalorder %s175, %s176
      %p188 = scmp.eq.s32.totalorder %s35, 1
      %p189 = por %p187, %p188
      %p191 = scmp.ne.s32.totalorder %s176, %s190
      %p192 = scmp.eq.s32.totalorder %s35, 0
      %p193 = por %p191, %p192
      %s195 = sadd.s32 %s194, 1
      %p198 = scmp.eq.s32.totalorder %s29, 1
      %p199 = scmp.ne.s32.totalorder %s194, %s196
      %p200 = scmp.eq.s32.totalorder %s29, 0
      %p201 = por %p199, %p200
      %p202 = scmp.ne.s32.totalorder %s194, %s196
      %p203 = scmp.eq.s32.totalorder %s34, 1
      %p204 = por %p202, %p203
      %p205 = scmp.ne.s32.totalorder %s196, %s197
      %p206 = scmp.eq.s32.totalorder %s34, 0
      %p207 = por %p205, %p206
      %p208 = scmp.ne.s32.totalorder %s196, %s197
      %p209 = scmp.eq.s32.totalorder %s35, 1
      %p210 = por %p208, %p209
      %p212 = scmp.ne.s32.totalorder %s197, %s211
      %p213 = scmp.eq.s32.totalorder %s35, 0
      %p214 = por %p212, %p213
      %s216 = sadd.s32 %s215, 1
      %p219 = scmp.eq.s32.totalorder %s29, 1
      %p220 = scmp.ne.s32.totalorder %s215, %s217
      %p221 = scmp.eq.s32.totalorder %s29, 0
      %p222 = por %p220, %p221
      %p223 = scmp.ne.s32.totalorder %s215, %s217
      %p224 = scmp.eq.s32.totalorder %s34, 1
      %p225 = por %p223, %p224
      %p226 = scmp.ne.s32.totalorder %s217, %s218
      %p227 = scmp.eq.s32.totalorder %s34, 0
      %p228 = por %p226, %p227
      %p229 = scmp.ne.s32.totalorder %s217, %s218
      %p230 = scmp.eq.s32.totalorder %s35, 1
      %p231 = por %p229, %p230
      %p233 = scmp.ne.s32.totalorder %s218, %s232
      %p234 = scmp.eq.s32.totalorder %s35, 0
      %p235 = por %p233, %p234
      %s237 = sadd.s32 %s236, 1
      %p240 = scmp.eq.s32.totalorder %s29, 1
      %p241 = scmp.ne.s32.totalorder %s236, %s238
      %p242 = scmp.eq.s32.totalorder %s29, 0
      %p243 = por %p241, %p242
      %p244 = scmp.ne.s32.totalorder %s236, %s238
      %p245 = scmp.eq.s32.totalorder %s34, 1
      %p246 = por %p244, %p245
      %p247 = scmp.ne.s32.totalorder %s238, %s239
      %p248 = scmp.eq.s32.totalorder %s34, 0
      %p249 = por %p247, %p248
      %p250 = scmp.ne.s32.totalorder %s238, %s239
      %p251 = scmp.eq.s32.totalorder %s35, 1
      %p252 = por %p250, %p251
      %p254 = scmp.ne.s32.totalorder %s239, %s253
      %p255 = scmp.eq.s32.totalorder %s35, 0
      %p256 = por %p254, %p255
      %s258 = sadd.s32 %s257, 1
      %p261 = scmp.eq.s32.totalorder %s29, 1
      %p262 = scmp.ne.s32.totalorder %s257, %s259
      %p263 = scmp.eq.s32.totalorder %s29, 0
      %p264 = por %p262, %p263
      %p265 = scmp.ne.s32.totalorder %s257, %s259
      %p266 = scmp.eq.s32.totalorder %s34, 1
      %p267 = por %p265, %p266
      %p268 = scmp.ne.s32.totalorder %s259, %s260
      %p269 = scmp.eq.s32.totalorder %s34, 0
      %p270 = por %p268, %p269
      %p271 = scmp.ne.s32.totalorder %s259, %s260
      %p272 = scmp.eq.s32.totalorder %s35, 1
      %p273 = por %p271, %p272
      %p275 = scmp.ne.s32.totalorder %s260, %s274
      %p276 = scmp.eq.s32.totalorder %s35, 0
      %p277 = por %p275, %p276
      %s279 = sadd.s32 %s278, 1
      %p282 = scmp.eq.s32.totalorder %s29, 1
      %p283 = scmp.ne.s32.totalorder %s278, %s280
      %p284 = scmp.eq.s32.totalorder %s29, 0
      %p285 = por %p283, %p284
      %p286 = scmp.ne.s32.totalorder %s278, %s280
      %p287 = scmp.eq.s32.totalorder %s34, 1
      %p288 = por %p286, %p287
      %p289 = scmp.ne.s32.totalorder %s280, %s281
      %p290 = scmp.eq.s32.totalorder %s34, 0
      %p291 = por %p289, %p290
      %p292 = scmp.ne.s32.totalorder %s280, %s281
      %p293 = scmp.eq.s32.totalorder %s35, 1
      %p294 = por %p292, %p293
      %p296 = scmp.ne.s32.totalorder %s281, %s295
      %p297 = scmp.eq.s32.totalorder %s35, 0
      %p298 = por %p296, %p297
      %s300 = sadd.s32 %s299, 1
      %p303 = scmp.eq.s32.totalorder %s29, 1
      %p304 = scmp.ne.s32.totalorder %s299, %s301
      %p305 = scmp.eq.s32.totalorder %s29, 0
      %p306 = por %p304, %p305
      %p307 = scmp.ne.s32.totalorder %s299, %s301
      %p308 = scmp.eq.s32.totalorder %s34, 1
      %p309 = por %p307, %p308
      %p310 = scmp.ne.s32.totalorder %s301, %s302
      %p311 = scmp.eq.s32.totalorder %s34, 0
      %p312 = por %p310, %p311
      %p313 = scmp.ne.s32.totalorder %s301, %s302
      %p314 = scmp.eq.s32.totalorder %s35, 1
      %p315 = por %p313, %p314
      %p317 = scmp.ne.s32.totalorder %s302, %s316
      %p318 = scmp.eq.s32.totalorder %s35, 0
      %p319 = por %p317, %p318
      %s321 = sadd.s32 %s320, 1
      %p324 = scmp.eq.s32.totalorder %s29, 1
      %p325 = scmp.ne.s32.totalorder %s320, %s322
      %p326 = scmp.eq.s32.totalorder %s29, 0
      %p327 = por %p325, %p326
      %p328 = scmp.ne.s32.totalorder %s320, %s322
      %p329 = scmp.eq.s32.totalorder %s34, 1
      %p330 = por %p328, %p329
      %p331 = scmp.ne.s32.totalorder %s322, %s323
      %p332 = scmp.eq.s32.totalorder %s34, 0
      %p333 = por %p331, %p332
      %p334 = scmp.ne.s32.totalorder %s322, %s323
      %p335 = scmp.eq.s32.totalorder %s35, 1
      %p336 = por %p334, %p335
      %p338 = scmp.ne.s32.totalorder %s323, %s337
      %p339 = scmp.eq.s32.totalorder %s35, 0
      %p340 = por %p338, %p339
      %s342 = sadd.s32 %s341, 1
      %p345 = scmp.eq.s32.totalorder %s29, 1
      %p346 = scmp.ne.s32.totalorder %s341, %s343
      %p347 = scmp.eq.s32.totalorder %s29, 0
      %p348 = por %p346, %p347
      %p349 = scmp.ne.s32.totalorder %s341, %s343
      %p350 = scmp.eq.s32.totalorder %s34, 1
      %p351 = por %p349, %p350
      %p352 = scmp.ne.s32.totalorder %s343, %s344
      %p353 = scmp.eq.s32.totalorder %s34, 0
      %p354 = por %p352, %p353
      %p355 = scmp.ne.s32.totalorder %s343, %s344
      %p356 = scmp.eq.s32.totalorder %s35, 1
      %p357 = por %p355, %p356
      %p359 = scmp.ne.s32.totalorder %s344, %s358
      %p360 = scmp.eq.s32.totalorder %s35, 0
      %p361 = por %p359, %p360
      %s363 = sadd.s32 %s362, 1
      %p366 = scmp.eq.s32.totalorder %s29, 1
      %p367 = scmp.ne.s32.totalorder %s362, %s364
      %p368 = scmp.eq.s32.totalorder %s29, 0
      %p369 = por %p367, %p368
      %p370 = scmp.ne.s32.totalorder %s362, %s364
      %p371 = scmp.eq.s32.totalorder %s34, 1
      %p372 = por %p370, %p371
      %p373 = scmp.ne.s32.totalorder %s364, %s365
      %p374 = scmp.eq.s32.totalorder %s34, 0
      %p375 = por %p373, %p374
      %p376 = scmp.ne.s32.totalorder %s364, %s365
      %p377 = scmp.eq.s32.totalorder %s35, 1
      %p378 = por %p376, %p377
      %p380 = scmp.ne.s32.totalorder %s365, %s379
      %p381 = scmp.eq.s32.totalorder %s35, 0
      %p382 = por %p380, %p381
      %s384 = sadd.s32 %s383, 1
      %p387 = scmp.eq.s32.totalorder %s29, 1
      %p388 = scmp.ne.s32.totalorder %s383, %s385
      %p389 = scmp.eq.s32.totalorder %s29, 0
      %p390 = por %p388, %p389
      %p391 = scmp.ne.s32.totalorder %s383, %s385
      %p392 = scmp.eq.s32.totalorder %s34, 1
      %p393 = por %p391, %p392
      %p394 = scmp.ne.s32.totalorder %s385, %s386
      %p395 = scmp.eq.s32.totalorder %s34, 0
      %p396 = por %p394, %p395
      %p397 = scmp.ne.s32.totalorder %s385, %s386
      %p398 = scmp.eq.s32.totalorder %s35, 1
      %p399 = por %p397, %p398
      %p401 = scmp.ne.s32.totalorder %s386, %s400
      %p402 = scmp.eq.s32.totalorder %s35, 0
      %p403 = por %p401, %p402
      %s405 = sadd.s32 %s404, 1
      %p408 = scmp.eq.s32.totalorder %s29, 1
      %p409 = scmp.ne.s32.totalorder %s404, %s406
      %p410 = scmp.eq.s32.totalorder %s29, 0
      %p411 = por %p409, %p410
      %p412 = scmp.ne.s32.totalorder %s404, %s406
      %p413 = scmp.eq.s32.totalorder %s34, 1
      %p414 = por %p412, %p413
      %p415 = scmp.ne.s32.totalorder %s406, %s407
      %p416 = scmp.eq.s32.totalorder %s34, 0
      %p417 = por %p415, %p416
      %p418 = scmp.ne.s32.totalorder %s406, %s407
      %p419 = scmp.eq.s32.totalorder %s35, 1
      %p420 = por %p418, %p419
      %p422 = scmp.ne.s32.totalorder %s407, %s421
      %p423 = scmp.eq.s32.totalorder %s35, 0
      %p424 = por %p422, %p423
      %s426 = sadd.s32 %s425, 1
      %p429 = scmp.eq.s32.totalorder %s29, 1
      %p430 = scmp.ne.s32.totalorder %s425, %s427
      %p431 = scmp.eq.s32.totalorder %s29, 0
      %p432 = por %p430, %p431
      %p433 = scmp.ne.s32.totalorder %s425, %s427
      %p434 = scmp.eq.s32.totalorder %s34, 1
      %p435 = por %p433, %p434
      %p436 = scmp.ne.s32.totalorder %s427, %s428
      %p437 = scmp.eq.s32.totalorder %s34, 0
      %p438 = por %p436, %p437
      %p439 = scmp.ne.s32.totalorder %s427, %s428
      %p440 = scmp.eq.s32.totalorder %s35, 1
      %p441 = por %p439, %p440
      %p443 = scmp.ne.s32.totalorder %s428, %s442
      %p444 = scmp.eq.s32.totalorder %s35, 0
      %p445 = por %p443, %p444
      %s447 = sadd.s32 %s446, 1
      %p450 = scmp.eq.s32.totalorder %s29, 1
      %p451 = scmp.ne.s32.totalorder %s446, %s448
      %p452 = scmp.eq.s32.totalorder %s29, 0
      %p453 = por %p451, %p452
      %p454 = scmp.ne.s32.totalorder %s446, %s448
      %p455 = scmp.eq.s32.totalorder %s34, 1
      %p456 = por %p454, %p455
      %p457 = scmp.ne.s32.totalorder %s448, %s449
      %p458 = scmp.eq.s32.totalorder %s34, 0
      %p459 = por %p457, %p458
      %p460 = scmp.ne.s32.totalorder %s448, %s449
      %p461 = scmp.eq.s32.totalorder %s35, 1
      %p462 = por %p460, %p461
      %p464 = scmp.ne.s32.totalorder %s449, %s463
      %p465 = scmp.eq.s32.totalorder %s35, 0
      %p466 = por %p464, %p465
      %s467 = ssub.s32 %s29, %s36
      %p468 = scmp.eq.s32.totalorder %s467, 0
      %s470 = sadd.s32 %s469, 1
      %s471 = scalar_select %p468, %s469, %s470
      %p474 = pneg %p468
      %p475 = scmp.eq.s32.totalorder %s29, 1
      %p476 = por %p474, %p475
      %p477 = scmp.ne.s32.totalorder %s469, %s472
      %p478 = scmp.eq.s32.totalorder %s29, 0
      %p479 = por %p477, %p478
      %p480 = scmp.ne.s32.totalorder %s469, %s472
      %p481 = scmp.eq.s32.totalorder %s34, 1
      %p482 = por %p480, %p481
      %p483 = scmp.ne.s32.totalorder %s472, %s473
      %p484 = scmp.eq.s32.totalorder %s34, 0
      %p485 = por %p483, %p484
      %p486 = scmp.ne.s32.totalorder %s472, %s473
      %p487 = scmp.eq.s32.totalorder %s35, 1
      %p488 = por %p486, %p487
      %p490 = scmp.ne.s32.totalorder %s473, %s489
      %p491 = scmp.eq.s32.totalorder %s35, 0
      %p492 = por %p490, %p491
      %p493 = scmp.le.s32.totalorder 1, %s29
      %p494 = scmp.lt.s32.totalorder %s29, 3
      %p495 = pnand %p493, %p494
      %p496 = pneg %p495
      // Predicated region
      $region9: #{decoder_forward.1} parent=5 // pred_check
        _
      $region10: #{decoder_forward.1} parent=5 // pred_check_branch
        %498 = sbr.rel (%p495) target = $region12
      $region11: #{decoder_forward.1} parent=5 // pred_region
        %s499 = ssub.s32 %s29, 1
        // Predicated region
        $region13: #{decoder_forward.1} parent=11 // pred_check
          %p500 = pneg %p102
        $region14: #{decoder_forward.1} parent=11 // pred_check_branch
          %502 = sbr.rel (%p500) target = $region16
        $region15: #{decoder_forward.1} parent=11 // pred_region
          _
        $region16: #{decoder_forward.1} parent=11 // pred_fallthru
          _
        // Predicated region
        $region17: #{decoder_forward.1} parent=11 // pred_check
          %p503 = pneg %p123
        $region18: #{decoder_forward.1} parent=11 // pred_check_branch
          %505 = sbr.rel (%p503) target = $region20
        $region19: #{decoder_forward.1} parent=11 // pred_region
          _
        $region20: #{decoder_forward.1} parent=11 // pred_fallthru
          _
        // Predicated region
        $region21: #{decoder_forward.1} parent=11 // pred_check
          %p506 = pneg %p144
        $region22: #{decoder_forward.1} parent=11 // pred_check_branch
          %508 = sbr.rel (%p506) target = $region24
        $region23: #{decoder_forward.1} parent=11 // pred_region
          _
        $region24: #{decoder_forward.1} parent=11 // pred_fallthru
          _
        // Predicated region
        $region25: #{decoder_forward.1} parent=11 // pred_check
          %p509 = pneg %p165
        $region26: #{decoder_forward.1} parent=11 // pred_check_branch
          %511 = sbr.rel (%p509) target = $region28
        $region27: #{decoder_forward.1} parent=11 // pred_region
          _
        $region28: #{decoder_forward.1} parent=11 // pred_fallthru
          _
        // Predicated region
        $region29: #{decoder_forward.1} parent=11 // pred_check
          %p512 = pneg %p186
        $region30: #{decoder_forward.1} parent=11 // pred_check_branch
          %514 = sbr.rel (%p512) target = $region32
        $region31: #{decoder_forward.1} parent=11 // pred_region
          _
        $region32: #{decoder_forward.1} parent=11 // pred_fallthru
          _
        // Predicated region
        $region33: #{decoder_forward.1} parent=11 // pred_check
          %p515 = pneg %p207
        $region34: #{decoder_forward.1} parent=11 // pred_check_branch
          %517 = sbr.rel (%p515) target = $region36
        $region35: #{decoder_forward.1} parent=11 // pred_region
          _
        $region36: #{decoder_forward.1} parent=11 // pred_fallthru
          _
        // Predicated region
        $region37: #{decoder_forward.1} parent=11 // pred_check
          %p518 = pneg %p228
        $region38: #{decoder_forward.1} parent=11 // pred_check_branch
          %520 = sbr.rel (%p518) target = $region40
        $region39: #{decoder_forward.1} parent=11 // pred_region
          _
        $region40: #{decoder_forward.1} parent=11 // pred_fallthru
          _
        // Predicated region
        $region41: #{decoder_forward.1} parent=11 // pred_check
          %p521 = pneg %p249
        $region42: #{decoder_forward.1} parent=11 // pred_check_branch
          %523 = sbr.rel (%p521) target = $region44
        $region43: #{decoder_forward.1} parent=11 // pred_region
          _
        $region44: #{decoder_forward.1} parent=11 // pred_fallthru
          _
        // Predicated region
        $region45: #{decoder_forward.1} parent=11 // pred_check
          %p524 = pneg %p270
        $region46: #{decoder_forward.1} parent=11 // pred_check_branch
          %526 = sbr.rel (%p524) target = $region48
        $region47: #{decoder_forward.1} parent=11 // pred_region
          _
        $region48: #{decoder_forward.1} parent=11 // pred_fallthru
          _
        // Predicated region
        $region49: #{decoder_forward.1} parent=11 // pred_check
          %p527 = pneg %p291
        $region50: #{decoder_forward.1} parent=11 // pred_check_branch
          %529 = sbr.rel (%p527) target = $region52
        $region51: #{decoder_forward.1} parent=11 // pred_region
          _
        $region52: #{decoder_forward.1} parent=11 // pred_fallthru
          _
        // Predicated region
        $region53: #{decoder_forward.1} parent=11 // pred_check
          %p530 = pneg %p312
        $region54: #{decoder_forward.1} parent=11 // pred_check_branch
          %532 = sbr.rel (%p530) target = $region56
        $region55: #{decoder_forward.1} parent=11 // pred_region
          _
        $region56: #{decoder_forward.1} parent=11 // pred_fallthru
          _
        // Predicated region
        $region57: #{decoder_forward.1} parent=11 // pred_check
          %p533 = pneg %p333
        $region58: #{decoder_forward.1} parent=11 // pred_check_branch
          %535 = sbr.rel (%p533) target = $region60
        $region59: #{decoder_forward.1} parent=11 // pred_region
          _
        $region60: #{decoder_forward.1} parent=11 // pred_fallthru
          _
        // Predicated region
        $region61: #{decoder_forward.1} parent=11 // pred_check
          %p536 = pneg %p354
        $region62: #{decoder_forward.1} parent=11 // pred_check_branch
          %538 = sbr.rel (%p536) target = $region64
        $region63: #{decoder_forward.1} parent=11 // pred_region
          _
        $region64: #{decoder_forward.1} parent=11 // pred_fallthru
          _
        // Predicated region
        $region65: #{decoder_forward.1} parent=11 // pred_check
          %p539 = pneg %p375
        $region66: #{decoder_forward.1} parent=11 // pred_check_branch
          %541 = sbr.rel (%p539) target = $region68
        $region67: #{decoder_forward.1} parent=11 // pred_region
          _
        $region68: #{decoder_forward.1} parent=11 // pred_fallthru
          _
        // Predicated region
        $region69: #{decoder_forward.1} parent=11 // pred_check
          %p542 = pneg %p396
        $region70: #{decoder_forward.1} parent=11 // pred_check_branch
          %544 = sbr.rel (%p542) target = $region72
        $region71: #{decoder_forward.1} parent=11 // pred_region
          _
        $region72: #{decoder_forward.1} parent=11 // pred_fallthru
          _
        // Predicated region
        $region73: #{decoder_forward.1} parent=11 // pred_check
          %p545 = pneg %p417
        $region74: #{decoder_forward.1} parent=11 // pred_check_branch
          %547 = sbr.rel (%p545) target = $region76
        $region75: #{decoder_forward.1} parent=11 // pred_region
          _
        $region76: #{decoder_forward.1} parent=11 // pred_fallthru
          _
        // Predicated region
        $region77: #{decoder_forward.1} parent=11 // pred_check
          %p548 = pneg %p438
        $region78: #{decoder_forward.1} parent=11 // pred_check_branch
          %550 = sbr.rel (%p548) target = $region80
        $region79: #{decoder_forward.1} parent=11 // pred_region
          _
        $region80: #{decoder_forward.1} parent=11 // pred_fallthru
          _
        // Predicated region
        $region81: #{decoder_forward.1} parent=11 // pred_check
          %p551 = pneg %p459
        $region82: #{decoder_forward.1} parent=11 // pred_check_branch
          %553 = sbr.rel (%p551) target = $region84
        $region83: #{decoder_forward.1} parent=11 // pred_region
          _
        $region84: #{decoder_forward.1} parent=11 // pred_fallthru
          _
      $region12: #{decoder_forward.1} parent=5 // pred_fallthru
        _
      %p554 = scmp.lt.s32.totalorder %s29, 2
      // Predicated region
      $region85: #{decoder_forward.1} parent=5 // pred_check
        %p555 = pneg %p554
      $region86: #{decoder_forward.1} parent=5 // pred_check_branch
        %557 = sbr.rel (%p555) target = $region88
      $region87: #{decoder_forward.1} parent=5 // pred_region
        // Predicated region
        $region89: #{decoder_forward.1} parent=87 // pred_check
          %p558 = pneg %p49
        $region90: #{decoder_forward.1} parent=87 // pred_check_branch
          %560 = sbr.rel (%p558) target = $region92
        $region91: #{decoder_forward.1} parent=87 // pred_region
          %p561 = scmp.lt.s32.totalorder %s29, 1
          %s562 = scalar_select %p561, %s29, 1
          %s563 = smul.addr %s562, 8
          %s564 = scalar_lea.vmem %s0, %s563
        $region92: #{decoder_forward.1} parent=87 // pred_fallthru
          _
        // Predicated region
        $region93: #{decoder_forward.1} parent=87 // pred_check
          %p565 = pneg %p75
        $region94: #{decoder_forward.1} parent=87 // pred_check_branch
          %567 = sbr.rel (%p565) target = $region96
        $region95: #{decoder_forward.1} parent=87 // pred_region
          %p568 = scmp.lt.s32.totalorder %s29, 1
          %s569 = scalar_select %p568, %s29, 1
          %s570 = smul.addr %s569, 8
          %s571 = scalar_lea.vmem %s1, %s570
        $region96: #{decoder_forward.1} parent=87 // pred_fallthru
          _
      $region88: #{decoder_forward.1} parent=5 // pred_fallthru
        _
      %p572 = scmp.le.s32.totalorder 1, %s29
      %p573 = scmp.lt.s32.totalorder %s29, 3
      %p574 = pnand %p572, %p573
      %p575 = pneg %p574
      // Predicated region
      $region97: #{decoder_forward.1} parent=5 // pred_check
        _
      $region98: #{decoder_forward.1} parent=5 // pred_check_branch
        %577 = sbr.rel (%p574) target = $region100
      $region99: #{decoder_forward.1} parent=5 // pred_region
        %s578 = ssub.s32 %s29, 1
        %p579 = scmp.lt.s32.totalorder %s34, 1
        %s580 = scalar_select %p579, %s34, 1
        %s581 = smul.addr %s580, 8
        %s582 = scalar_lea.vmem %s0, %s581
        %p583 = pneg %p55
        %p584 = pneg %p52
        %p585 = scmp.lt.s32.totalorder %s34, 1
        %s586 = scalar_select %p585, %s34, 1
        %s587 = smul.addr %s586, 8
        %s588 = scalar_lea.vmem %s1, %s587
        %p589 = pneg %p81
        %p590 = pneg %p78
        %p591 = pneg %p102
        %p592 = pneg %p99
        %p593 = pneg %p123
        %p594 = pneg %p120
        %p595 = pneg %p144
        %p596 = pneg %p141
        %p597 = pneg %p165
        %p598 = pneg %p162
        %p599 = pneg %p186
        %p600 = pneg %p183
        %p601 = pneg %p207
        %p602 = pneg %p204
        %p603 = pneg %p228
        %p604 = pneg %p225
        %p605 = pneg %p249
        %p606 = pneg %p246
        %p607 = pneg %p270
        %p608 = pneg %p267
        %p609 = pneg %p291
        %p610 = pneg %p288
        %p611 = pneg %p312
        %p612 = pneg %p309
        %p613 = pneg %p333
        %p614 = pneg %p330
        %p615 = pneg %p354
        %p616 = pneg %p351
        %p617 = pneg %p375
        %p618 = pneg %p372
        %p619 = pneg %p396
        %p620 = pneg %p393
        %p621 = pneg %p417
        %p622 = pneg %p414
        %p623 = pneg %p438
        %p624 = pneg %p435
        %p625 = pneg %p459
        %p626 = pneg %p456
        %p627 = pneg %p485
        %p628 = pneg %p482
        %s629 = sand.u32 %s472, 1
        %s630 = scalar_lea.sflag [#allocation3], %s629
        %s631 = sand.u32 %s472, 1
        %s632 = smul.addr %s631, 8
        %s633 = scalar_lea.vmem [#allocation2], %s632
        %p634 = scmp.lt.s32.totalorder %s34, 1
        %s635 = scalar_select %p634, %s34, 1
        %s636 = smul.addr %s635, 8
        %s637 = scalar_lea.vmem %s0, %s636
        %p638 = scmp.lt.s32.totalorder %s34, 1
        %s639 = scalar_select %p638, %s34, 1
        %s640 = smul.addr %s639, 8
        %s641 = scalar_lea.vmem %s1, %s640
        %v642 = vld [vmem:[%s637] sm:$0xff]
        %v643 = vld [vmem:[%s641] sm:$0xff]
        %v644 = vlaneseq
        %v645 = vshrl.u32 %v644, 7
        %v646 = vlaneseq
        %v647 = vand.u32 %v646, 127
        %vm648 = vcmp.le.s32.totalorder %v647, %v645
        %v649 = vsel %vm648, 0.0, -1e+09
        %v650 = vld [vmem:[%s2] sm:$0xff]
        %v651 = vld [vmem:[%s2 + $0x8] sm:$0xff]
        %v652 = vld [vmem:[%s2 + $0x10] sm:$0xff]
        %v653 = vld [vmem:[%s2 + $0x18] sm:$0xff]
        %v654 = vld [vmem:[%s2 + $0x20] sm:$0xff]
        %v655 = vld [vmem:[%s2 + $0x28] sm:$0xff]
        %v656 = vld [vmem:[%s2 + $0x30] sm:$0xff]
        %v657 = vld [vmem:[%s2 + $0x38] sm:$0xff]
        %v658 = vld [vmem:[%s2 + $0x40] sm:$0xff]
        %v659 = vld [vmem:[%s2 + $0x48] sm:$0xff]
        %v660 = vld [vmem:[%s2 + $0x50] sm:$0xff]
        %v661 = vld [vmem:[%s2 + $0x58] sm:$0xff]
        %v662 = vld [vmem:[%s2 + $0x60] sm:$0xff]
        %v663 = vld [vmem:[%s2 + $0x68] sm:$0xff]
        %v664 = vld [vmem:[%s2 + $0x70] sm:$0xff]
        %v665 = vld [vmem:[%s2 + $0x78] sm:$0xff]
        %v666 = vld [vmem:[%s3] sm:$0xff]
        %v667 = vld [vmem:[%s3 + $0x8] sm:$0xff]
        %v668 = vld [vmem:[%s3 + $0x10] sm:$0xff]
        %v669 = vld [vmem:[%s3 + $0x18] sm:$0xff]
        %v670 = vld [vmem:[%s3 + $0x20] sm:$0xff]
        %v671 = vld [vmem:[%s3 + $0x28] sm:$0xff]
        %v672 = vld [vmem:[%s3 + $0x30] sm:$0xff]
        %v673 = vld [vmem:[%s3 + $0x38] sm:$0xff]
        %v674 = vld [vmem:[%s3 + $0x40] sm:$0xff]
        %v675 = vld [vmem:[%s3 + $0x48] sm:$0xff]
        %v676 = vld [vmem:[%s3 + $0x50] sm:$0xff]
        %v677 = vld [vmem:[%s3 + $0x58] sm:$0xff]
        %v678 = vld [vmem:[%s3 + $0x60] sm:$0xff]
        %v679 = vld [vmem:[%s3 + $0x68] sm:$0xff]
        %v680 = vld [vmem:[%s3 + $0x70] sm:$0xff]
        %v681 = vld [vmem:[%s3 + $0x78] sm:$0xff]
        %v682 = vld [vmem:[%s4] sm:$0xff]
        %v683 = vld [vmem:[%s4 + $0x8] sm:$0xff]
        %v684 = vld [vmem:[%s4 + $0x10] sm:$0xff]
        %v685 = vld [vmem:[%s4 + $0x18] sm:$0xff]
        %v686 = vld [vmem:[%s4 + $0x20] sm:$0xff]
        %v687 = vld [vmem:[%s4 + $0x28] sm:$0xff]
        %v688 = vld [vmem:[%s4 + $0x30] sm:$0xff]
        %v689 = vld [vmem:[%s4 + $0x38] sm:$0xff]
        %v690 = vld [vmem:[%s4 + $0x40] sm:$0xff]
        %v691 = vld [vmem:[%s4 + $0x48] sm:$0xff]
        %v692 = vld [vmem:[%s4 + $0x50] sm:$0xff]
        %v693 = vld [vmem:[%s4 + $0x58] sm:$0xff]
        %v694 = vld [vmem:[%s4 + $0x60] sm:$0xff]
        %v695 = vld [vmem:[%s4 + $0x68] sm:$0xff]
        %v696 = vld [vmem:[%s4 + $0x70] sm:$0xff]
        %v697 = vld [vmem:[%s4 + $0x78] sm:$0xff]
        %v698 = vld [vmem:[%s5] sm:$0x1]
        %v699 = vld [vmem:[%s5 + $0x1] sm:$0x1]
        %v700 = vld [vmem:[%s5 + $0x2] sm:$0x1]
        %v701 = vld [vmem:[%s5 + $0x3] sm:$0x1]
        %v702 = vld [vmem:[%s6] sm:$0x1]
        %v703 = vld [vmem:[%s6 + $0x1] sm:$0x1]
        %v704 = vld [vmem:[%s6 + $0x2] sm:$0x1]
        %v705 = vld [vmem:[%s6 + $0x3] sm:$0x1]
        %v706 = vld [vmem:[%s7] sm:$0x1]
        %v707 = vld [vmem:[%s7 + $0x1] sm:$0x1]
        %v708 = vld [vmem:[%s7 + $0x2] sm:$0x1]
        %v709 = vld [vmem:[%s7 + $0x3] sm:$0x1]
        %v710 = vld [vmem:[%s8] sm:$0xff]
        %v711 = vld [vmem:[%s8 + $0x8] sm:$0xff]
        %v712 = vld [vmem:[%s8 + $0x10] sm:$0xff]
        %v713 = vld [vmem:[%s8 + $0x18] sm:$0xff]
        %v714 = vld [vmem:[%s9] sm:$0x1]
        %v719 = vperm.slane %v698, 0
        %v720 = vperm.slane %v699, 0
        %v721 = vperm.slane %v700, 0
        %v722 = vperm.slane %v701, 0
        %vm727 = vcmask 261120
        %v729 = vsel %vm727, %v642, 0
        %731 = vmatpush.msra.mxu0 0.0
        %732 = vmatpush.msra.mxu0 0.0
        %733 = vmatpush.msra.mxu0 0.0
        %734 = vmatpush.msra.mxu0 0.0
        %735 = vmatpush.msra.mxu0 0.0
        %736 = vmatpush.msra.mxu0 0.0
        %737 = vmatpush.msra.mxu0 0.0
        %738 = vmatpush.msra.mxu0 0.0
        %739 = vmatpush.msra.mxu0 0.0
        %740 = vmatpush.msra.mxu0 0.0
        %741 = vmatpush.msra.mxu0 0.0
        %742 = vmatpush.msra.mxu0 0.0
        %743 = vmatpush.msra.mxu0 %v653
        %744 = vmatpush.msra.mxu0 %v652
        %745 = vmatpush.msra.mxu0 %v651
        %746 = vmatpush.msra.mxu0 %v650
        %747 = vmatmul.f32.gmra.mxu0 %v729
        %v748 = vpop.f32.mrf.mxu0
        %v749 = vadd.f32 %v719, %v748
        %750 = vdwg.mxu0
        %751 = vmatpush.msra.mxu0 0.0
        %752 = vmatpush.msra.mxu0 0.0
        %753 = vmatpush.msra.mxu0 0.0
        %754 = vmatpush.msra.mxu0 0.0
        %755 = vmatpush.msra.mxu0 0.0
        %756 = vmatpush.msra.mxu0 0.0
        %757 = vmatpush.msra.mxu0 0.0
        %758 = vmatpush.msra.mxu0 0.0
        %759 = vmatpush.msra.mxu0 0.0
        %760 = vmatpush.msra.mxu0 0.0
        %761 = vmatpush.msra.mxu0 0.0
        %762 = vmatpush.msra.mxu0 0.0
        %763 = vmatpush.msra.mxu0 %v657
        %764 = vmatpush.msra.mxu0 %v656
        %765 = vmatpush.msra.mxu0 %v655
        %766 = vmatpush.msra.mxu0 %v654
        %767 = vmatmul.f32.gmra.mxu0 %v729
        %v768 = vpop.f32.mrf.mxu0
        %v769 = vadd.f32 %v720, %v768
        %770 = vdwg.mxu0
        %771 = vmatpush.msra.mxu0 0.0
        %772 = vmatpush.msra.mxu0 0.0
        %773 = vmatpush.msra.mxu0 0.0
        %774 = vmatpush.msra.mxu0 0.0
        %775 = vmatpush.msra.mxu0 0.0
        %776 = vmatpush.msra.mxu0 0.0
        %777 = vmatpush.msra.mxu0 0.0
        %778 = vmatpush.msra.mxu0 0.0
        %779 = vmatpush.msra.mxu0 0.0
        %780 = vmatpush.msra.mxu0 0.0
        %781 = vmatpush.msra.mxu0 0.0
        %782 = vmatpush.msra.mxu0 0.0
        %783 = vmatpush.msra.mxu0 %v661
        %784 = vmatpush.msra.mxu0 %v660
        %785 = vmatpush.msra.mxu0 %v659
        %786 = vmatpush.msra.mxu0 %v658
        %787 = vmatmul.f32.gmra.mxu0 %v729
        %v788 = vpop.f32.mrf.mxu0
        %v789 = vadd.f32 %v721, %v788
        %790 = vdwg.mxu0
        %791 = vmatpush.msra.mxu0 0.0
        %792 = vmatpush.msra.mxu0 0.0
        %793 = vmatpush.msra.mxu0 0.0
        %794 = vmatpush.msra.mxu0 0.0
        %795 = vmatpush.msra.mxu0 0.0
        %796 = vmatpush.msra.mxu0 0.0
        %797 = vmatpush.msra.mxu0 0.0
        %798 = vmatpush.msra.mxu0 0.0
        %799 = vmatpush.msra.mxu0 0.0
        %800 = vmatpush.msra.mxu0 0.0
        %801 = vmatpush.msra.mxu0 0.0
        %802 = vmatpush.msra.mxu0 0.0
        %803 = vmatpush.msra.mxu0 %v665
        %804 = vmatpush.msra.mxu0 %v664
        %805 = vmatpush.msra.mxu0 %v663
        %806 = vmatpush.msra.mxu0 %v662
        %807 = vmatmul.f32.gmra.mxu0 %v729
        %v808 = vpop.f32.mrf.mxu0
        %v809 = vadd.f32 %v722, %v808
        %810 = vdwg.mxu0
        %v815 = vperm.slane %v702, 0
        %v816 = vperm.slane %v703, 0
        %v817 = vperm.slane %v704, 0
        %v818 = vperm.slane %v705, 0
        %823 = vmatpush.msra.mxu0 0.0
        %824 = vmatpush.msra.mxu0 0.0
        %825 = vmatpush.msra.mxu0 0.0
        %826 = vmatpush.msra.mxu0 0.0
        %827 = vmatpush.msra.mxu0 0.0
        %828 = vmatpush.msra.mxu0 0.0
        %829 = vmatpush.msra.mxu0 0.0
        %830 = vmatpush.msra.mxu0 0.0
        %831 = vmatpush.msra.mxu0 0.0
        %832 = vmatpush.msra.mxu0 0.0
        %833 = vmatpush.msra.mxu0 0.0
        %834 = vmatpush.msra.mxu0 0.0
        %835 = vmatpush.msra.mxu0 %v669
        %836 = vmatpush.msra.mxu0 %v668
        %837 = vmatpush.msra.mxu0 %v667
        %838 = vmatpush.msra.mxu0 %v666
        %839 = vmatmul.f32.gmra.mxu0 %v729
        %v840 = vpop.f32.mrf.mxu0
        %v841 = vadd.f32 %v815, %v840
        %842 = vdwg.mxu0
        %843 = vmatpush.msra.mxu0 0.0
        %844 = vmatpush.msra.mxu0 0.0
        %845 = vmatpush.msra.mxu0 0.0
        %846 = vmatpush.msra.mxu0 0.0
        %847 = vmatpush.msra.mxu0 0.0
        %848 = vmatpush.msra.mxu0 0.0
        %849 = vmatpush.msra.mxu0 0.0
        %850 = vmatpush.msra.mxu0 0.0
        %851 = vmatpush.msra.mxu0 0.0
        %852 = vmatpush.msra.mxu0 0.0
        %853 = vmatpush.msra.mxu0 0.0
        %854 = vmatpush.msra.mxu0 0.0
        %855 = vmatpush.msra.mxu0 %v673
        %856 = vmatpush.msra.mxu0 %v672
        %857 = vmatpush.msra.mxu0 %v671
        %858 = vmatpush.msra.mxu0 %v670
        %859 = vmatmul.f32.gmra.mxu0 %v729
        %v860 = vpop.f32.mrf.mxu0
        %v861 = vadd.f32 %v816, %v860
        %862 = vdwg.mxu0
        %863 = vmatpush.msra.mxu0 0.0
        %864 = vmatpush.msra.mxu0 0.0
        %865 = vmatpush.msra.mxu0 0.0
        %866 = vmatpush.msra.mxu0 0.0
        %867 = vmatpush.msra.mxu0 0.0
        %868 = vmatpush.msra.mxu0 0.0
        %869 = vmatpush.msra.mxu0 0.0
        %870 = vmatpush.msra.mxu0 0.0
        %871 = vmatpush.msra.mxu0 0.0
        %872 = vmatpush.msra.mxu0 0.0
        %873 = vmatpush.msra.mxu0 0.0
        %874 = vmatpush.msra.mxu0 0.0
        %875 = vmatpush.msra.mxu0 %v677
        %876 = vmatpush.msra.mxu0 %v676
        %877 = vmatpush.msra.mxu0 %v675
        %878 = vmatpush.msra.mxu0 %v674
        %879 = vmatmul.f32.gmra.mxu0 %v729
        %v880 = vpop.f32.mrf.mxu0
        %v881 = vadd.f32 %v817, %v880
        %882 = vdwg.mxu0
        %883 = vmatpush.msra.mxu0 0.0
        %884 = vmatpush.msra.mxu0 0.0
        %885 = vmatpush.msra.mxu0 0.0
        %886 = vmatpush.msra.mxu0 0.0
        %887 = vmatpush.msra.mxu0 0.0
        %888 = vmatpush.msra.mxu0 0.0
        %889 = vmatpush.msra.mxu0 0.0
        %890 = vmatpush.msra.mxu0 0.0
        %891 = vmatpush.msra.mxu0 0.0
        %892 = vmatpush.msra.mxu0 0.0
        %893 = vmatpush.msra.mxu0 0.0
        %894 = vmatpush.msra.mxu0 0.0
        %895 = vmatpush.msra.mxu0 %v681
        %896 = vmatpush.msra.mxu0 %v680
        %897 = vmatpush.msra.mxu0 %v679
        %898 = vmatpush.msra.mxu0 %v678
        %899 = vmatmul.f32.gmra.mxu0 %v729
        %v900 = vpop.f32.mrf.mxu0
        %v901 = vadd.f32 %v818, %v900
        %902 = vdwg.mxu0
        %v907 = vperm.slane %v706, 0
        %v908 = vperm.slane %v707, 0
        %v909 = vperm.slane %v708, 0
        %v910 = vperm.slane %v709, 0
        %915 = vmatpush.msra.mxu0 0.0
        %916 = vmatpush.msra.mxu0 0.0
        %917 = vmatpush.msra.mxu0 0.0
        %918 = vmatpush.msra.mxu0 0.0
        %919 = vmatpush.msra.mxu0 0.0
        %920 = vmatpush.msra.mxu0 0.0
        %921 = vmatpush.msra.mxu0 0.0
        %922 = vmatpush.msra.mxu0 0.0
        %923 = vmatpush.msra.mxu0 0.0
        %924 = vmatpush.msra.mxu0 0.0
        %925 = vmatpush.msra.mxu0 0.0
        %926 = vmatpush.msra.mxu0 0.0
        %927 = vmatpush.msra.mxu0 %v685
        %928 = vmatpush.msra.mxu0 %v684
        %929 = vmatpush.msra.mxu0 %v683
        %930 = vmatpush.msra.mxu0 %v682
        %931 = vmatmul.f32.gmra.mxu0 %v729
        %v932 = vpop.f32.mrf.mxu0
        %v933 = vadd.f32 %v907, %v932
        %934 = vdwg.mxu0
        %935 = vmatpush.msra.mxu0 0.0
        %936 = vmatpush.msra.mxu0 0.0
        %937 = vmatpush.msra.mxu0 0.0
        %938 = vmatpush.msra.mxu0 0.0
        %939 = vmatpush.msra.mxu0 0.0
        %940 = vmatpush.msra.mxu0 0.0
        %941 = vmatpush.msra.mxu0 0.0
        %942 = vmatpush.msra.mxu0 0.0
        %943 = vmatpush.msra.mxu0 0.0
        %944 = vmatpush.msra.mxu0 0.0
        %945 = vmatpush.msra.mxu0 0.0
        %946 = vmatpush.msra.mxu0 0.0
        %947 = vmatpush.msra.mxu0 %v689
        %948 = vmatpush.msra.mxu0 %v688
        %949 = vmatpush.msra.mxu0 %v687
        %950 = vmatpush.msra.mxu0 %v686
        %951 = vmatmul.f32.gmra.mxu0 %v729
        %v952 = vpop.f32.mrf.mxu0
        %v953 = vadd.f32 %v908, %v952
        %954 = vdwg.mxu0
        %955 = vmatpush.msra.mxu0 0.0
        %956 = vmatpush.msra.mxu0 0.0
        %957 = vmatpush.msra.mxu0 0.0
        %958 = vmatpush.msra.mxu0 0.0
        %959 = vmatpush.msra.mxu0 0.0
        %960 = vmatpush.msra.mxu0 0.0
        %961 = vmatpush.msra.mxu0 0.0
        %962 = vmatpush.msra.mxu0 0.0
        %963 = vmatpush.msra.mxu0 0.0
        %964 = vmatpush.msra.mxu0 0.0
        %965 = vmatpush.msra.mxu0 0.0
        %966 = vmatpush.msra.mxu0 0.0
        %967 = vmatpush.msra.mxu0 %v693
        %968 = vmatpush.msra.mxu0 %v692
        %969 = vmatpush.msra.mxu0 %v691
        %970 = vmatpush.msra.mxu0 %v690
        %971 = vmatmul.f32.gmra.mxu0 %v729
        %v972 = vpop.f32.mrf.mxu0
        %v973 = vadd.f32 %v909, %v972
        %974 = vdwg.mxu0
        %975 = vmatpush.msra.mxu0 0.0
        %976 = vmatpush.msra.mxu0 0.0
        %977 = vmatpush.msra.mxu0 0.0
        %978 = vmatpush.msra.mxu0 0.0
        %979 = vmatpush.msra.mxu0 0.0
        %980 = vmatpush.msra.mxu0 0.0
        %981 = vmatpush.msra.mxu0 0.0
        %982 = vmatpush.msra.mxu0 0.0
        %983 = vmatpush.msra.mxu0 0.0
        %984 = vmatpush.msra.mxu0 0.0
        %985 = vmatpush.msra.mxu0 0.0
        %986 = vmatpush.msra.mxu0 0.0
        %987 = vmatpush.msra.mxu0 %v697
        %988 = vmatpush.msra.mxu0 %v696
        %989 = vmatpush.msra.mxu0 %v695
        %990 = vmatpush.msra.mxu0 %v694
        %991 = vmatmul.f32.gmra.mxu0 %v729
        %v992 = vpop.f32.mrf.mxu0
        %v993 = vadd.f32 %v910, %v992
        %994 = vdwg.mxu0
        %vm995 = vcmask 64512
        %v997 = vsel %vm995, %v749, 0
        %v1000 = vsel %vm995, %v841, 0
        %1002 = vmatpush.xpose.msra.mxu0 0.0
        %1003 = vmatpush.xpose.msra.mxu0 0.0
        %1004 = vmatpush.xpose.msra.mxu0 0.0
        %1005 = vmatpush.xpose.msra.mxu0 0.0
        %1006 = vmatpush.xpose.msra.mxu0 0.0
        %1007 = vmatpush.xpose.msra.mxu0 0.0
        %1008 = vmatpush.xpose.msra.mxu0 0.0
        %1009 = vmatpush.xpose.msra.mxu0 0.0
        %1010 = vmatpush.xpose.msra.mxu0 0.0
        %1011 = vmatpush.xpose.msra.mxu0 0.0
        %1012 = vmatpush.xpose.msra.mxu0 0.0
        %1013 = vmatpush.xpose.msra.mxu0 0.0
        %1014 = vmatpush.xpose.msra.mxu0 0.0
        %1015 = vmatpush.xpose.msra.mxu0 0.0
        %1016 = vmatpush.xpose.msra.mxu0 0.0
        %1017 = vmatpush.xpose.msra.mxu0 %v1000
        %1018 = vmatmul.f32.gmra.mxu0 %v997
        %v1019 = vpop.f32.mrf.mxu0
        %v1020 = vadd.f32 0.0, %v1019
        %1021 = vdwg.mxu0
        %v1023 = vsel %vm995, %v769, 0
        %v1026 = vsel %vm995, %v861, 0
        %1028 = vmatpush.xpose.msra.mxu0 0.0
        %1029 = vmatpush.xpose.msra.mxu0 0.0
        %1030 = vmatpush.xpose.msra.mxu0 0.0
        %1031 = vmatpush.xpose.msra.mxu0 0.0
        %1032 = vmatpush.xpose.msra.mxu0 0.0
        %1033 = vmatpush.xpose.msra.mxu0 0.0
        %1034 = vmatpush.xpose.msra.mxu0 0.0
        %1035 = vmatpush.xpose.msra.mxu0 0.0
        %1036 = vmatpush.xpose.msra.mxu0 0.0
        %1037 = vmatpush.xpose.msra.mxu0 0.0
        %1038 = vmatpush.xpose.msra.mxu0 0.0
        %1039 = vmatpush.xpose.msra.mxu0 0.0
        %1040 = vmatpush.xpose.msra.mxu0 0.0
        %1041 = vmatpush.xpose.msra.mxu0 0.0
        %1042 = vmatpush.xpose.msra.mxu0 0.0
        %1043 = vmatpush.xpose.msra.mxu0 %v1026
        %1044 = vmatmul.f32.gmra.mxu0 %v1023
        %v1045 = vpop.f32.mrf.mxu0
        %v1046 = vadd.f32 0.0, %v1045
        %1047 = vdwg.mxu0
        %v1049 = vsel %vm995, %v789, 0
        %v1052 = vsel %vm995, %v881, 0
        %1054 = vmatpush.xpose.msra.mxu0 0.0
        %1055 = vmatpush.xpose.msra.mxu0 0.0
        %1056 = vmatpush.xpose.msra.mxu0 0.0
        %1057 = vmatpush.xpose.msra.mxu0 0.0
        %1058 = vmatpush.xpose.msra.mxu0 0.0
        %1059 = vmatpush.xpose.msra.mxu0 0.0
        %1060 = vmatpush.xpose.msra.mxu0 0.0
        %1061 = vmatpush.xpose.msra.mxu0 0.0
        %1062 = vmatpush.xpose.msra.mxu0 0.0
        %1063 = vmatpush.xpose.msra.mxu0 0.0
        %1064 = vmatpush.xpose.msra.mxu0 0.0
        %1065 = vmatpush.xpose.msra.mxu0 0.0
        %1066 = vmatpush.xpose.msra.mxu0 0.0
        %1067 = vmatpush.xpose.msra.mxu0 0.0
        %1068 = vmatpush.xpose.msra.mxu0 0.0
        %1069 = vmatpush.xpose.msra.mxu0 %v1052
        %1070 = vmatmul.f32.gmra.mxu0 %v1049
        %v1071 = vpop.f32.mrf.mxu0
        %v1072 = vadd.f32 0.0, %v1071
        %1073 = vdwg.mxu0
        %v1075 = vsel %vm995, %v809, 0
        %v1078 = vsel %vm995, %v901, 0
        %1080 = vmatpush.xpose.msra.mxu0 0.0
        %1081 = vmatpush.xpose.msra.mxu0 0.0
        %1082 = vmatpush.xpose.msra.mxu0 0.0
        %1083 = vmatpush.xpose.msra.mxu0 0.0
        %1084 = vmatpush.xpose.msra.mxu0 0.0
        %1085 = vmatpush.xpose.msra.mxu0 0.0
        %1086 = vmatpush.xpose.msra.mxu0 0.0
        %1087 = vmatpush.xpose.msra.mxu0 0.0
        %1088 = vmatpush.xpose.msra.mxu0 0.0
        %1089 = vmatpush.xpose.msra.mxu0 0.0
        %1090 = vmatpush.xpose.msra.mxu0 0.0
        %1091 = vmatpush.xpose.msra.mxu0 0.0
        %1092 = vmatpush.xpose.msra.mxu0 0.0
        %1093 = vmatpush.xpose.msra.mxu0 0.0
        %1094 = vmatpush.xpose.msra.mxu0 0.0
        %1095 = vmatpush.xpose.msra.mxu0 %v1078
        %1096 = vmatmul.f32.gmra.mxu0 %v1075
        %v1097 = vpop.f32.mrf.mxu0
        %v1098 = vadd.f32 0.0, %v1097
        %1099 = vdwg.mxu0
        %v1100 = vmul.f32 %v1020, 0.35355338
        %v1101 = vmul.f32 %v1046, 0.35355338
        %v1102 = vmul.f32 %v1072, 0.35355338
        %v1103 = vmul.f32 %v1098, 0.35355338
        %v1104 = vadd.f32 %v1100, %v649
        %v1105 = vadd.f32 %v1101, %v649
        %v1106 = vadd.f32 %v1102, %v649
        %v1107 = vadd.f32 %v1103, %v649
        %v1108 = vsel %vm995, %v1104, -inf
        %1109 = vmax.xlane.f32.xlu0 %v1108
        %v1110 = vpop.xlane.xlu0 %1109
        %v1111 = vsel %vm995, %v1105, -inf
        %1112 = vmax.xlane.f32.xlu0 %v1111
        %v1113 = vpop.xlane.xlu0 %1112
        %v1114 = vsel %vm995, %v1106, -inf
        %1115 = vmax.xlane.f32.xlu0 %v1114
        %v1116 = vpop.xlane.xlu0 %1115
        %v1117 = vsel %vm995, %v1107, -inf
        %1118 = vmax.xlane.f32.xlu0 %v1117
        %v1119 = vpop.xlane.xlu0 %1118
        %v1120 = vsub.f32 %v1104, %v1110
        %v1121 = vsub.f32 %v1105, %v1113
        %v1122 = vsub.f32 %v1106, %v1116
        %v1123 = vsub.f32 %v1107, %v1119
        %v1124 = vmul.f32 %v1120, 1.442695
        %v1125 = vpow.pop %v1124
        %v1126 = vmul.f32 %v1121, 1.442695
        %v1127 = vpow.pop %v1126
        %v1128 = vmul.f32 %v1122, 1.442695
        %v1129 = vpow.pop %v1128
        %v1130 = vmul.f32 %v1123, 1.442695
        %v1131 = vpow.pop %v1130
        %v1132 = vsel %vm995, %v1125, 0.0
        %1133 = vadd.xlane.f32.xlu0 %v1132
        %v1134 = vpop.xlane.xlu0 %1133
        %v1135 = vsel %vm995, %v1127, 0.0
        %1136 = vadd.xlane.f32.xlu0 %v1135
        %v1137 = vpop.xlane.xlu0 %1136
        %v1138 = vsel %vm995, %v1129, 0.0
        %1139 = vadd.xlane.f32.xlu0 %v1138
        %v1140 = vpop.xlane.xlu0 %1139
        %v1141 = vsel %vm995, %v1131, 0.0
        %1142 = vadd.xlane.f32.xlu0 %v1141
        %v1143 = vpop.xlane.xlu0 %1142
        %v1144 = vrcp.pop %v1134
        %v1145 = vmul.f32 %v1134, %v1144
        %v1146 = vsub.f32 1.0, %v1145
        %v1147 = vmul.f32 %v1144, %v1146
        %v1148 = vadd.f32 %v1144, %v1147
        %vm1149 = vweird.f32 %v1134
        %vm1150 = vweird.f32 %v1144
        %vm1151 = vmor %vm1149, %vm1150
        %v1152 = vsel %vm1151, %v1144, %v1148
        %v1153 = vand.u32 2147483647, %v1134
        %vm1154 = vcmp.eq.f32.partialorder %v1153, 8.507059e+37
        %v1155 = vand.u32 %v1134, 2147483648
        %v1156 = vor.u32 1.1754944e-38, %v1155
        %v1157 = vsel %vm1154, %v1156, %v1152
        %v1158 = vmul.f32 %v1125, %v1157
        %v1159 = vrcp.pop %v1137
        %v1160 = vmul.f32 %v1137, %v1159
        %v1161 = vsub.f32 1.0, %v1160
        %v1162 = vmul.f32 %v1159, %v1161
        %v1163 = vadd.f32 %v1159, %v1162
        %vm1164 = vweird.f32 %v1137
        %vm1165 = vweird.f32 %v1159
        %vm1166 = vmor %vm1164, %vm1165
        %v1167 = vsel %vm1166, %v1159, %v1163
        %v1168 = vand.u32 2147483647, %v1137
        %vm1169 = vcmp.eq.f32.partialorder %v1168, 8.507059e+37
        %v1170 = vand.u32 %v1137, 2147483648
        %v1171 = vor.u32 1.1754944e-38, %v1170
        %v1172 = vsel %vm1169, %v1171, %v1167
        %v1173 = vmul.f32 %v1127, %v1172
        %v1174 = vrcp.pop %v1140
        %v1175 = vmul.f32 %v1140, %v1174
        %v1176 = vsub.f32 1.0, %v1175
        %v1177 = vmul.f32 %v1174, %v1176
        %v1178 = vadd.f32 %v1174, %v1177
        %vm1179 = vweird.f32 %v1140
        %vm1180 = vweird.f32 %v1174
        %vm1181 = vmor %vm1179, %vm1180
        %v1182 = vsel %vm1181, %v1174, %v1178
        %v1183 = vand.u32 2147483647, %v1140
        %vm1184 = vcmp.eq.f32.partialorder %v1183, 8.507059e+37
        %v1185 = vand.u32 %v1140, 2147483648
        %v1186 = vor.u32 1.1754944e-38, %v1185
        %v1187 = vsel %vm1184, %v1186, %v1182
        %v1188 = vmul.f32 %v1129, %v1187
        %v1189 = vrcp.pop %v1143
        %v1190 = vmul.f32 %v1143, %v1189
        %v1191 = vsub.f32 1.0, %v1190
        %v1192 = vmul.f32 %v1189, %v1191
        %v1193 = vadd.f32 %v1189, %v1192
        %vm1194 = vweird.f32 %v1143
        %vm1195 = vweird.f32 %v1189
        %vm1196 = vmor %vm1194, %vm1195
        %v1197 = vsel %vm1196, %v1189, %v1193
        %v1198 = vand.u32 2147483647, %v1143
        %vm1199 = vcmp.eq.f32.partialorder %v1198, 8.507059e+37
        %v1200 = vand.u32 %v1143, 2147483648
        %v1201 = vor.u32 1.1754944e-38, %v1200
        %v1202 = vsel %vm1199, %v1201, %v1197
        %v1203 = vmul.f32 %v1131, %v1202
        %v1205 = vsel %vm995, %v1158, 0
        %1207 = vmatpush.msra.mxu0 0.0
        %1208 = vmatpush.msra.mxu0 0.0
        %1209 = vmatpush.msra.mxu0 0.0
        %1210 = vmatpush.msra.mxu0 0.0
        %1211 = vmatpush.msra.mxu0 0.0
        %1212 = vmatpush.msra.mxu0 0.0
        %1213 = vmatpush.msra.mxu0 0.0
        %1214 = vmatpush.msra.mxu0 0.0
        %1215 = vmatpush.msra.mxu0 0.0
        %1216 = vmatpush.msra.mxu0 0.0
        %1217 = vmatpush.msra.mxu0 0.0
        %1218 = vmatpush.msra.mxu0 0.0
        %1219 = vmatpush.msra.mxu0 0.0
        %1220 = vmatpush.msra.mxu0 0.0
        %1221 = vmatpush.msra.mxu0 0.0
        %1222 = vmatpush.msra.mxu0 %v933
        %1223 = vmatmul.f32.gmra.mxu0 %v1205
        %v1224 = vpop.f32.mrf.mxu0
        %v1225 = vadd.f32 0.0, %v1224
        %1226 = vdwg.mxu0
        %v1228 = vsel %vm995, %v1173, 0
        %1230 = vmatpush.msra.mxu0 0.0
        %1231 = vmatpush.msra.mxu0 0.0
        %1232 = vmatpush.msra.mxu0 0.0
        %1233 = vmatpush.msra.mxu0 0.0
        %1234 = vmatpush.msra.mxu0 0.0
        %1235 = vmatpush.msra.mxu0 0.0
        %1236 = vmatpush.msra.mxu0 0.0
        %1237 = vmatpush.msra.mxu0 0.0
        %1238 = vmatpush.msra.mxu0 0.0
        %1239 = vmatpush.msra.mxu0 0.0
        %1240 = vmatpush.msra.mxu0 0.0
        %1241 = vmatpush.msra.mxu0 0.0
        %1242 = vmatpush.msra.mxu0 0.0
        %1243 = vmatpush.msra.mxu0 0.0
        %1244 = vmatpush.msra.mxu0 0.0
        %1245 = vmatpush.msra.mxu0 %v953
        %1246 = vmatmul.f32.gmra.mxu0 %v1228
        %v1247 = vpop.f32.mrf.mxu0
        %v1248 = vadd.f32 0.0, %v1247
        %1249 = vdwg.mxu0
        %v1251 = vsel %vm995, %v1188, 0
        %1253 = vmatpush.msra.mxu0 0.0
        %1254 = vmatpush.msra.mxu0 0.0
        %1255 = vmatpush.msra.mxu0 0.0
        %1256 = vmatpush.msra.mxu0 0.0
        %1257 = vmatpush.msra.mxu0 0.0
        %1258 = vmatpush.msra.mxu0 0.0
        %1259 = vmatpush.msra.mxu0 0.0
        %1260 = vmatpush.msra.mxu0 0.0
        %1261 = vmatpush.msra.mxu0 0.0
        %1262 = vmatpush.msra.mxu0 0.0
        %1263 = vmatpush.msra.mxu0 0.0
        %1264 = vmatpush.msra.mxu0 0.0
        %1265 = vmatpush.msra.mxu0 0.0
        %1266 = vmatpush.msra.mxu0 0.0
        %1267 = vmatpush.msra.mxu0 0.0
        %1268 = vmatpush.msra.mxu0 %v973
        %1269 = vmatmul.f32.gmra.mxu0 %v1251
        %v1270 = vpop.f32.mrf.mxu0
        %v1271 = vadd.f32 0.0, %v1270
        %1272 = vdwg.mxu0
        %v1274 = vsel %vm995, %v1203, 0
        %1276 = vmatpush.msra.mxu0 0.0
        %1277 = vmatpush.msra.mxu0 0.0
        %1278 = vmatpush.msra.mxu0 0.0
        %1279 = vmatpush.msra.mxu0 0.0
        %1280 = vmatpush.msra.mxu0 0.0
        %1281 = vmatpush.msra.mxu0 0.0
        %1282 = vmatpush.msra.mxu0 0.0
        %1283 = vmatpush.msra.mxu0 0.0
        %1284 = vmatpush.msra.mxu0 0.0
        %1285 = vmatpush.msra.mxu0 0.0
        %1286 = vmatpush.msra.mxu0 0.0
        %1287 = vmatpush.msra.mxu0 0.0
        %1288 = vmatpush.msra.mxu0 0.0
        %1289 = vmatpush.msra.mxu0 0.0
        %1290 = vmatpush.msra.mxu0 0.0
        %1291 = vmatpush.msra.mxu0 %v993
        %1292 = vmatmul.f32.gmra.mxu0 %v1274
        %v1293 = vpop.f32.mrf.mxu0
        %v1294 = vadd.f32 0.0, %v1293
        %1295 = vdwg.mxu0
        %v1297 = vsel %vm995, %v1225, 0
        %1299 = vmatpush.msra.mxu0 0.0
        %1300 = vmatpush.msra.mxu0 0.0
        %1301 = vmatpush.msra.mxu0 0.0
        %1302 = vmatpush.msra.mxu0 0.0
        %1303 = vmatpush.msra.mxu0 0.0
        %1304 = vmatpush.msra.mxu0 0.0
        %1305 = vmatpush.msra.mxu0 0.0
        %1306 = vmatpush.msra.mxu0 0.0
        %1307 = vmatpush.msra.mxu0 0.0
        %1308 = vmatpush.msra.mxu0 0.0
        %1309 = vmatpush.msra.mxu0 0.0
        %1310 = vmatpush.msra.mxu0 0.0
        %1311 = vmatpush.msra.mxu0 0.0
        %1312 = vmatpush.msra.mxu0 0.0
        %1313 = vmatpush.msra.mxu0 0.0
        %1314 = vmatpush.msra.mxu0 %v710
        %1315 = vmatmul.f32.gmra.mxu0 %v1297
        %v1316 = vpop.f32.mrf.mxu0
        %v1317 = vadd.f32 0.0, %v1316
        %1318 = vdwg.mxu0
        %v1320 = vsel %vm995, %v1248, 0
        %1322 = vmatpush.msra.mxu0 0.0
        %1323 = vmatpush.msra.mxu0 0.0
        %1324 = vmatpush.msra.mxu0 0.0
        %1325 = vmatpush.msra.mxu0 0.0
        %1326 = vmatpush.msra.mxu0 0.0
        %1327 = vmatpush.msra.mxu0 0.0
        %1328 = vmatpush.msra.mxu0 0.0
        %1329 = vmatpush.msra.mxu0 0.0
        %1330 = vmatpush.msra.mxu0 0.0
        %1331 = vmatpush.msra.mxu0 0.0
        %1332 = vmatpush.msra.mxu0 0.0
        %1333 = vmatpush.msra.mxu0 0.0
        %1334 = vmatpush.msra.mxu0 0.0
        %1335 = vmatpush.msra.mxu0 0.0
        %1336 = vmatpush.msra.mxu0 0.0
        %1337 = vmatpush.msra.mxu0 %v711
        %1338 = vmatmul.f32.gmra.mxu0 %v1320
        %v1339 = vpop.f32.mrf.mxu0
        %v1340 = vadd.f32 0.0, %v1339
        %1341 = vdwg.mxu0
        %v1343 = vsel %vm995, %v1271, 0
        %1345 = vmatpush.msra.mxu0 0.0
        %1346 = vmatpush.msra.mxu0 0.0
        %1347 = vmatpush.msra.mxu0 0.0
        %1348 = vmatpush.msra.mxu0 0.0
        %1349 = vmatpush.msra.mxu0 0.0
        %1350 = vmatpush.msra.mxu0 0.0
        %1351 = vmatpush.msra.mxu0 0.0
        %1352 = vmatpush.msra.mxu0 0.0
        %1353 = vmatpush.msra.mxu0 0.0
        %1354 = vmatpush.msra.mxu0 0.0
        %1355 = vmatpush.msra.mxu0 0.0
        %1356 = vmatpush.msra.mxu0 0.0
        %1357 = vmatpush.msra.mxu0 0.0
        %1358 = vmatpush.msra.mxu0 0.0
        %1359 = vmatpush.msra.mxu0 0.0
        %1360 = vmatpush.msra.mxu0 %v712
        %1361 = vmatmul.f32.gmra.mxu0 %v1343
        %v1362 = vpop.f32.mrf.mxu0
        %v1363 = vadd.f32 0.0, %v1362
        %1364 = vdwg.mxu0
        %v1366 = vsel %vm995, %v1294, 0
        %1368 = vmatpush.msra.mxu0 0.0
        %1369 = vmatpush.msra.mxu0 0.0
        %1370 = vmatpush.msra.mxu0 0.0
        %1371 = vmatpush.msra.mxu0 0.0
        %1372 = vmatpush.msra.mxu0 0.0
        %1373 = vmatpush.msra.mxu0 0.0
        %1374 = vmatpush.msra.mxu0 0.0
        %1375 = vmatpush.msra.mxu0 0.0
        %1376 = vmatpush.msra.mxu0 0.0
        %1377 = vmatpush.msra.mxu0 0.0
        %1378 = vmatpush.msra.mxu0 0.0
        %1379 = vmatpush.msra.mxu0 0.0
        %1380 = vmatpush.msra.mxu0 0.0
        %1381 = vmatpush.msra.mxu0 0.0
        %1382 = vmatpush.msra.mxu0 0.0
        %1383 = vmatpush.msra.mxu0 %v713
        %1384 = vmatmul.f32.gmra.mxu0 %v1366
        %v1385 = vpop.f32.mrf.mxu0
        %v1386 = vadd.f32 0.0, %v1385
        %1387 = vdwg.mxu0
        %v1388 = vsel %vm727, %v1317, 0.0
        %v1389 = vsel %vm727, %v1340, 0.0
        %v1390 = vadd.f32 %v1388, %v1389
        %v1391 = vsel %vm727, %v1363, 0.0
        %v1392 = vadd.f32 %v1390, %v1391
        %v1393 = vsel %vm727, %v1386, 0.0
        %v1394 = vadd.f32 %v1392, %v1393
        %v1396 = vperm.slane %v714, 0
        %v1398 = vadd.f32 %v1394, %v1396
        %v1399 = vadd.f32 %v642, %v1398
        %v1400 = vld [vmem:[%s10] sm:$0x1]
        %v1401 = vld [vmem:[%s11] sm:$0x1]
        %v1402 = vsel %vm727, %v1399, 0.0
        %1403 = vadd.xlane.f32.xlu0 %v1402
        %v1404 = vpop.xlane.xlu0 %1403
        %v1405 = vrcp.pop 32.0
        %v1406 = vmul.f32 32.0, %v1405
        %v1407 = vsub.f32 1.0, %v1406
        %v1408 = vmul.f32 %v1405, %v1407
        %v1409 = vadd.f32 %v1405, %v1408
        %vm1410 = vweird.f32 %v1405
        %v1411 = vsel %vm1410, %v1405, %v1409
        %v1412 = vmul.f32 %v1404, %v1411
        %v1413 = vsub.f32 %v1399, %v1412
        %v1414 = vmul.f32 %v1413, %v1413
        %v1415 = vsel %vm727, %v1414, 0.0
        %1416 = vadd.xlane.f32.xlu0 %v1415
        %v1417 = vpop.xlane.xlu0 %1416
        %v1418 = vmul.f32 %v1417, %v1411
        %v1419 = vadd.f32 %v1418, 1e-05
        %v1420 = vrsqrt.pop %v1419
        %v1421 = vmul.f32 %v1420, %v1419
        %v1422 = vmul.f32 %v1421, %v1420
        %v1423 = vmul.f32 0.5, %v1422
        %v1424 = vsub.f32 1.5, %v1423
        %v1425 = vmul.f32 %v1420, %v1424
        %vm1426 = vweird.f32 %v1419
        %vm1427 = vweird.f32 %v1420
        %vm1428 = vmor %vm1426, %vm1427
        %v1429 = vsel %vm1428, %v1420, %v1425
        %v1430 = vmul.f32 %v1413, %v1429
        %v1432 = vperm.slane %v1400, 0
        %v1434 = vmul.f32 %v1430, %v1432
        %v1436 = vperm.slane %v1401, 0
        %v1438 = vadd.f32 %v1434, %v1436
        %s1439 = scalar_lea.vmem %s2, 128
        %v1440 = vld [vmem:[%s1439] sm:$0xff]
        %v1441 = vld [vmem:[%s1439 + $0x8] sm:$0xff]
        %v1442 = vld [vmem:[%s1439 + $0x10] sm:$0xff]
        %v1443 = vld [vmem:[%s1439 + $0x18] sm:$0xff]
        %v1444 = vld [vmem:[%s1439 + $0x20] sm:$0xff]
        %v1445 = vld [vmem:[%s1439 + $0x28] sm:$0xff]
        %v1446 = vld [vmem:[%s1439 + $0x30] sm:$0xff]
        %v1447 = vld [vmem:[%s1439 + $0x38] sm:$0xff]
        %v1448 = vld [vmem:[%s1439 + $0x40] sm:$0xff]
        %v1449 = vld [vmem:[%s1439 + $0x48] sm:$0xff]
        %v1450 = vld [vmem:[%s1439 + $0x50] sm:$0xff]
        %v1451 = vld [vmem:[%s1439 + $0x58] sm:$0xff]
        %v1452 = vld [vmem:[%s1439 + $0x60] sm:$0xff]
        %v1453 = vld [vmem:[%s1439 + $0x68] sm:$0xff]
        %v1454 = vld [vmem:[%s1439 + $0x70] sm:$0xff]
        %v1455 = vld [vmem:[%s1439 + $0x78] sm:$0xff]
        %s1456 = scalar_lea.vmem %s3, 128
        %v1457 = vld [vmem:[%s1456] sm:$0xff]
        %v1458 = vld [vmem:[%s1456 + $0x8] sm:$0xff]
        %v1459 = vld [vmem:[%s1456 + $0x10] sm:$0xff]
        %v1460 = vld [vmem:[%s1456 + $0x18] sm:$0xff]
        %v1461 = vld [vmem:[%s1456 + $0x20] sm:$0xff]
        %v1462 = vld [vmem:[%s1456 + $0x28] sm:$0xff]
        %v1463 = vld [vmem:[%s1456 + $0x30] sm:$0xff]
        %v1464 = vld [vmem:[%s1456 + $0x38] sm:$0xff]
        %v1465 = vld [vmem:[%s1456 + $0x40] sm:$0xff]
        %v1466 = vld [vmem:[%s1456 + $0x48] sm:$0xff]
        %v1467 = vld [vmem:[%s1456 + $0x50] sm:$0xff]
        %v1468 = vld [vmem:[%s1456 + $0x58] sm:$0xff]
        %v1469 = vld [vmem:[%s1456 + $0x60] sm:$0xff]
        %v1470 = vld [vmem:[%s1456 + $0x68] sm:$0xff]
        %v1471 = vld [vmem:[%s1456 + $0x70] sm:$0xff]
        %v1472 = vld [vmem:[%s1456 + $0x78] sm:$0xff]
        %s1473 = scalar_lea.vmem %s4, 128
        %v1474 = vld [vmem:[%s1473] sm:$0xff]
        %v1475 = vld [vmem:[%s1473 + $0x8] sm:$0xff]
        %v1476 = vld [vmem:[%s1473 + $0x10] sm:$0xff]
        %v1477 = vld [vmem:[%s1473 + $0x18] sm:$0xff]
        %v1478 = vld [vmem:[%s1473 + $0x20] sm:$0xff]
        %v1479 = vld [vmem:[%s1473 + $0x28] sm:$0xff]
        %v1480 = vld [vmem:[%s1473 + $0x30] sm:$0xff]
        %v1481 = vld [vmem:[%s1473 + $0x38] sm:$0xff]
        %v1482 = vld [vmem:[%s1473 + $0x40] sm:$0xff]
        %v1483 = vld [vmem:[%s1473 + $0x48] sm:$0xff]
        %v1484 = vld [vmem:[%s1473 + $0x50] sm:$0xff]
        %v1485 = vld [vmem:[%s1473 + $0x58] sm:$0xff]
        %v1486 = vld [vmem:[%s1473 + $0x60] sm:$0xff]
        %v1487 = vld [vmem:[%s1473 + $0x68] sm:$0xff]
        %v1488 = vld [vmem:[%s1473 + $0x70] sm:$0xff]
        %v1489 = vld [vmem:[%s1473 + $0x78] sm:$0xff]
        %s1490 = scalar_lea.vmem %s5, 4
        %v1491 = vld [vmem:[%s1490] sm:$0x1]
        %v1492 = vld [vmem:[%s1490 + $0x1] sm:$0x1]
        %v1493 = vld [vmem:[%s1490 + $0x2] sm:$0x1]
        %v1494 = vld [vmem:[%s1490 + $0x3] sm:$0x1]
        %s1495 = scalar_lea.vmem %s6, 4
        %v1496 = vld [vmem:[%s1495] sm:$0x1]
        %v1497 = vld [vmem:[%s1495 + $0x1] sm:$0x1]
        %v1498 = vld [vmem:[%s1495 + $0x2] sm:$0x1]
        %v1499 = vld [vmem:[%s1495 + $0x3] sm:$0x1]
        %s1500 = scalar_lea.vmem %s7, 4
        %v1501 = vld [vmem:[%s1500] sm:$0x1]
        %v1502 = vld [vmem:[%s1500 + $0x1] sm:$0x1]
        %v1503 = vld [vmem:[%s1500 + $0x2] sm:$0x1]
        %v1504 = vld [vmem:[%s1500 + $0x3] sm:$0x1]
        %s1505 = scalar_lea.vmem %s8, 32
        %v1506 = vld [vmem:[%s1505] sm:$0xff]
        %v1507 = vld [vmem:[%s1505 + $0x8] sm:$0xff]
        %v1508 = vld [vmem:[%s1505 + $0x10] sm:$0xff]
        %v1509 = vld [vmem:[%s1505 + $0x18] sm:$0xff]
        %s1510 = scalar_lea.vmem %s9, 1
        %v1511 = vld [vmem:[%s1510] sm:$0x1]
        %v1516 = vperm.slane %v1491, 0
        %v1517 = vperm.slane %v1492, 0
        %v1518 = vperm.slane %v1493, 0
        %v1519 = vperm.slane %v1494, 0
        %v1525 = vsel %vm727, %v1438, 0
        %1527 = vmatpush.msra.mxu0 0.0
        %1528 = vmatpush.msra.mxu0 0.0
        %1529 = vmatpush.msra.mxu0 0.0
        %1530 = vmatpush.msra.mxu0 0.0
        %1531 = vmatpush.msra.mxu0 0.0
        %1532 = vmatpush.msra.mxu0 0.0
        %1533 = vmatpush.msra.mxu0 0.0
        %1534 = vmatpush.msra.mxu0 0.0
        %1535 = vmatpush.msra.mxu0 0.0
        %1536 = vmatpush.msra.mxu0 0.0
        %1537 = vmatpush.msra.mxu0 0.0
        %1538 = vmatpush.msra.mxu0 0.0
        %1539 = vmatpush.msra.mxu0 %v1443
        %1540 = vmatpush.msra.mxu0 %v1442
        %1541 = vmatpush.msra.mxu0 %v1441
        %1542 = vmatpush.msra.mxu0 %v1440
        %1543 = vmatmul.f32.gmra.mxu0 %v1525
        %v1544 = vpop.f32.mrf.mxu0
        %v1545 = vadd.f32 %v1516, %v1544
        %1546 = vdwg.mxu0
        %1547 = vmatpush.msra.mxu0 0.0
        %1548 = vmatpush.msra.mxu0 0.0
        %1549 = vmatpush.msra.mxu0 0.0
        %1550 = vmatpush.msra.mxu0 0.0
        %1551 = vmatpush.msra.mxu0 0.0
        %1552 = vmatpush.msra.mxu0 0.0
        %1553 = vmatpush.msra.mxu0 0.0
        %1554 = vmatpush.msra.mxu0 0.0
        %1555 = vmatpush.msra.mxu0 0.0
        %1556 = vmatpush.msra.mxu0 0.0
        %1557 = vmatpush.msra.mxu0 0.0
        %1558 = vmatpush.msra.mxu0 0.0
        %1559 = vmatpush.msra.mxu0 %v1447
        %1560 = vmatpush.msra.mxu0 %v1446
        %1561 = vmatpush.msra.mxu0 %v1445
        %1562 = vmatpush.msra.mxu0 %v1444
        %1563 = vmatmul.f32.gmra.mxu0 %v1525
        %v1564 = vpop.f32.mrf.mxu0
        %v1565 = vadd.f32 %v1517, %v1564
        %1566 = vdwg.mxu0
        %1567 = vmatpush.msra.mxu0 0.0
        %1568 = vmatpush.msra.mxu0 0.0
        %1569 = vmatpush.msra.mxu0 0.0
        %1570 = vmatpush.msra.mxu0 0.0
        %1571 = vmatpush.msra.mxu0 0.0
        %1572 = vmatpush.msra.mxu0 0.0
        %1573 = vmatpush.msra.mxu0 0.0
        %1574 = vmatpush.msra.mxu0 0.0
        %1575 = vmatpush.msra.mxu0 0.0
        %1576 = vmatpush.msra.mxu0 0.0
        %1577 = vmatpush.msra.mxu0 0.0
        %1578 = vmatpush.msra.mxu0 0.0
        %1579 = vmatpush.msra.mxu0 %v1451
        %1580 = vmatpush.msra.mxu0 %v1450
        %1581 = vmatpush.msra.mxu0 %v1449
        %1582 = vmatpush.msra.mxu0 %v1448
        %1583 = vmatmul.f32.gmra.mxu0 %v1525
        %v1584 = vpop.f32.mrf.mxu0
        %v1585 = vadd.f32 %v1518, %v1584
        %1586 = vdwg.mxu0
        %1587 = vmatpush.msra.mxu0 0.0
        %1588 = vmatpush.msra.mxu0 0.0
        %1589 = vmatpush.msra.mxu0 0.0
        %1590 = vmatpush.msra.mxu0 0.0
        %1591 = vmatpush.msra.mxu0 0.0
        %1592 = vmatpush.msra.mxu0 0.0
        %1593 = vmatpush.msra.mxu0 0.0
        %1594 = vmatpush.msra.mxu0 0.0
        %1595 = vmatpush.msra.mxu0 0.0
        %1596 = vmatpush.msra.mxu0 0.0
        %1597 = vmatpush.msra.mxu0 0.0
        %1598 = vmatpush.msra.mxu0 0.0
        %1599 = vmatpush.msra.mxu0 %v1455
        %1600 = vmatpush.msra.mxu0 %v1454
        %1601 = vmatpush.msra.mxu0 %v1453
        %1602 = vmatpush.msra.mxu0 %v1452
        %1603 = vmatmul.f32.gmra.mxu0 %v1525
        %v1604 = vpop.f32.mrf.mxu0
        %v1605 = vadd.f32 %v1519, %v1604
        %1606 = vdwg.mxu0
        %v1611 = vperm.slane %v1496, 0
        %v1612 = vperm.slane %v1497, 0
        %v1613 = vperm.slane %v1498, 0
        %v1614 = vperm.slane %v1499, 0
        %v1620 = vsel %vm727, %v643, 0
        %1622 = vmatpush.msra.mxu0 0.0
        %1623 = vmatpush.msra.mxu0 0.0
        %1624 = vmatpush.msra.mxu0 0.0
        %1625 = vmatpush.msra.mxu0 0.0
        %1626 = vmatpush.msra.mxu0 0.0
        %1627 = vmatpush.msra.mxu0 0.0
        %1628 = vmatpush.msra.mxu0 0.0
        %1629 = vmatpush.msra.mxu0 0.0
        %1630 = vmatpush.msra.mxu0 0.0
        %1631 = vmatpush.msra.mxu0 0.0
        %1632 = vmatpush.msra.mxu0 0.0
        %1633 = vmatpush.msra.mxu0 0.0
        %1634 = vmatpush.msra.mxu0 %v1460
        %1635 = vmatpush.msra.mxu0 %v1459
        %1636 = vmatpush.msra.mxu0 %v1458
        %1637 = vmatpush.msra.mxu0 %v1457
        %1638 = vmatmul.f32.gmra.mxu0 %v1620
        %v1639 = vpop.f32.mrf.mxu0
        %v1640 = vadd.f32 %v1611, %v1639
        %1641 = vdwg.mxu0
        %1642 = vmatpush.msra.mxu0 0.0
        %1643 = vmatpush.msra.mxu0 0.0
        %1644 = vmatpush.msra.mxu0 0.0
        %1645 = vmatpush.msra.mxu0 0.0
        %1646 = vmatpush.msra.mxu0 0.0
        %1647 = vmatpush.msra.mxu0 0.0
        %1648 = vmatpush.msra.mxu0 0.0
        %1649 = vmatpush.msra.mxu0 0.0
        %1650 = vmatpush.msra.mxu0 0.0
        %1651 = vmatpush.msra.mxu0 0.0
        %1652 = vmatpush.msra.mxu0 0.0
        %1653 = vmatpush.msra.mxu0 0.0
        %1654 = vmatpush.msra.mxu0 %v1464
        %1655 = vmatpush.msra.mxu0 %v1463
        %1656 = vmatpush.msra.mxu0 %v1462
        %1657 = vmatpush.msra.mxu0 %v1461
        %1658 = vmatmul.f32.gmra.mxu0 %v1620
        %v1659 = vpop.f32.mrf.mxu0
        %v1660 = vadd.f32 %v1612, %v1659
        %1661 = vdwg.mxu0
        %1662 = vmatpush.msra.mxu0 0.0
        %1663 = vmatpush.msra.mxu0 0.0
        %1664 = vmatpush.msra.mxu0 0.0
        %1665 = vmatpush.msra.mxu0 0.0
        %1666 = vmatpush.msra.mxu0 0.0
        %1667 = vmatpush.msra.mxu0 0.0
        %1668 = vmatpush.msra.mxu0 0.0
        %1669 = vmatpush.msra.mxu0 0.0
        %1670 = vmatpush.msra.mxu0 0.0
        %1671 = vmatpush.msra.mxu0 0.0
        %1672 = vmatpush.msra.mxu0 0.0
        %1673 = vmatpush.msra.mxu0 0.0
        %1674 = vmatpush.msra.mxu0 %v1468
        %1675 = vmatpush.msra.mxu0 %v1467
        %1676 = vmatpush.msra.mxu0 %v1466
        %1677 = vmatpush.msra.mxu0 %v1465
        %1678 = vmatmul.f32.gmra.mxu0 %v1620
        %v1679 = vpop.f32.mrf.mxu0
        %v1680 = vadd.f32 %v1613, %v1679
        %1681 = vdwg.mxu0
        %1682 = vmatpush.msra.mxu0 0.0
        %1683 = vmatpush.msra.mxu0 0.0
        %1684 = vmatpush.msra.mxu0 0.0
        %1685 = vmatpush.msra.mxu0 0.0
        %1686 = vmatpush.msra.mxu0 0.0
        %1687 = vmatpush.msra.mxu0 0.0
        %1688 = vmatpush.msra.mxu0 0.0
        %1689 = vmatpush.msra.mxu0 0.0
        %1690 = vmatpush.msra.mxu0 0.0
        %1691 = vmatpush.msra.mxu0 0.0
        %1692 = vmatpush.msra.mxu0 0.0
        %1693 = vmatpush.msra.mxu0 0.0
        %1694 = vmatpush.msra.mxu0 %v1472
        %1695 = vmatpush.msra.mxu0 %v1471
        %1696 = vmatpush.msra.mxu0 %v1470
        %1697 = vmatpush.msra.mxu0 %v1469
        %1698 = vmatmul.f32.gmra.mxu0 %v1620
        %v1699 = vpop.f32.mrf.mxu0
        %v1700 = vadd.f32 %v1614, %v1699
        %1701 = vdwg.mxu0
        %v1706 = vperm.slane %v1501, 0
        %v1707 = vperm.slane %v1502, 0
        %v1708 = vperm.slane %v1503, 0
        %v1709 = vperm.slane %v1504, 0
        %1714 = vmatpush.msra.mxu0 0.0
        %1715 = vmatpush.msra.mxu0 0.0
        %1716 = vmatpush.msra.mxu0 0.0
        %1717 = vmatpush.msra.mxu0 0.0
        %1718 = vmatpush.msra.mxu0 0.0
        %1719 = vmatpush.msra.mxu0 0.0
        %1720 = vmatpush.msra.mxu0 0.0
        %1721 = vmatpush.msra.mxu0 0.0
        %1722 = vmatpush.msra.mxu0 0.0
        %1723 = vmatpush.msra.mxu0 0.0
        %1724 = vmatpush.msra.mxu0 0.0
        %1725 = vmatpush.msra.mxu0 0.0
        %1726 = vmatpush.msra.mxu0 %v1477
        %1727 = vmatpush.msra.mxu0 %v1476
        %1728 = vmatpush.msra.mxu0 %v1475
        %1729 = vmatpush.msra.mxu0 %v1474
        %1730 = vmatmul.f32.gmra.mxu0 %v1620
        %v1731 = vpop.f32.mrf.mxu0
        %v1732 = vadd.f32 %v1706, %v1731
        %1733 = vdwg.mxu0
        %1734 = vmatpush.msra.mxu0 0.0
        %1735 = vmatpush.msra.mxu0 0.0
        %1736 = vmatpush.msra.mxu0 0.0
        %1737 = vmatpush.msra.mxu0 0.0
        %1738 = vmatpush.msra.mxu0 0.0
        %1739 = vmatpush.msra.mxu0 0.0
        %1740 = vmatpush.msra.mxu0 0.0
        %1741 = vmatpush.msra.mxu0 0.0
        %1742 = vmatpush.msra.mxu0 0.0
        %1743 = vmatpush.msra.mxu0 0.0
        %1744 = vmatpush.msra.mxu0 0.0
        %1745 = vmatpush.msra.mxu0 0.0
        %1746 = vmatpush.msra.mxu0 %v1481
        %1747 = vmatpush.msra.mxu0 %v1480
        %1748 = vmatpush.msra.mxu0 %v1479
        %1749 = vmatpush.msra.mxu0 %v1478
        %1750 = vmatmul.f32.gmra.mxu0 %v1620
        %v1751 = vpop.f32.mrf.mxu0
        %v1752 = vadd.f32 %v1707, %v1751
        %1753 = vdwg.mxu0
        %1754 = vmatpush.msra.mxu0 0.0
        %1755 = vmatpush.msra.mxu0 0.0
        %1756 = vmatpush.msra.mxu0 0.0
        %1757 = vmatpush.msra.mxu0 0.0
        %1758 = vmatpush.msra.mxu0 0.0
        %1759 = vmatpush.msra.mxu0 0.0
        %1760 = vmatpush.msra.mxu0 0.0
        %1761 = vmatpush.msra.mxu0 0.0
        %1762 = vmatpush.msra.mxu0 0.0
        %1763 = vmatpush.msra.mxu0 0.0
        %1764 = vmatpush.msra.mxu0 0.0
        %1765 = vmatpush.msra.mxu0 0.0
        %1766 = vmatpush.msra.mxu0 %v1485
        %1767 = vmatpush.msra.mxu0 %v1484
        %1768 = vmatpush.msra.mxu0 %v1483
        %1769 = vmatpush.msra.mxu0 %v1482
        %1770 = vmatmul.f32.gmra.mxu0 %v1620
        %v1771 = vpop.f32.mrf.mxu0
        %v1772 = vadd.f32 %v1708, %v1771
        %1773 = vdwg.mxu0
        %1774 = vmatpush.msra.mxu0 0.0
        %1775 = vmatpush.msra.mxu0 0.0
        %1776 = vmatpush.msra.mxu0 0.0
        %1777 = vmatpush.msra.mxu0 0.0
        %1778 = vmatpush.msra.mxu0 0.0
        %1779 = vmatpush.msra.mxu0 0.0
        %1780 = vmatpush.msra.mxu0 0.0
        %1781 = vmatpush.msra.mxu0 0.0
        %1782 = vmatpush.msra.mxu0 0.0
        %1783 = vmatpush.msra.mxu0 0.0
        %1784 = vmatpush.msra.mxu0 0.0
        %1785 = vmatpush.msra.mxu0 0.0
        %1786 = vmatpush.msra.mxu0 %v1489
        %1787 = vmatpush.msra.mxu0 %v1488
        %1788 = vmatpush.msra.mxu0 %v1487
        %1789 = vmatpush.msra.mxu0 %v1486
        %1790 = vmatmul.f32.gmra.mxu0 %v1620
        %v1791 = vpop.f32.mrf.mxu0
        %v1792 = vadd.f32 %v1709, %v1791
        %1793 = vdwg.mxu0
        %v1795 = vsel %vm995, %v1545, 0
        %v1798 = vsel %vm995, %v1640, 0
        %1800 = vmatpush.xpose.msra.mxu0 0.0
        %1801 = vmatpush.xpose.msra.mxu0 0.0
        %1802 = vmatpush.xpose.msra.mxu0 0.0
        %1803 = vmatpush.xpose.msra.mxu0 0.0
        %1804 = vmatpush.xpose.msra.mxu0 0.0
        %1805 = vmatpush.xpose.msra.mxu0 0.0
        %1806 = vmatpush.xpose.msra.mxu0 0.0
        %1807 = vmatpush.xpose.msra.mxu0 0.0
        %1808 = vmatpush.xpose.msra.mxu0 0.0
        %1809 = vmatpush.xpose.msra.mxu0 0.0
        %1810 = vmatpush.xpose.msra.mxu0 0.0
        %1811 = vmatpush.xpose.msra.mxu0 0.0
        %1812 = vmatpush.xpose.msra.mxu0 0.0
        %1813 = vmatpush.xpose.msra.mxu0 0.0
        %1814 = vmatpush.xpose.msra.mxu0 0.0
        %1815 = vmatpush.xpose.msra.mxu0 %v1798
        %1816 = vmatmul.f32.gmra.mxu0 %v1795
        %v1817 = vpop.f32.mrf.mxu0
        %v1818 = vadd.f32 0.0, %v1817
        %1819 = vdwg.mxu0
        %v1821 = vsel %vm995, %v1565, 0
        %v1824 = vsel %vm995, %v1660, 0
        %1826 = vmatpush.xpose.msra.mxu0 0.0
        %1827 = vmatpush.xpose.msra.mxu0 0.0
        %1828 = vmatpush.xpose.msra.mxu0 0.0
        %1829 = vmatpush.xpose.msra.mxu0 0.0
        %1830 = vmatpush.xpose.msra.mxu0 0.0
        %1831 = vmatpush.xpose.msra.mxu0 0.0
        %1832 = vmatpush.xpose.msra.mxu0 0.0
        %1833 = vmatpush.xpose.msra.mxu0 0.0
        %1834 = vmatpush.xpose.msra.mxu0 0.0
        %1835 = vmatpush.xpose.msra.mxu0 0.0
        %1836 = vmatpush.xpose.msra.mxu0 0.0
        %1837 = vmatpush.xpose.msra.mxu0 0.0
        %1838 = vmatpush.xpose.msra.mxu0 0.0
        %1839 = vmatpush.xpose.msra.mxu0 0.0
        %1840 = vmatpush.xpose.msra.mxu0 0.0
        %1841 = vmatpush.xpose.msra.mxu0 %v1824
        %1842 = vmatmul.f32.gmra.mxu0 %v1821
        %v1843 = vpop.f32.mrf.mxu0
        %v1844 = vadd.f32 0.0, %v1843
        %1845 = vdwg.mxu0
        %v1847 = vsel %vm995, %v1585, 0
        %v1850 = vsel %vm995, %v1680, 0
        %1852 = vmatpush.xpose.msra.mxu0 0.0
        %1853 = vmatpush.xpose.msra.mxu0 0.0
        %1854 = vmatpush.xpose.msra.mxu0 0.0
        %1855 = vmatpush.xpose.msra.mxu0 0.0
        %1856 = vmatpush.xpose.msra.mxu0 0.0
        %1857 = vmatpush.xpose.msra.mxu0 0.0
        %1858 = vmatpush.xpose.msra.mxu0 0.0
        %1859 = vmatpush.xpose.msra.mxu0 0.0
        %1860 = vmatpush.xpose.msra.mxu0 0.0
        %1861 = vmatpush.xpose.msra.mxu0 0.0
        %1862 = vmatpush.xpose.msra.mxu0 0.0
        %1863 = vmatpush.xpose.msra.mxu0 0.0
        %1864 = vmatpush.xpose.msra.mxu0 0.0
        %1865 = vmatpush.xpose.msra.mxu0 0.0
        %1866 = vmatpush.xpose.msra.mxu0 0.0
        %1867 = vmatpush.xpose.msra.mxu0 %v1850
        %1868 = vmatmul.f32.gmra.mxu0 %v1847
        %v1869 = vpop.f32.mrf.mxu0
        %v1870 = vadd.f32 0.0, %v1869
        %1871 = vdwg.mxu0
        %v1873 = vsel %vm995, %v1605, 0
        %v1876 = vsel %vm995, %v1700, 0
        %1878 = vmatpush.xpose.msra.mxu0 0.0
        %1879 = vmatpush.xpose.msra.mxu0 0.0
        %1880 = vmatpush.xpose.msra.mxu0 0.0
        %1881 = vmatpush.xpose.msra.mxu0 0.0
        %1882 = vmatpush.xpose.msra.mxu0 0.0
        %1883 = vmatpush.xpose.msra.mxu0 0.0
        %1884 = vmatpush.xpose.msra.mxu0 0.0
        %1885 = vmatpush.xpose.msra.mxu0 0.0
        %1886 = vmatpush.xpose.msra.mxu0 0.0
        %1887 = vmatpush.xpose.msra.mxu0 0.0
        %1888 = vmatpush.xpose.msra.mxu0 0.0
        %1889 = vmatpush.xpose.msra.mxu0 0.0
        %1890 = vmatpush.xpose.msra.mxu0 0.0
        %1891 = vmatpush.xpose.msra.mxu0 0.0
        %1892 = vmatpush.xpose.msra.mxu0 0.0
        %1893 = vmatpush.xpose.msra.mxu0 %v1876
        %1894 = vmatmul.f32.gmra.mxu0 %v1873
        %v1895 = vpop.f32.mrf.mxu0
        %v1896 = vadd.f32 0.0, %v1895
        %1897 = vdwg.mxu0
        %v1898 = vmul.f32 %v1818, 0.35355338
        %v1899 = vmul.f32 %v1844, 0.35355338
        %v1900 = vmul.f32 %v1870, 0.35355338
        %v1901 = vmul.f32 %v1896, 0.35355338
        %v1902 = vsel %vm995, %v1898, -inf
        %1903 = vmax.xlane.f32.xlu0 %v1902
        %v1904 = vpop.xlane.xlu0 %1903
        %v1905 = vsel %vm995, %v1899, -inf
        %1906 = vmax.xlane.f32.xlu0 %v1905
        %v1907 = vpop.xlane.xlu0 %1906
        %v1908 = vsel %vm995, %v1900, -inf
        %1909 = vmax.xlane.f32.xlu0 %v1908
        %v1910 = vpop.xlane.xlu0 %1909
        %v1911 = vsel %vm995, %v1901, -inf
        %1912 = vmax.xlane.f32.xlu0 %v1911
        %v1913 = vpop.xlane.xlu0 %1912
        %v1914 = vsub.f32 %v1898, %v1904
        %v1915 = vsub.f32 %v1899, %v1907
        %v1916 = vsub.f32 %v1900, %v1910
        %v1917 = vsub.f32 %v1901, %v1913
        %v1918 = vmul.f32 %v1914, 1.442695
        %v1919 = vpow.pop %v1918
        %v1920 = vmul.f32 %v1915, 1.442695
        %v1921 = vpow.pop %v1920
        %v1922 = vmul.f32 %v1916, 1.442695
        %v1923 = vpow.pop %v1922
        %v1924 = vmul.f32 %v1917, 1.442695
        %v1925 = vpow.pop %v1924
        %v1926 = vsel %vm995, %v1919, 0.0
        %1927 = vadd.xlane.f32.xlu0 %v1926
        %v1928 = vpop.xlane.xlu0 %1927
        %v1929 = vsel %vm995, %v1921, 0.0
        %1930 = vadd.xlane.f32.xlu0 %v1929
        %v1931 = vpop.xlane.xlu0 %1930
        %v1932 = vsel %vm995, %v1923, 0.0
        %1933 = vadd.xlane.f32.xlu0 %v1932
        %v1934 = vpop.xlane.xlu0 %1933
        %v1935 = vsel %vm995, %v1925, 0.0
        %1936 = vadd.xlane.f32.xlu0 %v1935
        %v1937 = vpop.xlane.xlu0 %1936
        %v1938 = vrcp.pop %v1928
        %v1939 = vmul.f32 %v1928, %v1938
        %v1940 = vsub.f32 1.0, %v1939
        %v1941 = vmul.f32 %v1938, %v1940
        %v1942 = vadd.f32 %v1938, %v1941
        %vm1943 = vweird.f32 %v1928
        %vm1944 = vweird.f32 %v1938
        %vm1945 = vmor %vm1943, %vm1944
        %v1946 = vsel %vm1945, %v1938, %v1942
        %v1947 = vand.u32 2147483647, %v1928
        %vm1948 = vcmp.eq.f32.partialorder %v1947, 8.507059e+37
        %v1949 = vand.u32 %v1928, 2147483648
        %v1950 = vor.u32 1.1754944e-38, %v1949
        %v1951 = vsel %vm1948, %v1950, %v1946
        %v1952 = vmul.f32 %v1919, %v1951
        %v1953 = vrcp.pop %v1931
        %v1954 = vmul.f32 %v1931, %v1953
        %v1955 = vsub.f32 1.0, %v1954
        %v1956 = vmul.f32 %v1953, %v1955
        %v1957 = vadd.f32 %v1953, %v1956
        %vm1958 = vweird.f32 %v1931
        %vm1959 = vweird.f32 %v1953
        %vm1960 = vmor %vm1958, %vm1959
        %v1961 = vsel %vm1960, %v1953, %v1957
        %v1962 = vand.u32 2147483647, %v1931
        %vm1963 = vcmp.eq.f32.partialorder %v1962, 8.507059e+37
        %v1964 = vand.u32 %v1931, 2147483648
        %v1965 = vor.u32 1.1754944e-38, %v1964
        %v1966 = vsel %vm1963, %v1965, %v1961
        %v1967 = vmul.f32 %v1921, %v1966
        %v1968 = vrcp.pop %v1934
        %v1969 = vmul.f32 %v1934, %v1968
        %v1970 = vsub.f32 1.0, %v1969
        %v1971 = vmul.f32 %v1968, %v1970
        %v1972 = vadd.f32 %v1968, %v1971
        %vm1973 = vweird.f32 %v1934
        %vm1974 = vweird.f32 %v1968
        %vm1975 = vmor %vm1973, %vm1974
        %v1976 = vsel %vm1975, %v1968, %v1972
        %v1977 = vand.u32 2147483647, %v1934
        %vm1978 = vcmp.eq.f32.partialorder %v1977, 8.507059e+37
        %v1979 = vand.u32 %v1934, 2147483648
        %v1980 = vor.u32 1.1754944e-38, %v1979
        %v1981 = vsel %vm1978, %v1980, %v1976
        %v1982 = vmul.f32 %v1923, %v1981
        %v1983 = vrcp.pop %v1937
        %v1984 = vmul.f32 %v1937, %v1983
        %v1985 = vsub.f32 1.0, %v1984
        %v1986 = vmul.f32 %v1983, %v1985
        %v1987 = vadd.f32 %v1983, %v1986
        %vm1988 = vweird.f32 %v1937
        %vm1989 = vweird.f32 %v1983
        %vm1990 = vmor %vm1988, %vm1989
        %v1991 = vsel %vm1990, %v1983, %v1987
        %v1992 = vand.u32 2147483647, %v1937
        %vm1993 = vcmp.eq.f32.partialorder %v1992, 8.507059e+37
        %v1994 = vand.u32 %v1937, 2147483648
        %v1995 = vor.u32 1.1754944e-38, %v1994
        %v1996 = vsel %vm1993, %v1995, %v1991
        %v1997 = vmul.f32 %v1925, %v1996
        %v1999 = vsel %vm995, %v1952, 0
        %2001 = vmatpush.msra.mxu0 0.0
        %2002 = vmatpush.msra.mxu0 0.0
        %2003 = vmatpush.msra.mxu0 0.0
        %2004 = vmatpush.msra.mxu0 0.0
        %2005 = vmatpush.msra.mxu0 0.0
        %2006 = vmatpush.msra.mxu0 0.0
        %2007 = vmatpush.msra.mxu0 0.0
        %2008 = vmatpush.msra.mxu0 0.0
        %2009 = vmatpush.msra.mxu0 0.0
        %2010 = vmatpush.msra.mxu0 0.0
        %2011 = vmatpush.msra.mxu0 0.0
        %2012 = vmatpush.msra.mxu0 0.0
        %2013 = vmatpush.msra.mxu0 0.0
        %2014 = vmatpush.msra.mxu0 0.0
        %2015 = vmatpush.msra.mxu0 0.0
        %2016 = vmatpush.msra.mxu0 %v1732
        %2017 = vmatmul.f32.gmra.mxu0 %v1999
        %v2018 = vpop.f32.mrf.mxu0
        %v2019 = vadd.f32 0.0, %v2018
        %2020 = vdwg.mxu0
        %v2022 = vsel %vm995, %v1967, 0
        %2024 = vmatpush.msra.mxu0 0.0
        %2025 = vmatpush.msra.mxu0 0.0
        %2026 = vmatpush.msra.mxu0 0.0
        %2027 = vmatpush.msra.mxu0 0.0
        %2028 = vmatpush.msra.mxu0 0.0
        %2029 = vmatpush.msra.mxu0 0.0
        %2030 = vmatpush.msra.mxu0 0.0
        %2031 = vmatpush.msra.mxu0 0.0
        %2032 = vmatpush.msra.mxu0 0.0
        %2033 = vmatpush.msra.mxu0 0.0
        %2034 = vmatpush.msra.mxu0 0.0
        %2035 = vmatpush.msra.mxu0 0.0
        %2036 = vmatpush.msra.mxu0 0.0
        %2037 = vmatpush.msra.mxu0 0.0
        %2038 = vmatpush.msra.mxu0 0.0
        %2039 = vmatpush.msra.mxu0 %v1752
        %2040 = vmatmul.f32.gmra.mxu0 %v2022
        %v2041 = vpop.f32.mrf.mxu0
        %v2042 = vadd.f32 0.0, %v2041
        %2043 = vdwg.mxu0
        %v2045 = vsel %vm995, %v1982, 0
        %2047 = vmatpush.msra.mxu0 0.0
        %2048 = vmatpush.msra.mxu0 0.0
        %2049 = vmatpush.msra.mxu0 0.0
        %2050 = vmatpush.msra.mxu0 0.0
        %2051 = vmatpush.msra.mxu0 0.0
        %2052 = vmatpush.msra.mxu0 0.0
        %2053 = vmatpush.msra.mxu0 0.0
        %2054 = vmatpush.msra.mxu0 0.0
        %2055 = vmatpush.msra.mxu0 0.0
        %2056 = vmatpush.msra.mxu0 0.0
        %2057 = vmatpush.msra.mxu0 0.0
        %2058 = vmatpush.msra.mxu0 0.0
        %2059 = vmatpush.msra.mxu0 0.0
        %2060 = vmatpush.msra.mxu0 0.0
        %2061 = vmatpush.msra.mxu0 0.0
        %2062 = vmatpush.msra.mxu0 %v1772
        %2063 = vmatmul.f32.gmra.mxu0 %v2045
        %v2064 = vpop.f32.mrf.mxu0
        %v2065 = vadd.f32 0.0, %v2064
        %2066 = vdwg.mxu0
        %v2068 = vsel %vm995, %v1997, 0
        %2070 = vmatpush.msra.mxu0 0.0
        %2071 = vmatpush.msra.mxu0 0.0
        %2072 = vmatpush.msra.mxu0 0.0
        %2073 = vmatpush.msra.mxu0 0.0
        %2074 = vmatpush.msra.mxu0 0.0
        %2075 = vmatpush.msra.mxu0 0.0
        %2076 = vmatpush.msra.mxu0 0.0
        %2077 = vmatpush.msra.mxu0 0.0
        %2078 = vmatpush.msra.mxu0 0.0
        %2079 = vmatpush.msra.mxu0 0.0
        %2080 = vmatpush.msra.mxu0 0.0
        %2081 = vmatpush.msra.mxu0 0.0
        %2082 = vmatpush.msra.mxu0 0.0
        %2083 = vmatpush.msra.mxu0 0.0
        %2084 = vmatpush.msra.mxu0 0.0
        %2085 = vmatpush.msra.mxu0 %v1792
        %2086 = vmatmul.f32.gmra.mxu0 %v2068
        %v2087 = vpop.f32.mrf.mxu0
        %v2088 = vadd.f32 0.0, %v2087
        %2089 = vdwg.mxu0
        %v2091 = vsel %vm995, %v2019, 0
        %2093 = vmatpush.msra.mxu0 0.0
        %2094 = vmatpush.msra.mxu0 0.0
        %2095 = vmatpush.msra.mxu0 0.0
        %2096 = vmatpush.msra.mxu0 0.0
        %2097 = vmatpush.msra.mxu0 0.0
        %2098 = vmatpush.msra.mxu0 0.0
        %2099 = vmatpush.msra.mxu0 0.0
        %2100 = vmatpush.msra.mxu0 0.0
        %2101 = vmatpush.msra.mxu0 0.0
        %2102 = vmatpush.msra.mxu0 0.0
        %2103 = vmatpush.msra.mxu0 0.0
        %2104 = vmatpush.msra.mxu0 0.0
        %2105 = vmatpush.msra.mxu0 0.0
        %2106 = vmatpush.msra.mxu0 0.0
        %2107 = vmatpush.msra.mxu0 0.0
        %2108 = vmatpush.msra.mxu0 %v1506
        %2109 = vmatmul.f32.gmra.mxu0 %v2091
        %v2110 = vpop.f32.mrf.mxu0
        %v2111 = vadd.f32 0.0, %v2110
        %2112 = vdwg.mxu0
        %v2114 = vsel %vm995, %v2042, 0
        %2116 = vmatpush.msra.mxu0 0.0
        %2117 = vmatpush.msra.mxu0 0.0
        %2118 = vmatpush.msra.mxu0 0.0
        %2119 = vmatpush.msra.mxu0 0.0
        %2120 = vmatpush.msra.mxu0 0.0
        %2121 = vmatpush.msra.mxu0 0.0
        %2122 = vmatpush.msra.mxu0 0.0
        %2123 = vmatpush.msra.mxu0 0.0
        %2124 = vmatpush.msra.mxu0 0.0
        %2125 = vmatpush.msra.mxu0 0.0
        %2126 = vmatpush.msra.mxu0 0.0
        %2127 = vmatpush.msra.mxu0 0.0
        %2128 = vmatpush.msra.mxu0 0.0
        %2129 = vmatpush.msra.mxu0 0.0
        %2130 = vmatpush.msra.mxu0 0.0
        %2131 = vmatpush.msra.mxu0 %v1507
        %2132 = vmatmul.f32.gmra.mxu0 %v2114
        %v2133 = vpop.f32.mrf.mxu0
        %v2134 = vadd.f32 0.0, %v2133
        %2135 = vdwg.mxu0
        %v2137 = vsel %vm995, %v2065, 0
        %2139 = vmatpush.msra.mxu0 0.0
        %2140 = vmatpush.msra.mxu0 0.0
        %2141 = vmatpush.msra.mxu0 0.0
        %2142 = vmatpush.msra.mxu0 0.0
        %2143 = vmatpush.msra.mxu0 0.0
        %2144 = vmatpush.msra.mxu0 0.0
        %2145 = vmatpush.msra.mxu0 0.0
        %2146 = vmatpush.msra.mxu0 0.0
        %2147 = vmatpush.msra.mxu0 0.0
        %2148 = vmatpush.msra.mxu0 0.0
        %2149 = vmatpush.msra.mxu0 0.0
        %2150 = vmatpush.msra.mxu0 0.0
        %2151 = vmatpush.msra.mxu0 0.0
        %2152 = vmatpush.msra.mxu0 0.0
        %2153 = vmatpush.msra.mxu0 0.0
        %2154 = vmatpush.msra.mxu0 %v1508
        %2155 = vmatmul.f32.gmra.mxu0 %v2137
        %v2156 = vpop.f32.mrf.mxu0
        %v2157 = vadd.f32 0.0, %v2156
        %2158 = vdwg.mxu0
        %v2160 = vsel %vm995, %v2088, 0
        %2162 = vmatpush.msra.mxu0 0.0
        %2163 = vmatpush.msra.mxu0 0.0
        %2164 = vmatpush.msra.mxu0 0.0
        %2165 = vmatpush.msra.mxu0 0.0
        %2166 = vmatpush.msra.mxu0 0.0
        %2167 = vmatpush.msra.mxu0 0.0
        %2168 = vmatpush.msra.mxu0 0.0
        %2169 = vmatpush.msra.mxu0 0.0
        %2170 = vmatpush.msra.mxu0 0.0
        %2171 = vmatpush.msra.mxu0 0.0
        %2172 = vmatpush.msra.mxu0 0.0
        %2173 = vmatpush.msra.mxu0 0.0
        %2174 = vmatpush.msra.mxu0 0.0
        %2175 = vmatpush.msra.mxu0 0.0
        %2176 = vmatpush.msra.mxu0 0.0
        %2177 = vmatpush.msra.mxu0 %v1509
        %2178 = vmatmul.f32.gmra.mxu0 %v2160
        %v2179 = vpop.f32.mrf.mxu0
        %v2180 = vadd.f32 0.0, %v2179
        %2181 = vdwg.mxu0
        %v2182 = vsel %vm727, %v2111, 0.0
        %v2183 = vsel %vm727, %v2134, 0.0
        %v2184 = vadd.f32 %v2182, %v2183
        %v2185 = vsel %vm727, %v2157, 0.0
        %v2186 = vadd.f32 %v2184, %v2185
        %v2187 = vsel %vm727, %v2180, 0.0
        %v2188 = vadd.f32 %v2186, %v2187
        %v2190 = vperm.slane %v1511, 0
        %v2192 = vadd.f32 %v2188, %v2190
        %v2193 = vadd.f32 %v1438, %v2192
        %s2194 = scalar_lea.vmem %s10, 1
        %v2195 = vld [vmem:[%s2194] sm:$0x1]
        %s2196 = scalar_lea.vmem %s11, 1
        %v2197 = vld [vmem:[%s2196] sm:$0x1]
        %v2198 = vsel %vm727, %v2193, 0.0
        %2199 = vadd.xlane.f32.xlu0 %v2198
        %v2200 = vpop.xlane.xlu0 %2199
        %v2201 = vmul.f32 %v2200, %v1411
        %v2202 = vsub.f32 %v2193, %v2201
        %v2203 = vmul.f32 %v2202, %v2202
        %v2204 = vsel %vm727, %v2203, 0.0
        %2205 = vadd.xlane.f32.xlu0 %v2204
        %v2206 = vpop.xlane.xlu0 %2205
        %v2207 = vmul.f32 %v2206, %v1411
        %v2208 = vadd.f32 %v2207, 1e-05
        %v2209 = vrsqrt.pop %v2208
        %v2210 = vmul.f32 %v2209, %v2208
        %v2211 = vmul.f32 %v2210, %v2209
        %v2212 = vmul.f32 0.5, %v2211
        %v2213 = vsub.f32 1.5, %v2212
        %v2214 = vmul.f32 %v2209, %v2213
        %vm2215 = vweird.f32 %v2208
        %vm2216 = vweird.f32 %v2209
        %vm2217 = vmor %vm2215, %vm2216
        %v2218 = vsel %vm2217, %v2209, %v2214
        %v2219 = vmul.f32 %v2202, %v2218
        %v2221 = vperm.slane %v2195, 0
        %v2223 = vmul.f32 %v2219, %v2221
        %v2225 = vperm.slane %v2197, 0
        %v2227 = vadd.f32 %v2223, %v2225
        %v2228 = vld [vmem:[%s12] sm:$0xff]
        %v2229 = vld [vmem:[%s12 + $0x8] sm:$0xff]
        %v2230 = vld [vmem:[%s12 + $0x10] sm:$0xff]
        %v2231 = vld [vmem:[%s12 + $0x18] sm:$0xff]
        %v2232 = vld [vmem:[%s13] sm:$0x1]
        %v2234 = vperm.slane %v2232, 0
        %v2237 = vsel %vm727, %v2227, 0
        %2239 = vmatpush.msra.mxu0 0.0
        %2240 = vmatpush.msra.mxu0 0.0
        %2241 = vmatpush.msra.mxu0 0.0
        %2242 = vmatpush.msra.mxu0 0.0
        %2243 = vmatpush.msra.mxu0 0.0
        %2244 = vmatpush.msra.mxu0 0.0
        %2245 = vmatpush.msra.mxu0 0.0
        %2246 = vmatpush.msra.mxu0 0.0
        %2247 = vmatpush.msra.mxu0 0.0
        %2248 = vmatpush.msra.mxu0 0.0
        %2249 = vmatpush.msra.mxu0 0.0
        %2250 = vmatpush.msra.mxu0 0.0
        %2251 = vmatpush.msra.mxu0 %v2231
        %2252 = vmatpush.msra.mxu0 %v2230
        %2253 = vmatpush.msra.mxu0 %v2229
        %2254 = vmatpush.msra.mxu0 %v2228
        %2255 = vmatmul.f32.gmra.mxu0 %v2237
        %v2256 = vpop.f32.mrf.mxu0
        %v2257 = vadd.f32 %v2234, %v2256
        %2258 = vdwg.mxu0
        %v2259 = vmax.f32 %v2257, 0.0
        %v2260 = vld [vmem:[%s14] sm:$0xff]
        %v2261 = vld [vmem:[%s14 + $0x8] sm:$0xff]
        %v2262 = vld [vmem:[%s14 + $0x10] sm:$0xff]
        %v2263 = vld [vmem:[%s14 + $0x18] sm:$0xff]
        %v2264 = vld [vmem:[%s14 + $0x20] sm:$0xff]
        %v2265 = vld [vmem:[%s14 + $0x28] sm:$0xff]
        %v2266 = vld [vmem:[%s14 + $0x30] sm:$0xff]
        %v2267 = vld [vmem:[%s14 + $0x38] sm:$0xff]
        %v2268 = vld [vmem:[%s15] sm:$0x1]
        %v2270 = vperm.slane %v2268, 0
        %vm2272 = vcmask 523264
        %v2274 = vsel %vm2272, %v2259, 0
        %2276 = vmatpush.msra.mxu0 0.0
        %2277 = vmatpush.msra.mxu0 0.0
        %2278 = vmatpush.msra.mxu0 0.0
        %2279 = vmatpush.msra.mxu0 0.0
        %2280 = vmatpush.msra.mxu0 0.0
        %2281 = vmatpush.msra.mxu0 0.0
        %2282 = vmatpush.msra.mxu0 0.0
        %2283 = vmatpush.msra.mxu0 0.0
        %2284 = vmatpush.msra.mxu0 %v2267
        %2285 = vmatpush.msra.mxu0 %v2266
        %2286 = vmatpush.msra.mxu0 %v2265
        %2287 = vmatpush.msra.mxu0 %v2264
        %2288 = vmatpush.msra.mxu0 %v2263
        %2289 = vmatpush.msra.mxu0 %v2262
        %2290 = vmatpush.msra.mxu0 %v2261
        %2291 = vmatpush.msra.mxu0 %v2260
        %2292 = vmatmul.f32.gmra.mxu0 %v2274
        %v2293 = vpop.f32.mrf.mxu0
        %v2294 = vadd.f32 %v2270, %v2293
        %2295 = vdwg.mxu0
        %v2296 = vadd.f32 %v2227, %v2294
        %v2297 = vld [vmem:[%s16] sm:$0x1]
        %v2298 = vld [vmem:[%s17] sm:$0x1]
        %v2299 = vsel %vm727, %v2296, 0.0
        %2300 = vadd.xlane.f32.xlu0 %v2299
        %v2301 = vpop.xlane.xlu0 %2300
        %v2302 = vmul.f32 %v2301, %v1411
        %v2303 = vsub.f32 %v2296, %v2302
        %v2304 = vmul.f32 %v2303, %v2303
        %v2305 = vsel %vm727, %v2304, 0.0
        %2306 = vadd.xlane.f32.xlu0 %v2305
        %v2307 = vpop.xlane.xlu0 %2306
        %v2308 = vmul.f32 %v2307, %v1411
        %v2309 = vadd.f32 %v2308, 1e-05
        %v2310 = vrsqrt.pop %v2309
        %v2311 = vmul.f32 %v2310, %v2309
        %v2312 = vmul.f32 %v2311, %v2310
        %v2313 = vmul.f32 0.5, %v2312
        %v2314 = vsub.f32 1.5, %v2313
        %v2315 = vmul.f32 %v2310, %v2314
        %vm2316 = vweird.f32 %v2309
        %vm2317 = vweird.f32 %v2310
        %vm2318 = vmor %vm2316, %vm2317
        %v2319 = vsel %vm2318, %v2310, %v2315
        %v2320 = vmul.f32 %v2303, %v2319
        %v2322 = vperm.slane %v2297, 0
        %v2324 = vmul.f32 %v2320, %v2322
        %v2326 = vperm.slane %v2298, 0
        %v2328 = vadd.f32 %v2324, %v2326
        %s2329 = scalar_lea.vmem %s2, 256
        %v2330 = vld [vmem:[%s2329] sm:$0xff]
        %v2331 = vld [vmem:[%s2329 + $0x8] sm:$0xff]
        %v2332 = vld [vmem:[%s2329 + $0x10] sm:$0xff]
        %v2333 = vld [vmem:[%s2329 + $0x18] sm:$0xff]
        %v2334 = vld [vmem:[%s2329 + $0x20] sm:$0xff]
        %v2335 = vld [vmem:[%s2329 + $0x28] sm:$0xff]
        %v2336 = vld [vmem:[%s2329 + $0x30] sm:$0xff]
        %v2337 = vld [vmem:[%s2329 + $0x38] sm:$0xff]
        %v2338 = vld [vmem:[%s2329 + $0x40] sm:$0xff]
        %v2339 = vld [vmem:[%s2329 + $0x48] sm:$0xff]
        %v2340 = vld [vmem:[%s2329 + $0x50] sm:$0xff]
        %v2341 = vld [vmem:[%s2329 + $0x58] sm:$0xff]
        %v2342 = vld [vmem:[%s2329 + $0x60] sm:$0xff]
        %v2343 = vld [vmem:[%s2329 + $0x68] sm:$0xff]
        %v2344 = vld [vmem:[%s2329 + $0x70] sm:$0xff]
        %v2345 = vld [vmem:[%s2329 + $0x78] sm:$0xff]
        %s2346 = scalar_lea.vmem %s3, 256
        %v2347 = vld [vmem:[%s2346] sm:$0xff]
        %v2348 = vld [vmem:[%s2346 + $0x8] sm:$0xff]
        %v2349 = vld [vmem:[%s2346 + $0x10] sm:$0xff]
        %v2350 = vld [vmem:[%s2346 + $0x18] sm:$0xff]
        %v2351 = vld [vmem:[%s2346 + $0x20] sm:$0xff]
        %v2352 = vld [vmem:[%s2346 + $0x28] sm:$0xff]
        %v2353 = vld [vmem:[%s2346 + $0x30] sm:$0xff]
        %v2354 = vld [vmem:[%s2346 + $0x38] sm:$0xff]
        %v2355 = vld [vmem:[%s2346 + $0x40] sm:$0xff]
        %v2356 = vld [vmem:[%s2346 + $0x48] sm:$0xff]
        %v2357 = vld [vmem:[%s2346 + $0x50] sm:$0xff]
        %v2358 = vld [vmem:[%s2346 + $0x58] sm:$0xff]
        %v2359 = vld [vmem:[%s2346 + $0x60] sm:$0xff]
        %v2360 = vld [vmem:[%s2346 + $0x68] sm:$0xff]
        %v2361 = vld [vmem:[%s2346 + $0x70] sm:$0xff]
        %v2362 = vld [vmem:[%s2346 + $0x78] sm:$0xff]
        %s2363 = scalar_lea.vmem %s4, 256
        %v2364 = vld [vmem:[%s2363] sm:$0xff]
        %v2365 = vld [vmem:[%s2363 + $0x8] sm:$0xff]
        %v2366 = vld [vmem:[%s2363 + $0x10] sm:$0xff]
        %v2367 = vld [vmem:[%s2363 + $0x18] sm:$0xff]
        %v2368 = vld [vmem:[%s2363 + $0x20] sm:$0xff]
        %v2369 = vld [vmem:[%s2363 + $0x28] sm:$0xff]
        %v2370 = vld [vmem:[%s2363 + $0x30] sm:$0xff]
        %v2371 = vld [vmem:[%s2363 + $0x38] sm:$0xff]
        %v2372 = vld [vmem:[%s2363 + $0x40] sm:$0xff]
        %v2373 = vld [vmem:[%s2363 + $0x48] sm:$0xff]
        %v2374 = vld [vmem:[%s2363 + $0x50] sm:$0xff]
        %v2375 = vld [vmem:[%s2363 + $0x58] sm:$0xff]
        %v2376 = vld [vmem:[%s2363 + $0x60] sm:$0xff]
        %v2377 = vld [vmem:[%s2363 + $0x68] sm:$0xff]
        %v2378 = vld [vmem:[%s2363 + $0x70] sm:$0xff]
        %v2379 = vld [vmem:[%s2363 + $0x78] sm:$0xff]
        %s2380 = scalar_lea.vmem %s5, 8
        %v2381 = vld [vmem:[%s2380] sm:$0x1]
        %v2382 = vld [vmem:[%s2380 + $0x1] sm:$0x1]
        %v2383 = vld [vmem:[%s2380 + $0x2] sm:$0x1]
        %v2384 = vld [vmem:[%s2380 + $0x3] sm:$0x1]
        %s2385 = scalar_lea.vmem %s6, 8
        %v2386 = vld [vmem:[%s2385] sm:$0x1]
        %v2387 = vld [vmem:[%s2385 + $0x1] sm:$0x1]
        %v2388 = vld [vmem:[%s2385 + $0x2] sm:$0x1]
        %v2389 = vld [vmem:[%s2385 + $0x3] sm:$0x1]
        %s2390 = scalar_lea.vmem %s7, 8
        %v2391 = vld [vmem:[%s2390] sm:$0x1]
        %v2392 = vld [vmem:[%s2390 + $0x1] sm:$0x1]
        %v2393 = vld [vmem:[%s2390 + $0x2] sm:$0x1]
        %v2394 = vld [vmem:[%s2390 + $0x3] sm:$0x1]
        %s2395 = scalar_lea.vmem %s8, 64
        %v2396 = vld [vmem:[%s2395] sm:$0xff]
        %v2397 = vld [vmem:[%s2395 + $0x8] sm:$0xff]
        %v2398 = vld [vmem:[%s2395 + $0x10] sm:$0xff]
        %v2399 = vld [vmem:[%s2395 + $0x18] sm:$0xff]
        %s2400 = scalar_lea.vmem %s9, 2
        %v2401 = vld [vmem:[%s2400] sm:$0x1]
        %v2406 = vperm.slane %v2381, 0
        %v2407 = vperm.slane %v2382, 0
        %v2408 = vperm.slane %v2383, 0
        %v2409 = vperm.slane %v2384, 0
        %v2415 = vsel %vm727, %v2328, 0
        %2417 = vmatpush.msra.mxu0 0.0
        %2418 = vmatpush.msra.mxu0 0.0
        %2419 = vmatpush.msra.mxu0 0.0
        %2420 = vmatpush.msra.mxu0 0.0
        %2421 = vmatpush.msra.mxu0 0.0
        %2422 = vmatpush.msra.mxu0 0.0
        %2423 = vmatpush.msra.mxu0 0.0
        %2424 = vmatpush.msra.mxu0 0.0
        %2425 = vmatpush.msra.mxu0 0.0
        %2426 = vmatpush.msra.mxu0 0.0
        %2427 = vmatpush.msra.mxu0 0.0
        %2428 = vmatpush.msra.mxu0 0.0
        %2429 = vmatpush.msra.mxu0 %v2333
        %2430 = vmatpush.msra.mxu0 %v2332
        %2431 = vmatpush.msra.mxu0 %v2331
        %2432 = vmatpush.msra.mxu0 %v2330
        %2433 = vmatmul.f32.gmra.mxu0 %v2415
        %v2434 = vpop.f32.mrf.mxu0
        %v2435 = vadd.f32 %v2406, %v2434
        %2436 = vdwg.mxu0
        %2437 = vmatpush.msra.mxu0 0.0
        %2438 = vmatpush.msra.mxu0 0.0
        %2439 = vmatpush.msra.mxu0 0.0
        %2440 = vmatpush.msra.mxu0 0.0
        %2441 = vmatpush.msra.mxu0 0.0
        %2442 = vmatpush.msra.mxu0 0.0
        %2443 = vmatpush.msra.mxu0 0.0
        %2444 = vmatpush.msra.mxu0 0.0
        %2445 = vmatpush.msra.mxu0 0.0
        %2446 = vmatpush.msra.mxu0 0.0
        %2447 = vmatpush.msra.mxu0 0.0
        %2448 = vmatpush.msra.mxu0 0.0
        %2449 = vmatpush.msra.mxu0 %v2337
        %2450 = vmatpush.msra.mxu0 %v2336
        %2451 = vmatpush.msra.mxu0 %v2335
        %2452 = vmatpush.msra.mxu0 %v2334
        %2453 = vmatmul.f32.gmra.mxu0 %v2415
        %v2454 = vpop.f32.mrf.mxu0
        %v2455 = vadd.f32 %v2407, %v2454
        %2456 = vdwg.mxu0
        %2457 = vmatpush.msra.mxu0 0.0
        %2458 = vmatpush.msra.mxu0 0.0
        %2459 = vmatpush.msra.mxu0 0.0
        %2460 = vmatpush.msra.mxu0 0.0
        %2461 = vmatpush.msra.mxu0 0.0
        %2462 = vmatpush.msra.mxu0 0.0
        %2463 = vmatpush.msra.mxu0 0.0
        %2464 = vmatpush.msra.mxu0 0.0
        %2465 = vmatpush.msra.mxu0 0.0
        %2466 = vmatpush.msra.mxu0 0.0
        %2467 = vmatpush.msra.mxu0 0.0
        %2468 = vmatpush.msra.mxu0 0.0
        %2469 = vmatpush.msra.mxu0 %v2341
        %2470 = vmatpush.msra.mxu0 %v2340
        %2471 = vmatpush.msra.mxu0 %v2339
        %2472 = vmatpush.msra.mxu0 %v2338
        %2473 = vmatmul.f32.gmra.mxu0 %v2415
        %v2474 = vpop.f32.mrf.mxu0
        %v2475 = vadd.f32 %v2408, %v2474
        %2476 = vdwg.mxu0
        %2477 = vmatpush.msra.mxu0 0.0
        %2478 = vmatpush.msra.mxu0 0.0
        %2479 = vmatpush.msra.mxu0 0.0
        %2480 = vmatpush.msra.mxu0 0.0
        %2481 = vmatpush.msra.mxu0 0.0
        %2482 = vmatpush.msra.mxu0 0.0
        %2483 = vmatpush.msra.mxu0 0.0
        %2484 = vmatpush.msra.mxu0 0.0
        %2485 = vmatpush.msra.mxu0 0.0
        %2486 = vmatpush.msra.mxu0 0.0
        %2487 = vmatpush.msra.mxu0 0.0
        %2488 = vmatpush.msra.mxu0 0.0
        %2489 = vmatpush.msra.mxu0 %v2345
        %2490 = vmatpush.msra.mxu0 %v2344
        %2491 = vmatpush.msra.mxu0 %v2343
        %2492 = vmatpush.msra.mxu0 %v2342
        %2493 = vmatmul.f32.gmra.mxu0 %v2415
        %v2494 = vpop.f32.mrf.mxu0
        %v2495 = vadd.f32 %v2409, %v2494
        %2496 = vdwg.mxu0
        %v2501 = vperm.slane %v2386, 0
        %v2502 = vperm.slane %v2387, 0
        %v2503 = vperm.slane %v2388, 0
        %v2504 = vperm.slane %v2389, 0
        %2509 = vmatpush.msra.mxu0 0.0
        %2510 = vmatpush.msra.mxu0 0.0
        %2511 = vmatpush.msra.mxu0 0.0
        %2512 = vmatpush.msra.mxu0 0.0
        %2513 = vmatpush.msra.mxu0 0.0
        %2514 = vmatpush.msra.mxu0 0.0
        %2515 = vmatpush.msra.mxu0 0.0
        %2516 = vmatpush.msra.mxu0 0.0
        %2517 = vmatpush.msra.mxu0 0.0
        %2518 = vmatpush.msra.mxu0 0.0
        %2519 = vmatpush.msra.mxu0 0.0
        %2520 = vmatpush.msra.mxu0 0.0
        %2521 = vmatpush.msra.mxu0 %v2350
        %2522 = vmatpush.msra.mxu0 %v2349
        %2523 = vmatpush.msra.mxu0 %v2348
        %2524 = vmatpush.msra.mxu0 %v2347
        %2525 = vmatmul.f32.gmra.mxu0 %v2415
        %v2526 = vpop.f32.mrf.mxu0
        %v2527 = vadd.f32 %v2501, %v2526
        %2528 = vdwg.mxu0
        %2529 = vmatpush.msra.mxu0 0.0
        %2530 = vmatpush.msra.mxu0 0.0
        %2531 = vmatpush.msra.mxu0 0.0
        %2532 = vmatpush.msra.mxu0 0.0
        %2533 = vmatpush.msra.mxu0 0.0
        %2534 = vmatpush.msra.mxu0 0.0
        %2535 = vmatpush.msra.mxu0 0.0
        %2536 = vmatpush.msra.mxu0 0.0
        %2537 = vmatpush.msra.mxu0 0.0
        %2538 = vmatpush.msra.mxu0 0.0
        %2539 = vmatpush.msra.mxu0 0.0
        %2540 = vmatpush.msra.mxu0 0.0
        %2541 = vmatpush.msra.mxu0 %v2354
        %2542 = vmatpush.msra.mxu0 %v2353
        %2543 = vmatpush.msra.mxu0 %v2352
        %2544 = vmatpush.msra.mxu0 %v2351
        %2545 = vmatmul.f32.gmra.mxu0 %v2415
        %v2546 = vpop.f32.mrf.mxu0
        %v2547 = vadd.f32 %v2502, %v2546
        %2548 = vdwg.mxu0
        %2549 = vmatpush.msra.mxu0 0.0
        %2550 = vmatpush.msra.mxu0 0.0
        %2551 = vmatpush.msra.mxu0 0.0
        %2552 = vmatpush.msra.mxu0 0.0
        %2553 = vmatpush.msra.mxu0 0.0
        %2554 = vmatpush.msra.mxu0 0.0
        %2555 = vmatpush.msra.mxu0 0.0
        %2556 = vmatpush.msra.mxu0 0.0
        %2557 = vmatpush.msra.mxu0 0.0
        %2558 = vmatpush.msra.mxu0 0.0
        %2559 = vmatpush.msra.mxu0 0.0
        %2560 = vmatpush.msra.mxu0 0.0
        %2561 = vmatpush.msra.mxu0 %v2358
        %2562 = vmatpush.msra.mxu0 %v2357
        %2563 = vmatpush.msra.mxu0 %v2356
        %2564 = vmatpush.msra.mxu0 %v2355
        %2565 = vmatmul.f32.gmra.mxu0 %v2415
        %v2566 = vpop.f32.mrf.mxu0
        %v2567 = vadd.f32 %v2503, %v2566
        %2568 = vdwg.mxu0
        %2569 = vmatpush.msra.mxu0 0.0
        %2570 = vmatpush.msra.mxu0 0.0
        %2571 = vmatpush.msra.mxu0 0.0
        %2572 = vmatpush.msra.mxu0 0.0
        %2573 = vmatpush.msra.mxu0 0.0
        %2574 = vmatpush.msra.mxu0 0.0
        %2575 = vmatpush.msra.mxu0 0.0
        %2576 = vmatpush.msra.mxu0 0.0
        %2577 = vmatpush.msra.mxu0 0.0
        %2578 = vmatpush.msra.mxu0 0.0
        %2579 = vmatpush.msra.mxu0 0.0
        %2580 = vmatpush.msra.mxu0 0.0
        %2581 = vmatpush.msra.mxu0 %v2362
        %2582 = vmatpush.msra.mxu0 %v2361
        %2583 = vmatpush.msra.mxu0 %v2360
        %2584 = vmatpush.msra.mxu0 %v2359
        %2585 = vmatmul.f32.gmra.mxu0 %v2415
        %v2586 = vpop.f32.mrf.mxu0
        %v2587 = vadd.f32 %v2504, %v2586
        %2588 = vdwg.mxu0
        %v2593 = vperm.slane %v2391, 0
        %v2594 = vperm.slane %v2392, 0
        %v2595 = vperm.slane %v2393, 0
        %v2596 = vperm.slane %v2394, 0
        %2601 = vmatpush.msra.mxu0 0.0
        %2602 = vmatpush.msra.mxu0 0.0
        %2603 = vmatpush.msra.mxu0 0.0
        %2604 = vmatpush.msra.mxu0 0.0
        %2605 = vmatpush.msra.mxu0 0.0
        %2606 = vmatpush.msra.mxu0 0.0
        %2607 = vmatpush.msra.mxu0 0.0
        %2608 = vmatpush.msra.mxu0 0.0
        %2609 = vmatpush.msra.mxu0 0.0
        %2610 = vmatpush.msra.mxu0 0.0
        %2611 = vmatpush.msra.mxu0 0.0
        %2612 = vmatpush.msra.mxu0 0.0
        %2613 = vmatpush.msra.mxu0 %v2367
        %2614 = vmatpush.msra.mxu0 %v2366
        %2615 = vmatpush.msra.mxu0 %v2365
        %2616 = vmatpush.msra.mxu0 %v2364
        %2617 = vmatmul.f32.gmra.mxu0 %v2415
        %v2618 = vpop.f32.mrf.mxu0
        %v2619 = vadd.f32 %v2593, %v2618
        %2620 = vdwg.mxu0
        %2621 = vmatpush.msra.mxu0 0.0
        %2622 = vmatpush.msra.mxu0 0.0
        %2623 = vmatpush.msra.mxu0 0.0
        %2624 = vmatpush.msra.mxu0 0.0
        %2625 = vmatpush.msra.mxu0 0.0
        %2626 = vmatpush.msra.mxu0 0.0
        %2627 = vmatpush.msra.mxu0 0.0
        %2628 = vmatpush.msra.mxu0 0.0
        %2629 = vmatpush.msra.mxu0 0.0
        %2630 = vmatpush.msra.mxu0 0.0
        %2631 = vmatpush.msra.mxu0 0.0
        %2632 = vmatpush.msra.mxu0 0.0
        %2633 = vmatpush.msra.mxu0 %v2371
        %2634 = vmatpush.msra.mxu0 %v2370
        %2635 = vmatpush.msra.mxu0 %v2369
        %2636 = vmatpush.msra.mxu0 %v2368
        %2637 = vmatmul.f32.gmra.mxu0 %v2415
        %v2638 = vpop.f32.mrf.mxu0
        %v2639 = vadd.f32 %v2594, %v2638
        %2640 = vdwg.mxu0
        %2641 = vmatpush.msra.mxu0 0.0
        %2642 = vmatpush.msra.mxu0 0.0
        %2643 = vmatpush.msra.mxu0 0.0
        %2644 = vmatpush.msra.mxu0 0.0
        %2645 = vmatpush.msra.mxu0 0.0
        %2646 = vmatpush.msra.mxu0 0.0
        %2647 = vmatpush.msra.mxu0 0.0
        %2648 = vmatpush.msra.mxu0 0.0
        %2649 = vmatpush.msra.mxu0 0.0
        %2650 = vmatpush.msra.mxu0 0.0
        %2651 = vmatpush.msra.mxu0 0.0
        %2652 = vmatpush.msra.mxu0 0.0
        %2653 = vmatpush.msra.mxu0 %v2375
        %2654 = vmatpush.msra.mxu0 %v2374
        %2655 = vmatpush.msra.mxu0 %v2373
        %2656 = vmatpush.msra.mxu0 %v2372
        %2657 = vmatmul.f32.gmra.mxu0 %v2415
        %v2658 = vpop.f32.mrf.mxu0
        %v2659 = vadd.f32 %v2595, %v2658
        %2660 = vdwg.mxu0
        %2661 = vmatpush.msra.mxu0 0.0
        %2662 = vmatpush.msra.mxu0 0.0
        %2663 = vmatpush.msra.mxu0 0.0
        %2664 = vmatpush.msra.mxu0 0.0
        %2665 = vmatpush.msra.mxu0 0.0
        %2666 = vmatpush.msra.mxu0 0.0
        %2667 = vmatpush.msra.mxu0 0.0
        %2668 = vmatpush.msra.mxu0 0.0
        %2669 = vmatpush.msra.mxu0 0.0
        %2670 = vmatpush.msra.mxu0 0.0
        %2671 = vmatpush.msra.mxu0 0.0
        %2672 = vmatpush.msra.mxu0 0.0
        %2673 = vmatpush.msra.mxu0 %v2379
        %2674 = vmatpush.msra.mxu0 %v2378
        %2675 = vmatpush.msra.mxu0 %v2377
        %2676 = vmatpush.msra.mxu0 %v2376
        %2677 = vmatmul.f32.gmra.mxu0 %v2415
        %v2678 = vpop.f32.mrf.mxu0
        %v2679 = vadd.f32 %v2596, %v2678
        %2680 = vdwg.mxu0
        %v2682 = vsel %vm995, %v2435, 0
        %v2685 = vsel %vm995, %v2527, 0
        %2687 = vmatpush.xpose.msra.mxu0 0.0
        %2688 = vmatpush.xpose.msra.mxu0 0.0
        %2689 = vmatpush.xpose.msra.mxu0 0.0
        %2690 = vmatpush.xpose.msra.mxu0 0.0
        %2691 = vmatpush.xpose.msra.mxu0 0.0
        %2692 = vmatpush.xpose.msra.mxu0 0.0
        %2693 = vmatpush.xpose.msra.mxu0 0.0
        %2694 = vmatpush.xpose.msra.mxu0 0.0
        %2695 = vmatpush.xpose.msra.mxu0 0.0
        %2696 = vmatpush.xpose.msra.mxu0 0.0
        %2697 = vmatpush.xpose.msra.mxu0 0.0
        %2698 = vmatpush.xpose.msra.mxu0 0.0
        %2699 = vmatpush.xpose.msra.mxu0 0.0
        %2700 = vmatpush.xpose.msra.mxu0 0.0
        %2701 = vmatpush.xpose.msra.mxu0 0.0
        %2702 = vmatpush.xpose.msra.mxu0 %v2685
        %2703 = vmatmul.f32.gmra.mxu0 %v2682
        %v2704 = vpop.f32.mrf.mxu0
        %v2705 = vadd.f32 0.0, %v2704
        %2706 = vdwg.mxu0
        %v2708 = vsel %vm995, %v2455, 0
        %v2711 = vsel %vm995, %v2547, 0
        %2713 = vmatpush.xpose.msra.mxu0 0.0
        %2714 = vmatpush.xpose.msra.mxu0 0.0
        %2715 = vmatpush.xpose.msra.mxu0 0.0
        %2716 = vmatpush.xpose.msra.mxu0 0.0
        %2717 = vmatpush.xpose.msra.mxu0 0.0
        %2718 = vmatpush.xpose.msra.mxu0 0.0
        %2719 = vmatpush.xpose.msra.mxu0 0.0
        %2720 = vmatpush.xpose.msra.mxu0 0.0
        %2721 = vmatpush.xpose.msra.mxu0 0.0
        %2722 = vmatpush.xpose.msra.mxu0 0.0
        %2723 = vmatpush.xpose.msra.mxu0 0.0
        %2724 = vmatpush.xpose.msra.mxu0 0.0
        %2725 = vmatpush.xpose.msra.mxu0 0.0
        %2726 = vmatpush.xpose.msra.mxu0 0.0
        %2727 = vmatpush.xpose.msra.mxu0 0.0
        %2728 = vmatpush.xpose.msra.mxu0 %v2711
        %2729 = vmatmul.f32.gmra.mxu0 %v2708
        %v2730 = vpop.f32.mrf.mxu0
        %v2731 = vadd.f32 0.0, %v2730
        %2732 = vdwg.mxu0
        %v2734 = vsel %vm995, %v2475, 0
        %v2737 = vsel %vm995, %v2567, 0
        %2739 = vmatpush.xpose.msra.mxu0 0.0
        %2740 = vmatpush.xpose.msra.mxu0 0.0
        %2741 = vmatpush.xpose.msra.mxu0 0.0
        %2742 = vmatpush.xpose.msra.mxu0 0.0
        %2743 = vmatpush.xpose.msra.mxu0 0.0
        %2744 = vmatpush.xpose.msra.mxu0 0.0
        %2745 = vmatpush.xpose.msra.mxu0 0.0
        %2746 = vmatpush.xpose.msra.mxu0 0.0
        %2747 = vmatpush.xpose.msra.mxu0 0.0
        %2748 = vmatpush.xpose.msra.mxu0 0.0
        %2749 = vmatpush.xpose.msra.mxu0 0.0
        %2750 = vmatpush.xpose.msra.mxu0 0.0
        %2751 = vmatpush.xpose.msra.mxu0 0.0
        %2752 = vmatpush.xpose.msra.mxu0 0.0
        %2753 = vmatpush.xpose.msra.mxu0 0.0
        %2754 = vmatpush.xpose.msra.mxu0 %v2737
        %2755 = vmatmul.f32.gmra.mxu0 %v2734
        %v2756 = vpop.f32.mrf.mxu0
        %v2757 = vadd.f32 0.0, %v2756
        %2758 = vdwg.mxu0
        %v2760 = vsel %vm995, %v2495, 0
        %v2763 = vsel %vm995, %v2587, 0
        %2765 = vmatpush.xpose.msra.mxu0 0.0
        %2766 = vmatpush.xpose.msra.mxu0 0.0
        %2767 = vmatpush.xpose.msra.mxu0 0.0
        %2768 = vmatpush.xpose.msra.mxu0 0.0
        %2769 = vmatpush.xpose.msra.mxu0 0.0
        %2770 = vmatpush.xpose.msra.mxu0 0.0
        %2771 = vmatpush.xpose.msra.mxu0 0.0
        %2772 = vmatpush.xpose.msra.mxu0 0.0
        %2773 = vmatpush.xpose.msra.mxu0 0.0
        %2774 = vmatpush.xpose.msra.mxu0 0.0
        %2775 = vmatpush.xpose.msra.mxu0 0.0
        %2776 = vmatpush.xpose.msra.mxu0 0.0
        %2777 = vmatpush.xpose.msra.mxu0 0.0
        %2778 = vmatpush.xpose.msra.mxu0 0.0
        %2779 = vmatpush.xpose.msra.mxu0 0.0
        %2780 = vmatpush.xpose.msra.mxu0 %v2763
        %2781 = vmatmul.f32.gmra.mxu0 %v2760
        %v2782 = vpop.f32.mrf.mxu0
        %v2783 = vadd.f32 0.0, %v2782
        %2784 = vdwg.mxu0
        %v2785 = vmul.f32 %v2705, 0.35355338
        %v2786 = vmul.f32 %v2731, 0.35355338
        %v2787 = vmul.f32 %v2757, 0.35355338
        %v2788 = vmul.f32 %v2783, 0.35355338
        %v2789 = vadd.f32 %v2785, %v649
        %v2790 = vadd.f32 %v2786, %v649
        %v2791 = vadd.f32 %v2787, %v649
        %v2792 = vadd.f32 %v2788, %v649
        %v2793 = vsel %vm995, %v2789, -inf
        %2794 = vmax.xlane.f32.xlu0 %v2793
        %v2795 = vpop.xlane.xlu0 %2794
        %v2796 = vsel %vm995, %v2790, -inf
        %2797 = vmax.xlane.f32.xlu0 %v2796
        %v2798 = vpop.xlane.xlu0 %2797
        %v2799 = vsel %vm995, %v2791, -inf
        %2800 = vmax.xlane.f32.xlu0 %v2799
        %v2801 = vpop.xlane.xlu0 %2800
        %v2802 = vsel %vm995, %v2792, -inf
        %2803 = vmax.xlane.f32.xlu0 %v2802
        %v2804 = vpop.xlane.xlu0 %2803
        %v2805 = vsub.f32 %v2789, %v2795
        %v2806 = vsub.f32 %v2790, %v2798
        %v2807 = vsub.f32 %v2791, %v2801
        %v2808 = vsub.f32 %v2792, %v2804
        %v2809 = vmul.f32 %v2805, 1.442695
        %v2810 = vpow.pop %v2809
        %v2811 = vmul.f32 %v2806, 1.442695
        %v2812 = vpow.pop %v2811
        %v2813 = vmul.f32 %v2807, 1.442695
        %v2814 = vpow.pop %v2813
        %v2815 = vmul.f32 %v2808, 1.442695
        %v2816 = vpow.pop %v2815
        %v2817 = vsel %vm995, %v2810, 0.0
        %2818 = vadd.xlane.f32.xlu0 %v2817
        %v2819 = vpop.xlane.xlu0 %2818
        %v2820 = vsel %vm995, %v2812, 0.0
        %2821 = vadd.xlane.f32.xlu0 %v2820
        %v2822 = vpop.xlane.xlu0 %2821
        %v2823 = vsel %vm995, %v2814, 0.0
        %2824 = vadd.xlane.f32.xlu0 %v2823
        %v2825 = vpop.xlane.xlu0 %2824
        %v2826 = vsel %vm995, %v2816, 0.0
        %2827 = vadd.xlane.f32.xlu0 %v2826
        %v2828 = vpop.xlane.xlu0 %2827
        %v2829 = vrcp.pop %v2819
        %v2830 = vmul.f32 %v2819, %v2829
        %v2831 = vsub.f32 1.0, %v2830
        %v2832 = vmul.f32 %v2829, %v2831
        %v2833 = vadd.f32 %v2829, %v2832
        %vm2834 = vweird.f32 %v2819
        %vm2835 = vweird.f32 %v2829
        %vm2836 = vmor %vm2834, %vm2835
        %v2837 = vsel %vm2836, %v2829, %v2833
        %v2838 = vand.u32 2147483647, %v2819
        %vm2839 = vcmp.eq.f32.partialorder %v2838, 8.507059e+37
        %v2840 = vand.u32 %v2819, 2147483648
        %v2841 = vor.u32 1.1754944e-38, %v2840
        %v2842 = vsel %vm2839, %v2841, %v2837
        %v2843 = vmul.f32 %v2810, %v2842
        %v2844 = vrcp.pop %v2822
        %v2845 = vmul.f32 %v2822, %v2844
        %v2846 = vsub.f32 1.0, %v2845
        %v2847 = vmul.f32 %v2844, %v2846
        %v2848 = vadd.f32 %v2844, %v2847
        %vm2849 = vweird.f32 %v2822
        %vm2850 = vweird.f32 %v2844
        %vm2851 = vmor %vm2849, %vm2850
        %v2852 = vsel %vm2851, %v2844, %v2848
        %v2853 = vand.u32 2147483647, %v2822
        %vm2854 = vcmp.eq.f32.partialorder %v2853, 8.507059e+37
        %v2855 = vand.u32 %v2822, 2147483648
        %v2856 = vor.u32 1.1754944e-38, %v2855
        %v2857 = vsel %vm2854, %v2856, %v2852
        %v2858 = vmul.f32 %v2812, %v2857
        %v2859 = vrcp.pop %v2825
        %v2860 = vmul.f32 %v2825, %v2859
        %v2861 = vsub.f32 1.0, %v2860
        %v2862 = vmul.f32 %v2859, %v2861
        %v2863 = vadd.f32 %v2859, %v2862
        %vm2864 = vweird.f32 %v2825
        %vm2865 = vweird.f32 %v2859
        %vm2866 = vmor %vm2864, %vm2865
        %v2867 = vsel %vm2866, %v2859, %v2863
        %v2868 = vand.u32 2147483647, %v2825
        %vm2869 = vcmp.eq.f32.partialorder %v2868, 8.507059e+37
        %v2870 = vand.u32 %v2825, 2147483648
        %v2871 = vor.u32 1.1754944e-38, %v2870
        %v2872 = vsel %vm2869, %v2871, %v2867
        %v2873 = vmul.f32 %v2814, %v2872
        %v2874 = vrcp.pop %v2828
        %v2875 = vmul.f32 %v2828, %v2874
        %v2876 = vsub.f32 1.0, %v2875
        %v2877 = vmul.f32 %v2874, %v2876
        %v2878 = vadd.f32 %v2874, %v2877
        %vm2879 = vweird.f32 %v2828
        %vm2880 = vweird.f32 %v2874
        %vm2881 = vmor %vm2879, %vm2880
        %v2882 = vsel %vm2881, %v2874, %v2878
        %v2883 = vand.u32 2147483647, %v2828
        %vm2884 = vcmp.eq.f32.partialorder %v2883, 8.507059e+37
        %v2885 = vand.u32 %v2828, 2147483648
        %v2886 = vor.u32 1.1754944e-38, %v2885
        %v2887 = vsel %vm2884, %v2886, %v2882
        %v2888 = vmul.f32 %v2816, %v2887
        %v2890 = vsel %vm995, %v2843, 0
        %2892 = vmatpush.msra.mxu0 0.0
        %2893 = vmatpush.msra.mxu0 0.0
        %2894 = vmatpush.msra.mxu0 0.0
        %2895 = vmatpush.msra.mxu0 0.0
        %2896 = vmatpush.msra.mxu0 0.0
        %2897 = vmatpush.msra.mxu0 0.0
        %2898 = vmatpush.msra.mxu0 0.0
        %2899 = vmatpush.msra.mxu0 0.0
        %2900 = vmatpush.msra.mxu0 0.0
        %2901 = vmatpush.msra.mxu0 0.0
        %2902 = vmatpush.msra.mxu0 0.0
        %2903 = vmatpush.msra.mxu0 0.0
        %2904 = vmatpush.msra.mxu0 0.0
        %2905 = vmatpush.msra.mxu0 0.0
        %2906 = vmatpush.msra.mxu0 0.0
        %2907 = vmatpush.msra.mxu0 %v2619
        %2908 = vmatmul.f32.gmra.mxu0 %v2890
        %v2909 = vpop.f32.mrf.mxu0
        %v2910 = vadd.f32 0.0, %v2909
        %2911 = vdwg.mxu0
        %v2913 = vsel %vm995, %v2858, 0
        %2915 = vmatpush.msra.mxu0 0.0
        %2916 = vmatpush.msra.mxu0 0.0
        %2917 = vmatpush.msra.mxu0 0.0
        %2918 = vmatpush.msra.mxu0 0.0
        %2919 = vmatpush.msra.mxu0 0.0
        %2920 = vmatpush.msra.mxu0 0.0
        %2921 = vmatpush.msra.mxu0 0.0
        %2922 = vmatpush.msra.mxu0 0.0
        %2923 = vmatpush.msra.mxu0 0.0
        %2924 = vmatpush.msra.mxu0 0.0
        %2925 = vmatpush.msra.mxu0 0.0
        %2926 = vmatpush.msra.mxu0 0.0
        %2927 = vmatpush.msra.mxu0 0.0
        %2928 = vmatpush.msra.mxu0 0.0
        %2929 = vmatpush.msra.mxu0 0.0
        %2930 = vmatpush.msra.mxu0 %v2639
        %2931 = vmatmul.f32.gmra.mxu0 %v2913
        %v2932 = vpop.f32.mrf.mxu0
        %v2933 = vadd.f32 0.0, %v2932
        %2934 = vdwg.mxu0
        %v2936 = vsel %vm995, %v2873, 0
        %2938 = vmatpush.msra.mxu0 0.0
        %2939 = vmatpush.msra.mxu0 0.0
        %2940 = vmatpush.msra.mxu0 0.0
        %2941 = vmatpush.msra.mxu0 0.0
        %2942 = vmatpush.msra.mxu0 0.0
        %2943 = vmatpush.msra.mxu0 0.0
        %2944 = vmatpush.msra.mxu0 0.0
        %2945 = vmatpush.msra.mxu0 0.0
        %2946 = vmatpush.msra.mxu0 0.0
        %2947 = vmatpush.msra.mxu0 0.0
        %2948 = vmatpush.msra.mxu0 0.0
        %2949 = vmatpush.msra.mxu0 0.0
        %2950 = vmatpush.msra.mxu0 0.0
        %2951 = vmatpush.msra.mxu0 0.0
        %2952 = vmatpush.msra.mxu0 0.0
        %2953 = vmatpush.msra.mxu0 %v2659
        %2954 = vmatmul.f32.gmra.mxu0 %v2936
        %v2955 = vpop.f32.mrf.mxu0
        %v2956 = vadd.f32 0.0, %v2955
        %2957 = vdwg.mxu0
        %v2959 = vsel %vm995, %v2888, 0
        %2961 = vmatpush.msra.mxu0 0.0
        %2962 = vmatpush.msra.mxu0 0.0
        %2963 = vmatpush.msra.mxu0 0.0
        %2964 = vmatpush.msra.mxu0 0.0
        %2965 = vmatpush.msra.mxu0 0.0
        %2966 = vmatpush.msra.mxu0 0.0
        %2967 = vmatpush.msra.mxu0 0.0
        %2968 = vmatpush.msra.mxu0 0.0
        %2969 = vmatpush.msra.mxu0 0.0
        %2970 = vmatpush.msra.mxu0 0.0
        %2971 = vmatpush.msra.mxu0 0.0
        %2972 = vmatpush.msra.mxu0 0.0
        %2973 = vmatpush.msra.mxu0 0.0
        %2974 = vmatpush.msra.mxu0 0.0
        %2975 = vmatpush.msra.mxu0 0.0
        %2976 = vmatpush.msra.mxu0 %v2679
        %2977 = vmatmul.f32.gmra.mxu0 %v2959
        %v2978 = vpop.f32.mrf.mxu0
        %v2979 = vadd.f32 0.0, %v2978
        %2980 = vdwg.mxu0
        %v2982 = vsel %vm995, %v2910, 0
        %2984 = vmatpush.msra.mxu0 0.0
        %2985 = vmatpush.msra.mxu0 0.0
        %2986 = vmatpush.msra.mxu0 0.0
        %2987 = vmatpush.msra.mxu0 0.0
        %2988 = vmatpush.msra.mxu0 0.0
        %2989 = vmatpush.msra.mxu0 0.0
        %2990 = vmatpush.msra.mxu0 0.0
        %2991 = vmatpush.msra.mxu0 0.0
        %2992 = vmatpush.msra.mxu0 0.0
        %2993 = vmatpush.msra.mxu0 0.0
        %2994 = vmatpush.msra.mxu0 0.0
        %2995 = vmatpush.msra.mxu0 0.0
        %2996 = vmatpush.msra.mxu0 0.0
        %2997 = vmatpush.msra.mxu0 0.0
        %2998 = vmatpush.msra.mxu0 0.0
        %2999 = vmatpush.msra.mxu0 %v2396
        %3000 = vmatmul.f32.gmra.mxu0 %v2982
        %v3001 = vpop.f32.mrf.mxu0
        %v3002 = vadd.f32 0.0, %v3001
        %3003 = vdwg.mxu0
        %v3005 = vsel %vm995, %v2933, 0
        %3007 = vmatpush.msra.mxu0 0.0
        %3008 = vmatpush.msra.mxu0 0.0
        %3009 = vmatpush.msra.mxu0 0.0
        %3010 = vmatpush.msra.mxu0 0.0
        %3011 = vmatpush.msra.mxu0 0.0
        %3012 = vmatpush.msra.mxu0 0.0
        %3013 = vmatpush.msra.mxu0 0.0
        %3014 = vmatpush.msra.mxu0 0.0
        %3015 = vmatpush.msra.mxu0 0.0
        %3016 = vmatpush.msra.mxu0 0.0
        %3017 = vmatpush.msra.mxu0 0.0
        %3018 = vmatpush.msra.mxu0 0.0
        %3019 = vmatpush.msra.mxu0 0.0
        %3020 = vmatpush.msra.mxu0 0.0
        %3021 = vmatpush.msra.mxu0 0.0
        %3022 = vmatpush.msra.mxu0 %v2397
        %3023 = vmatmul.f32.gmra.mxu0 %v3005
        %v3024 = vpop.f32.mrf.mxu0
        %v3025 = vadd.f32 0.0, %v3024
        %3026 = vdwg.mxu0
        %v3028 = vsel %vm995, %v2956, 0
        %3030 = vmatpush.msra.mxu0 0.0
        %3031 = vmatpush.msra.mxu0 0.0
        %3032 = vmatpush.msra.mxu0 0.0
        %3033 = vmatpush.msra.mxu0 0.0
        %3034 = vmatpush.msra.mxu0 0.0
        %3035 = vmatpush.msra.mxu0 0.0
        %3036 = vmatpush.msra.mxu0 0.0
        %3037 = vmatpush.msra.mxu0 0.0
        %3038 = vmatpush.msra.mxu0 0.0
        %3039 = vmatpush.msra.mxu0 0.0
        %3040 = vmatpush.msra.mxu0 0.0
        %3041 = vmatpush.msra.mxu0 0.0
        %3042 = vmatpush.msra.mxu0 0.0
        %3043 = vmatpush.msra.mxu0 0.0
        %3044 = vmatpush.msra.mxu0 0.0
        %3045 = vmatpush.msra.mxu0 %v2398
        %3046 = vmatmul.f32.gmra.mxu0 %v3028
        %v3047 = vpop.f32.mrf.mxu0
        %v3048 = vadd.f32 0.0, %v3047
        %3049 = vdwg.mxu0
        %v3051 = vsel %vm995, %v2979, 0
        %3053 = vmatpush.msra.mxu0 0.0
        %3054 = vmatpush.msra.mxu0 0.0
        %3055 = vmatpush.msra.mxu0 0.0
        %3056 = vmatpush.msra.mxu0 0.0
        %3057 = vmatpush.msra.mxu0 0.0
        %3058 = vmatpush.msra.mxu0 0.0
        %3059 = vmatpush.msra.mxu0 0.0
        %3060 = vmatpush.msra.mxu0 0.0
        %3061 = vmatpush.msra.mxu0 0.0
        %3062 = vmatpush.msra.mxu0 0.0
        %3063 = vmatpush.msra.mxu0 0.0
        %3064 = vmatpush.msra.mxu0 0.0
        %3065 = vmatpush.msra.mxu0 0.0
        %3066 = vmatpush.msra.mxu0 0.0
        %3067 = vmatpush.msra.mxu0 0.0
        %3068 = vmatpush.msra.mxu0 %v2399
        %3069 = vmatmul.f32.gmra.mxu0 %v3051
        %v3070 = vpop.f32.mrf.mxu0
        %v3071 = vadd.f32 0.0, %v3070
        %3072 = vdwg.mxu0
        %v3073 = vsel %vm727, %v3002, 0.0
        %v3074 = vsel %vm727, %v3025, 0.0
        %v3075 = vadd.f32 %v3073, %v3074
        %v3076 = vsel %vm727, %v3048, 0.0
        %v3077 = vadd.f32 %v3075, %v3076
        %v3078 = vsel %vm727, %v3071, 0.0
        %v3079 = vadd.f32 %v3077, %v3078
        %v3081 = vperm.slane %v2401, 0
        %v3083 = vadd.f32 %v3079, %v3081
        %v3084 = vadd.f32 %v2328, %v3083
        %s3085 = scalar_lea.vmem %s10, 2
        %v3086 = vld [vmem:[%s3085] sm:$0x1]
        %s3087 = scalar_lea.vmem %s11, 2
        %v3088 = vld [vmem:[%s3087] sm:$0x1]
        %v3089 = vsel %vm727, %v3084, 0.0
        %3090 = vadd.xlane.f32.xlu0 %v3089
        %v3091 = vpop.xlane.xlu0 %3090
        %v3092 = vmul.f32 %v3091, %v1411
        %v3093 = vsub.f32 %v3084, %v3092
        %v3094 = vmul.f32 %v3093, %v3093
        %v3095 = vsel %vm727, %v3094, 0.0
        %3096 = vadd.xlane.f32.xlu0 %v3095
        %v3097 = vpop.xlane.xlu0 %3096
        %v3098 = vmul.f32 %v3097, %v1411
        %v3099 = vadd.f32 %v3098, 1e-05
        %v3100 = vrsqrt.pop %v3099
        %v3101 = vmul.f32 %v3100, %v3099
        %v3102 = vmul.f32 %v3101, %v3100
        %v3103 = vmul.f32 0.5, %v3102
        %v3104 = vsub.f32 1.5, %v3103
        %v3105 = vmul.f32 %v3100, %v3104
        %vm3106 = vweird.f32 %v3099
        %vm3107 = vweird.f32 %v3100
        %vm3108 = vmor %vm3106, %vm3107
        %v3109 = vsel %vm3108, %v3100, %v3105
        %v3110 = vmul.f32 %v3093, %v3109
        %v3112 = vperm.slane %v3086, 0
        %v3114 = vmul.f32 %v3110, %v3112
        %v3116 = vperm.slane %v3088, 0
        %v3118 = vadd.f32 %v3114, %v3116
        %s3119 = scalar_lea.vmem %s2, 384
        %v3120 = vld [vmem:[%s3119] sm:$0xff]
        %v3121 = vld [vmem:[%s3119 + $0x8] sm:$0xff]
        %v3122 = vld [vmem:[%s3119 + $0x10] sm:$0xff]
        %v3123 = vld [vmem:[%s3119 + $0x18] sm:$0xff]
        %v3124 = vld [vmem:[%s3119 + $0x20] sm:$0xff]
        %v3125 = vld [vmem:[%s3119 + $0x28] sm:$0xff]
        %v3126 = vld [vmem:[%s3119 + $0x30] sm:$0xff]
        %v3127 = vld [vmem:[%s3119 + $0x38] sm:$0xff]
        %v3128 = vld [vmem:[%s3119 + $0x40] sm:$0xff]
        %v3129 = vld [vmem:[%s3119 + $0x48] sm:$0xff]
        %v3130 = vld [vmem:[%s3119 + $0x50] sm:$0xff]
        %v3131 = vld [vmem:[%s3119 + $0x58] sm:$0xff]
        %v3132 = vld [vmem:[%s3119 + $0x60] sm:$0xff]
        %v3133 = vld [vmem:[%s3119 + $0x68] sm:$0xff]
        %v3134 = vld [vmem:[%s3119 + $0x70] sm:$0xff]
        %v3135 = vld [vmem:[%s3119 + $0x78] sm:$0xff]
        %s3136 = scalar_lea.vmem %s3, 384
        %v3137 = vld [vmem:[%s3136] sm:$0xff]
        %v3138 = vld [vmem:[%s3136 + $0x8] sm:$0xff]
        %v3139 = vld [vmem:[%s3136 + $0x10] sm:$0xff]
        %v3140 = vld [vmem:[%s3136 + $0x18] sm:$0xff]
        %v3141 = vld [vmem:[%s3136 + $0x20] sm:$0xff]
        %v3142 = vld [vmem:[%s3136 + $0x28] sm:$0xff]
        %v3143 = vld [vmem:[%s3136 + $0x30] sm:$0xff]
        %v3144 = vld [vmem:[%s3136 + $0x38] sm:$0xff]
        %v3145 = vld [vmem:[%s3136 + $0x40] sm:$0xff]
        %v3146 = vld [vmem:[%s3136 + $0x48] sm:$0xff]
        %v3147 = vld [vmem:[%s3136 + $0x50] sm:$0xff]
        %v3148 = vld [vmem:[%s3136 + $0x58] sm:$0xff]
        %v3149 = vld [vmem:[%s3136 + $0x60] sm:$0xff]
        %v3150 = vld [vmem:[%s3136 + $0x68] sm:$0xff]
        %v3151 = vld [vmem:[%s3136 + $0x70] sm:$0xff]
        %v3152 = vld [vmem:[%s3136 + $0x78] sm:$0xff]
        %s3153 = scalar_lea.vmem %s4, 384
        %v3154 = vld [vmem:[%s3153] sm:$0xff]
        %v3155 = vld [vmem:[%s3153 + $0x8] sm:$0xff]
        %v3156 = vld [vmem:[%s3153 + $0x10] sm:$0xff]
        %v3157 = vld [vmem:[%s3153 + $0x18] sm:$0xff]
        %v3158 = vld [vmem:[%s3153 + $0x20] sm:$0xff]
        %v3159 = vld [vmem:[%s3153 + $0x28] sm:$0xff]
        %v3160 = vld [vmem:[%s3153 + $0x30] sm:$0xff]
        %v3161 = vld [vmem:[%s3153 + $0x38] sm:$0xff]
        %v3162 = vld [vmem:[%s3153 + $0x40] sm:$0xff]
        %v3163 = vld [vmem:[%s3153 + $0x48] sm:$0xff]
        %v3164 = vld [vmem:[%s3153 + $0x50] sm:$0xff]
        %v3165 = vld [vmem:[%s3153 + $0x58] sm:$0xff]
        %v3166 = vld [vmem:[%s3153 + $0x60] sm:$0xff]
        %v3167 = vld [vmem:[%s3153 + $0x68] sm:$0xff]
        %v3168 = vld [vmem:[%s3153 + $0x70] sm:$0xff]
        %v3169 = vld [vmem:[%s3153 + $0x78] sm:$0xff]
        %s3170 = scalar_lea.vmem %s5, 12
        %v3171 = vld [vmem:[%s3170] sm:$0x1]
        %v3172 = vld [vmem:[%s3170 + $0x1] sm:$0x1]
        %v3173 = vld [vmem:[%s3170 + $0x2] sm:$0x1]
        %v3174 = vld [vmem:[%s3170 + $0x3] sm:$0x1]
        %s3175 = scalar_lea.vmem %s6, 12
        %v3176 = vld [vmem:[%s3175] sm:$0x1]
        %v3177 = vld [vmem:[%s3175 + $0x1] sm:$0x1]
        %v3178 = vld [vmem:[%s3175 + $0x2] sm:$0x1]
        %v3179 = vld [vmem:[%s3175 + $0x3] sm:$0x1]
        %s3180 = scalar_lea.vmem %s7, 12
        %v3181 = vld [vmem:[%s3180] sm:$0x1]
        %v3182 = vld [vmem:[%s3180 + $0x1] sm:$0x1]
        %v3183 = vld [vmem:[%s3180 + $0x2] sm:$0x1]
        %v3184 = vld [vmem:[%s3180 + $0x3] sm:$0x1]
        %s3185 = scalar_lea.vmem %s8, 96
        %v3186 = vld [vmem:[%s3185] sm:$0xff]
        %v3187 = vld [vmem:[%s3185 + $0x8] sm:$0xff]
        %v3188 = vld [vmem:[%s3185 + $0x10] sm:$0xff]
        %v3189 = vld [vmem:[%s3185 + $0x18] sm:$0xff]
        %s3190 = scalar_lea.vmem %s9, 3
        %v3191 = vld [vmem:[%s3190] sm:$0x1]
        %v3196 = vperm.slane %v3171, 0
        %v3197 = vperm.slane %v3172, 0
        %v3198 = vperm.slane %v3173, 0
        %v3199 = vperm.slane %v3174, 0
        %v3205 = vsel %vm727, %v3118, 0
        %3207 = vmatpush.msra.mxu0 0.0
        %3208 = vmatpush.msra.mxu0 0.0
        %3209 = vmatpush.msra.mxu0 0.0
        %3210 = vmatpush.msra.mxu0 0.0
        %3211 = vmatpush.msra.mxu0 0.0
        %3212 = vmatpush.msra.mxu0 0.0
        %3213 = vmatpush.msra.mxu0 0.0
        %3214 = vmatpush.msra.mxu0 0.0
        %3215 = vmatpush.msra.mxu0 0.0
        %3216 = vmatpush.msra.mxu0 0.0
        %3217 = vmatpush.msra.mxu0 0.0
        %3218 = vmatpush.msra.mxu0 0.0
        %3219 = vmatpush.msra.mxu0 %v3123
        %3220 = vmatpush.msra.mxu0 %v3122
        %3221 = vmatpush.msra.mxu0 %v3121
        %3222 = vmatpush.msra.mxu0 %v3120
        %3223 = vmatmul.f32.gmra.mxu0 %v3205
        %v3224 = vpop.f32.mrf.mxu0
        %v3225 = vadd.f32 %v3196, %v3224
        %3226 = vdwg.mxu0
        %3227 = vmatpush.msra.mxu0 0.0
        %3228 = vmatpush.msra.mxu0 0.0
        %3229 = vmatpush.msra.mxu0 0.0
        %3230 = vmatpush.msra.mxu0 0.0
        %3231 = vmatpush.msra.mxu0 0.0
        %3232 = vmatpush.msra.mxu0 0.0
        %3233 = vmatpush.msra.mxu0 0.0
        %3234 = vmatpush.msra.mxu0 0.0
        %3235 = vmatpush.msra.mxu0 0.0
        %3236 = vmatpush.msra.mxu0 0.0
        %3237 = vmatpush.msra.mxu0 0.0
        %3238 = vmatpush.msra.mxu0 0.0
        %3239 = vmatpush.msra.mxu0 %v3127
        %3240 = vmatpush.msra.mxu0 %v3126
        %3241 = vmatpush.msra.mxu0 %v3125
        %3242 = vmatpush.msra.mxu0 %v3124
        %3243 = vmatmul.f32.gmra.mxu0 %v3205
        %v3244 = vpop.f32.mrf.mxu0
        %v3245 = vadd.f32 %v3197, %v3244
        %3246 = vdwg.mxu0
        %3247 = vmatpush.msra.mxu0 0.0
        %3248 = vmatpush.msra.mxu0 0.0
        %3249 = vmatpush.msra.mxu0 0.0
        %3250 = vmatpush.msra.mxu0 0.0
        %3251 = vmatpush.msra.mxu0 0.0
        %3252 = vmatpush.msra.mxu0 0.0
        %3253 = vmatpush.msra.mxu0 0.0
        %3254 = vmatpush.msra.mxu0 0.0
        %3255 = vmatpush.msra.mxu0 0.0
        %3256 = vmatpush.msra.mxu0 0.0
        %3257 = vmatpush.msra.mxu0 0.0
        %3258 = vmatpush.msra.mxu0 0.0
        %3259 = vmatpush.msra.mxu0 %v3131
        %3260 = vmatpush.msra.mxu0 %v3130
        %3261 = vmatpush.msra.mxu0 %v3129
        %3262 = vmatpush.msra.mxu0 %v3128
        %3263 = vmatmul.f32.gmra.mxu0 %v3205
        %v3264 = vpop.f32.mrf.mxu0
        %v3265 = vadd.f32 %v3198, %v3264
        %3266 = vdwg.mxu0
        %3267 = vmatpush.msra.mxu0 0.0
        %3268 = vmatpush.msra.mxu0 0.0
        %3269 = vmatpush.msra.mxu0 0.0
        %3270 = vmatpush.msra.mxu0 0.0
        %3271 = vmatpush.msra.mxu0 0.0
        %3272 = vmatpush.msra.mxu0 0.0
        %3273 = vmatpush.msra.mxu0 0.0
        %3274 = vmatpush.msra.mxu0 0.0
        %3275 = vmatpush.msra.mxu0 0.0
        %3276 = vmatpush.msra.mxu0 0.0
        %3277 = vmatpush.msra.mxu0 0.0
        %3278 = vmatpush.msra.mxu0 0.0
        %3279 = vmatpush.msra.mxu0 %v3135
        %3280 = vmatpush.msra.mxu0 %v3134
        %3281 = vmatpush.msra.mxu0 %v3133
        %3282 = vmatpush.msra.mxu0 %v3132
        %3283 = vmatmul.f32.gmra.mxu0 %v3205
        %v3284 = vpop.f32.mrf.mxu0
        %v3285 = vadd.f32 %v3199, %v3284
        %3286 = vdwg.mxu0
        %v3291 = vperm.slane %v3176, 0
        %v3292 = vperm.slane %v3177, 0
        %v3293 = vperm.slane %v3178, 0
        %v3294 = vperm.slane %v3179, 0
        %3299 = vmatpush.msra.mxu0 0.0
        %3300 = vmatpush.msra.mxu0 0.0
        %3301 = vmatpush.msra.mxu0 0.0
        %3302 = vmatpush.msra.mxu0 0.0
        %3303 = vmatpush.msra.mxu0 0.0
        %3304 = vmatpush.msra.mxu0 0.0
        %3305 = vmatpush.msra.mxu0 0.0
        %3306 = vmatpush.msra.mxu0 0.0
        %3307 = vmatpush.msra.mxu0 0.0
        %3308 = vmatpush.msra.mxu0 0.0
        %3309 = vmatpush.msra.mxu0 0.0
        %3310 = vmatpush.msra.mxu0 0.0
        %3311 = vmatpush.msra.mxu0 %v3140
        %3312 = vmatpush.msra.mxu0 %v3139
        %3313 = vmatpush.msra.mxu0 %v3138
        %3314 = vmatpush.msra.mxu0 %v3137
        %3315 = vmatmul.f32.gmra.mxu0 %v1620
        %v3316 = vpop.f32.mrf.mxu0
        %v3317 = vadd.f32 %v3291, %v3316
        %3318 = vdwg.mxu0
        %3319 = vmatpush.msra.mxu0 0.0
        %3320 = vmatpush.msra.mxu0 0.0
        %3321 = vmatpush.msra.mxu0 0.0
        %3322 = vmatpush.msra.mxu0 0.0
        %3323 = vmatpush.msra.mxu0 0.0
        %3324 = vmatpush.msra.mxu0 0.0
        %3325 = vmatpush.msra.mxu0 0.0
        %3326 = vmatpush.msra.mxu0 0.0
        %3327 = vmatpush.msra.mxu0 0.0
        %3328 = vmatpush.msra.mxu0 0.0
        %3329 = vmatpush.msra.mxu0 0.0
        %3330 = vmatpush.msra.mxu0 0.0
        %3331 = vmatpush.msra.mxu0 %v3144
        %3332 = vmatpush.msra.mxu0 %v3143
        %3333 = vmatpush.msra.mxu0 %v3142
        %3334 = vmatpush.msra.mxu0 %v3141
        %3335 = vmatmul.f32.gmra.mxu0 %v1620
        %v3336 = vpop.f32.mrf.mxu0
        %v3337 = vadd.f32 %v3292, %v3336
        %3338 = vdwg.mxu0
        %3339 = vmatpush.msra.mxu0 0.0
        %3340 = vmatpush.msra.mxu0 0.0
        %3341 = vmatpush.msra.mxu0 0.0
        %3342 = vmatpush.msra.mxu0 0.0
        %3343 = vmatpush.msra.mxu0 0.0
        %3344 = vmatpush.msra.mxu0 0.0
        %3345 = vmatpush.msra.mxu0 0.0
        %3346 = vmatpush.msra.mxu0 0.0
        %3347 = vmatpush.msra.mxu0 0.0
        %3348 = vmatpush.msra.mxu0 0.0
        %3349 = vmatpush.msra.mxu0 0.0
        %3350 = vmatpush.msra.mxu0 0.0
        %3351 = vmatpush.msra.mxu0 %v3148
        %3352 = vmatpush.msra.mxu0 %v3147
        %3353 = vmatpush.msra.mxu0 %v3146
        %3354 = vmatpush.msra.mxu0 %v3145
        %3355 = vmatmul.f32.gmra.mxu0 %v1620
        %v3356 = vpop.f32.mrf.mxu0
        %v3357 = vadd.f32 %v3293, %v3356
        %3358 = vdwg.mxu0
        %3359 = vmatpush.msra.mxu0 0.0
        %3360 = vmatpush.msra.mxu0 0.0
        %3361 = vmatpush.msra.mxu0 0.0
        %3362 = vmatpush.msra.mxu0 0.0
        %3363 = vmatpush.msra.mxu0 0.0
        %3364 = vmatpush.msra.mxu0 0.0
        %3365 = vmatpush.msra.mxu0 0.0
        %3366 = vmatpush.msra.mxu0 0.0
        %3367 = vmatpush.msra.mxu0 0.0
        %3368 = vmatpush.msra.mxu0 0.0
        %3369 = vmatpush.msra.mxu0 0.0
        %3370 = vmatpush.msra.mxu0 0.0
        %3371 = vmatpush.msra.mxu0 %v3152
        %3372 = vmatpush.msra.mxu0 %v3151
        %3373 = vmatpush.msra.mxu0 %v3150
        %3374 = vmatpush.msra.mxu0 %v3149
        %3375 = vmatmul.f32.gmra.mxu0 %v1620
        %v3376 = vpop.f32.mrf.mxu0
        %v3377 = vadd.f32 %v3294, %v3376
        %3378 = vdwg.mxu0
        %v3383 = vperm.slane %v3181, 0
        %v3384 = vperm.slane %v3182, 0
        %v3385 = vperm.slane %v3183, 0
        %v3386 = vperm.slane %v3184, 0
        %3391 = vmatpush.msra.mxu0 0.0
        %3392 = vmatpush.msra.mxu0 0.0
        %3393 = vmatpush.msra.mxu0 0.0
        %3394 = vmatpush.msra.mxu0 0.0
        %3395 = vmatpush.msra.mxu0 0.0
        %3396 = vmatpush.msra.mxu0 0.0
        %3397 = vmatpush.msra.mxu0 0.0
        %3398 = vmatpush.msra.mxu0 0.0
        %3399 = vmatpush.msra.mxu0 0.0
        %3400 = vmatpush.msra.mxu0 0.0
        %3401 = vmatpush.msra.mxu0 0.0
        %3402 = vmatpush.msra.mxu0 0.0
        %3403 = vmatpush.msra.mxu0 %v3157
        %3404 = vmatpush.msra.mxu0 %v3156
        %3405 = vmatpush.msra.mxu0 %v3155
        %3406 = vmatpush.msra.mxu0 %v3154
        %3407 = vmatmul.f32.gmra.mxu0 %v1620
        %v3408 = vpop.f32.mrf.mxu0
        %v3409 = vadd.f32 %v3383, %v3408
        %3410 = vdwg.mxu0
        %3411 = vmatpush.msra.mxu0 0.0
        %3412 = vmatpush.msra.mxu0 0.0
        %3413 = vmatpush.msra.mxu0 0.0
        %3414 = vmatpush.msra.mxu0 0.0
        %3415 = vmatpush.msra.mxu0 0.0
        %3416 = vmatpush.msra.mxu0 0.0
        %3417 = vmatpush.msra.mxu0 0.0
        %3418 = vmatpush.msra.mxu0 0.0
        %3419 = vmatpush.msra.mxu0 0.0
        %3420 = vmatpush.msra.mxu0 0.0
        %3421 = vmatpush.msra.mxu0 0.0
        %3422 = vmatpush.msra.mxu0 0.0
        %3423 = vmatpush.msra.mxu0 %v3161
        %3424 = vmatpush.msra.mxu0 %v3160
        %3425 = vmatpush.msra.mxu0 %v3159
        %3426 = vmatpush.msra.mxu0 %v3158
        %3427 = vmatmul.f32.gmra.mxu0 %v1620
        %v3428 = vpop.f32.mrf.mxu0
        %v3429 = vadd.f32 %v3384, %v3428
        %3430 = vdwg.mxu0
        %3431 = vmatpush.msra.mxu0 0.0
        %3432 = vmatpush.msra.mxu0 0.0
        %3433 = vmatpush.msra.mxu0 0.0
        %3434 = vmatpush.msra.mxu0 0.0
        %3435 = vmatpush.msra.mxu0 0.0
        %3436 = vmatpush.msra.mxu0 0.0
        %3437 = vmatpush.msra.mxu0 0.0
        %3438 = vmatpush.msra.mxu0 0.0
        %3439 = vmatpush.msra.mxu0 0.0
        %3440 = vmatpush.msra.mxu0 0.0
        %3441 = vmatpush.msra.mxu0 0.0
        %3442 = vmatpush.msra.mxu0 0.0
        %3443 = vmatpush.msra.mxu0 %v3165
        %3444 = vmatpush.msra.mxu0 %v3164
        %3445 = vmatpush.msra.mxu0 %v3163
        %3446 = vmatpush.msra.mxu0 %v3162
        %3447 = vmatmul.f32.gmra.mxu0 %v1620
        %v3448 = vpop.f32.mrf.mxu0
        %v3449 = vadd.f32 %v3385, %v3448
        %3450 = vdwg.mxu0
        %3451 = vmatpush.msra.mxu0 0.0
        %3452 = vmatpush.msra.mxu0 0.0
        %3453 = vmatpush.msra.mxu0 0.0
        %3454 = vmatpush.msra.mxu0 0.0
        %3455 = vmatpush.msra.mxu0 0.0
        %3456 = vmatpush.msra.mxu0 0.0
        %3457 = vmatpush.msra.mxu0 0.0
        %3458 = vmatpush.msra.mxu0 0.0
        %3459 = vmatpush.msra.mxu0 0.0
        %3460 = vmatpush.msra.mxu0 0.0
        %3461 = vmatpush.msra.mxu0 0.0
        %3462 = vmatpush.msra.mxu0 0.0
        %3463 = vmatpush.msra.mxu0 %v3169
        %3464 = vmatpush.msra.mxu0 %v3168
        %3465 = vmatpush.msra.mxu0 %v3167
        %3466 = vmatpush.msra.mxu0 %v3166
        %3467 = vmatmul.f32.gmra.mxu0 %v1620
        %v3468 = vpop.f32.mrf.mxu0
        %v3469 = vadd.f32 %v3386, %v3468
        %3470 = vdwg.mxu0
        %v3472 = vsel %vm995, %v3225, 0
        %v3475 = vsel %vm995, %v3317, 0
        %3477 = vmatpush.xpose.msra.mxu0 0.0
        %3478 = vmatpush.xpose.msra.mxu0 0.0
        %3479 = vmatpush.xpose.msra.mxu0 0.0
        %3480 = vmatpush.xpose.msra.mxu0 0.0
        %3481 = vmatpush.xpose.msra.mxu0 0.0
        %3482 = vmatpush.xpose.msra.mxu0 0.0
        %3483 = vmatpush.xpose.msra.mxu0 0.0
        %3484 = vmatpush.xpose.msra.mxu0 0.0
        %3485 = vmatpush.xpose.msra.mxu0 0.0
        %3486 = vmatpush.xpose.msra.mxu0 0.0
        %3487 = vmatpush.xpose.msra.mxu0 0.0
        %3488 = vmatpush.xpose.msra.mxu0 0.0
        %3489 = vmatpush.xpose.msra.mxu0 0.0
        %3490 = vmatpush.xpose.msra.mxu0 0.0
        %3491 = vmatpush.xpose.msra.mxu0 0.0
        %3492 = vmatpush.xpose.msra.mxu0 %v3475
        %3493 = vmatmul.f32.gmra.mxu0 %v3472
        %v3494 = vpop.f32.mrf.mxu0
        %v3495 = vadd.f32 0.0, %v3494
        %3496 = vdwg.mxu0
        %v3498 = vsel %vm995, %v3245, 0
        %v3501 = vsel %vm995, %v3337, 0
        %3503 = vmatpush.xpose.msra.mxu0 0.0
        %3504 = vmatpush.xpose.msra.mxu0 0.0
        %3505 = vmatpush.xpose.msra.mxu0 0.0
        %3506 = vmatpush.xpose.msra.mxu0 0.0
        %3507 = vmatpush.xpose.msra.mxu0 0.0
        %3508 = vmatpush.xpose.msra.mxu0 0.0
        %3509 = vmatpush.xpose.msra.mxu0 0.0
        %3510 = vmatpush.xpose.msra.mxu0 0.0
        %3511 = vmatpush.xpose.msra.mxu0 0.0
        %3512 = vmatpush.xpose.msra.mxu0 0.0
        %3513 = vmatpush.xpose.msra.mxu0 0.0
        %3514 = vmatpush.xpose.msra.mxu0 0.0
        %3515 = vmatpush.xpose.msra.mxu0 0.0
        %3516 = vmatpush.xpose.msra.mxu0 0.0
        %3517 = vmatpush.xpose.msra.mxu0 0.0
        %3518 = vmatpush.xpose.msra.mxu0 %v3501
        %3519 = vmatmul.f32.gmra.mxu0 %v3498
        %v3520 = vpop.f32.mrf.mxu0
        %v3521 = vadd.f32 0.0, %v3520
        %3522 = vdwg.mxu0
        %v3524 = vsel %vm995, %v3265, 0
        %v3527 = vsel %vm995, %v3357, 0
        %3529 = vmatpush.xpose.msra.mxu0 0.0
        %3530 = vmatpush.xpose.msra.mxu0 0.0
        %3531 = vmatpush.xpose.msra.mxu0 0.0
        %3532 = vmatpush.xpose.msra.mxu0 0.0
        %3533 = vmatpush.xpose.msra.mxu0 0.0
        %3534 = vmatpush.xpose.msra.mxu0 0.0
        %3535 = vmatpush.xpose.msra.mxu0 0.0
        %3536 = vmatpush.xpose.msra.mxu0 0.0
        %3537 = vmatpush.xpose.msra.mxu0 0.0
        %3538 = vmatpush.xpose.msra.mxu0 0.0
        %3539 = vmatpush.xpose.msra.mxu0 0.0
        %3540 = vmatpush.xpose.msra.mxu0 0.0
        %3541 = vmatpush.xpose.msra.mxu0 0.0
        %3542 = vmatpush.xpose.msra.mxu0 0.0
        %3543 = vmatpush.xpose.msra.mxu0 0.0
        %3544 = vmatpush.xpose.msra.mxu0 %v3527
        %3545 = vmatmul.f32.gmra.mxu0 %v3524
        %v3546 = vpop.f32.mrf.mxu0
        %v3547 = vadd.f32 0.0, %v3546
        %3548 = vdwg.mxu0
        %v3550 = vsel %vm995, %v3285, 0
        %v3553 = vsel %vm995, %v3377, 0
        %3555 = vmatpush.xpose.msra.mxu0 0.0
        %3556 = vmatpush.xpose.msra.mxu0 0.0
        %3557 = vmatpush.xpose.msra.mxu0 0.0
        %3558 = vmatpush.xpose.msra.mxu0 0.0
        %3559 = vmatpush.xpose.msra.mxu0 0.0
        %3560 = vmatpush.xpose.msra.mxu0 0.0
        %3561 = vmatpush.xpose.msra.mxu0 0.0
        %3562 = vmatpush.xpose.msra.mxu0 0.0
        %3563 = vmatpush.xpose.msra.mxu0 0.0
        %3564 = vmatpush.xpose.msra.mxu0 0.0
        %3565 = vmatpush.xpose.msra.mxu0 0.0
        %3566 = vmatpush.xpose.msra.mxu0 0.0
        %3567 = vmatpush.xpose.msra.mxu0 0.0
        %3568 = vmatpush.xpose.msra.mxu0 0.0
        %3569 = vmatpush.xpose.msra.mxu0 0.0
        %3570 = vmatpush.xpose.msra.mxu0 %v3553
        %3571 = vmatmul.f32.gmra.mxu0 %v3550
        %v3572 = vpop.f32.mrf.mxu0
        %v3573 = vadd.f32 0.0, %v3572
        %3574 = vdwg.mxu0
        %v3575 = vmul.f32 %v3495, 0.35355338
        %v3576 = vmul.f32 %v3521, 0.35355338
        %v3577 = vmul.f32 %v3547, 0.35355338
        %v3578 = vmul.f32 %v3573, 0.35355338
        %v3579 = vsel %vm995, %v3575, -inf
        %3580 = vmax.xlane.f32.xlu0 %v3579
        %v3581 = vpop.xlane.xlu0 %3580
        %v3582 = vsel %vm995, %v3576, -inf
        %3583 = vmax.xlane.f32.xlu0 %v3582
        %v3584 = vpop.xlane.xlu0 %3583
        %v3585 = vsel %vm995, %v3577, -inf
        %3586 = vmax.xlane.f32.xlu0 %v3585
        %v3587 = vpop.xlane.xlu0 %3586
        %v3588 = vsel %vm995, %v3578, -inf
        %3589 = vmax.xlane.f32.xlu0 %v3588
        %v3590 = vpop.xlane.xlu0 %3589
        %v3591 = vsub.f32 %v3575, %v3581
        %v3592 = vsub.f32 %v3576, %v3584
        %v3593 = vsub.f32 %v3577, %v3587
        %v3594 = vsub.f32 %v3578, %v3590
        %v3595 = vmul.f32 %v3591, 1.442695
        %v3596 = vpow.pop %v3595
        %v3597 = vmul.f32 %v3592, 1.442695
        %v3598 = vpow.pop %v3597
        %v3599 = vmul.f32 %v3593, 1.442695
        %v3600 = vpow.pop %v3599
        %v3601 = vmul.f32 %v3594, 1.442695
        %v3602 = vpow.pop %v3601
        %v3603 = vsel %vm995, %v3596, 0.0
        %3604 = vadd.xlane.f32.xlu0 %v3603
        %v3605 = vpop.xlane.xlu0 %3604
        %v3606 = vsel %vm995, %v3598, 0.0
        %3607 = vadd.xlane.f32.xlu0 %v3606
        %v3608 = vpop.xlane.xlu0 %3607
        %v3609 = vsel %vm995, %v3600, 0.0
        %3610 = vadd.xlane.f32.xlu0 %v3609
        %v3611 = vpop.xlane.xlu0 %3610
        %v3612 = vsel %vm995, %v3602, 0.0
        %3613 = vadd.xlane.f32.xlu0 %v3612
        %v3614 = vpop.xlane.xlu0 %3613
        %v3615 = vrcp.pop %v3605
        %v3616 = vmul.f32 %v3605, %v3615
        %v3617 = vsub.f32 1.0, %v3616
        %v3618 = vmul.f32 %v3615, %v3617
        %v3619 = vadd.f32 %v3615, %v3618
        %vm3620 = vweird.f32 %v3605
        %vm3621 = vweird.f32 %v3615
        %vm3622 = vmor %vm3620, %vm3621
        %v3623 = vsel %vm3622, %v3615, %v3619
        %v3624 = vand.u32 2147483647, %v3605
        %vm3625 = vcmp.eq.f32.partialorder %v3624, 8.507059e+37
        %v3626 = vand.u32 %v3605, 2147483648
        %v3627 = vor.u32 1.1754944e-38, %v3626
        %v3628 = vsel %vm3625, %v3627, %v3623
        %v3629 = vmul.f32 %v3596, %v3628
        %v3630 = vrcp.pop %v3608
        %v3631 = vmul.f32 %v3608, %v3630
        %v3632 = vsub.f32 1.0, %v3631
        %v3633 = vmul.f32 %v3630, %v3632
        %v3634 = vadd.f32 %v3630, %v3633
        %vm3635 = vweird.f32 %v3608
        %vm3636 = vweird.f32 %v3630
        %vm3637 = vmor %vm3635, %vm3636
        %v3638 = vsel %vm3637, %v3630, %v3634
        %v3639 = vand.u32 2147483647, %v3608
        %vm3640 = vcmp.eq.f32.partialorder %v3639, 8.507059e+37
        %v3641 = vand.u32 %v3608, 2147483648
        %v3642 = vor.u32 1.1754944e-38, %v3641
        %v3643 = vsel %vm3640, %v3642, %v3638
        %v3644 = vmul.f32 %v3598, %v3643
        %v3645 = vrcp.pop %v3611
        %v3646 = vmul.f32 %v3611, %v3645
        %v3647 = vsub.f32 1.0, %v3646
        %v3648 = vmul.f32 %v3645, %v3647
        %v3649 = vadd.f32 %v3645, %v3648
        %vm3650 = vweird.f32 %v3611
        %vm3651 = vweird.f32 %v3645
        %vm3652 = vmor %vm3650, %vm3651
        %v3653 = vsel %vm3652, %v3645, %v3649
        %v3654 = vand.u32 2147483647, %v3611
        %vm3655 = vcmp.eq.f32.partialorder %v3654, 8.507059e+37
        %v3656 = vand.u32 %v3611, 2147483648
        %v3657 = vor.u32 1.1754944e-38, %v3656
        %v3658 = vsel %vm3655, %v3657, %v3653
        %v3659 = vmul.f32 %v3600, %v3658
        %v3660 = vrcp.pop %v3614
        %v3661 = vmul.f32 %v3614, %v3660
        %v3662 = vsub.f32 1.0, %v3661
        %v3663 = vmul.f32 %v3660, %v3662
        %v3664 = vadd.f32 %v3660, %v3663
        %vm3665 = vweird.f32 %v3614
        %vm3666 = vweird.f32 %v3660
        %vm3667 = vmor %vm3665, %vm3666
        %v3668 = vsel %vm3667, %v3660, %v3664
        %v3669 = vand.u32 2147483647, %v3614
        %vm3670 = vcmp.eq.f32.partialorder %v3669, 8.507059e+37
        %v3671 = vand.u32 %v3614, 2147483648
        %v3672 = vor.u32 1.1754944e-38, %v3671
        %v3673 = vsel %vm3670, %v3672, %v3668
        %v3674 = vmul.f32 %v3602, %v3673
        %v3676 = vsel %vm995, %v3629, 0
        %3678 = vmatpush.msra.mxu0 0.0
        %3679 = vmatpush.msra.mxu0 0.0
        %3680 = vmatpush.msra.mxu0 0.0
        %3681 = vmatpush.msra.mxu0 0.0
        %3682 = vmatpush.msra.mxu0 0.0
        %3683 = vmatpush.msra.mxu0 0.0
        %3684 = vmatpush.msra.mxu0 0.0
        %3685 = vmatpush.msra.mxu0 0.0
        %3686 = vmatpush.msra.mxu0 0.0
        %3687 = vmatpush.msra.mxu0 0.0
        %3688 = vmatpush.msra.mxu0 0.0
        %3689 = vmatpush.msra.mxu0 0.0
        %3690 = vmatpush.msra.mxu0 0.0
        %3691 = vmatpush.msra.mxu0 0.0
        %3692 = vmatpush.msra.mxu0 0.0
        %3693 = vmatpush.msra.mxu0 %v3409
        %3694 = vmatmul.f32.gmra.mxu0 %v3676
        %v3695 = vpop.f32.mrf.mxu0
        %v3696 = vadd.f32 0.0, %v3695
        %3697 = vdwg.mxu0
        %v3699 = vsel %vm995, %v3644, 0
        %3701 = vmatpush.msra.mxu0 0.0
        %3702 = vmatpush.msra.mxu0 0.0
        %3703 = vmatpush.msra.mxu0 0.0
        %3704 = vmatpush.msra.mxu0 0.0
        %3705 = vmatpush.msra.mxu0 0.0
        %3706 = vmatpush.msra.mxu0 0.0
        %3707 = vmatpush.msra.mxu0 0.0
        %3708 = vmatpush.msra.mxu0 0.0
        %3709 = vmatpush.msra.mxu0 0.0
        %3710 = vmatpush.msra.mxu0 0.0
        %3711 = vmatpush.msra.mxu0 0.0
        %3712 = vmatpush.msra.mxu0 0.0
        %3713 = vmatpush.msra.mxu0 0.0
        %3714 = vmatpush.msra.mxu0 0.0
        %3715 = vmatpush.msra.mxu0 0.0
        %3716 = vmatpush.msra.mxu0 %v3429
        %3717 = vmatmul.f32.gmra.mxu0 %v3699
        %v3718 = vpop.f32.mrf.mxu0
        %v3719 = vadd.f32 0.0, %v3718
        %3720 = vdwg.mxu0
        %v3722 = vsel %vm995, %v3659, 0
        %3724 = vmatpush.msra.mxu0 0.0
        %3725 = vmatpush.msra.mxu0 0.0
        %3726 = vmatpush.msra.mxu0 0.0
        %3727 = vmatpush.msra.mxu0 0.0
        %3728 = vmatpush.msra.mxu0 0.0
        %3729 = vmatpush.msra.mxu0 0.0
        %3730 = vmatpush.msra.mxu0 0.0
        %3731 = vmatpush.msra.mxu0 0.0
        %3732 = vmatpush.msra.mxu0 0.0
        %3733 = vmatpush.msra.mxu0 0.0
        %3734 = vmatpush.msra.mxu0 0.0
        %3735 = vmatpush.msra.mxu0 0.0
        %3736 = vmatpush.msra.mxu0 0.0
        %3737 = vmatpush.msra.mxu0 0.0
        %3738 = vmatpush.msra.mxu0 0.0
        %3739 = vmatpush.msra.mxu0 %v3449
        %3740 = vmatmul.f32.gmra.mxu0 %v3722
        %v3741 = vpop.f32.mrf.mxu0
        %v3742 = vadd.f32 0.0, %v3741
        %3743 = vdwg.mxu0
        %v3745 = vsel %vm995, %v3674, 0
        %3747 = vmatpush.msra.mxu0 0.0
        %3748 = vmatpush.msra.mxu0 0.0
        %3749 = vmatpush.msra.mxu0 0.0
        %3750 = vmatpush.msra.mxu0 0.0
        %3751 = vmatpush.msra.mxu0 0.0
        %3752 = vmatpush.msra.mxu0 0.0
        %3753 = vmatpush.msra.mxu0 0.0
        %3754 = vmatpush.msra.mxu0 0.0
        %3755 = vmatpush.msra.mxu0 0.0
        %3756 = vmatpush.msra.mxu0 0.0
        %3757 = vmatpush.msra.mxu0 0.0
        %3758 = vmatpush.msra.mxu0 0.0
        %3759 = vmatpush.msra.mxu0 0.0
        %3760 = vmatpush.msra.mxu0 0.0
        %3761 = vmatpush.msra.mxu0 0.0
        %3762 = vmatpush.msra.mxu0 %v3469
        %3763 = vmatmul.f32.gmra.mxu0 %v3745
        %v3764 = vpop.f32.mrf.mxu0
        %v3765 = vadd.f32 0.0, %v3764
        %3766 = vdwg.mxu0
        %v3768 = vsel %vm995, %v3696, 0
        %3770 = vmatpush.msra.mxu0 0.0
        %3771 = vmatpush.msra.mxu0 0.0
        %3772 = vmatpush.msra.mxu0 0.0
        %3773 = vmatpush.msra.mxu0 0.0
        %3774 = vmatpush.msra.mxu0 0.0
        %3775 = vmatpush.msra.mxu0 0.0
        %3776 = vmatpush.msra.mxu0 0.0
        %3777 = vmatpush.msra.mxu0 0.0
        %3778 = vmatpush.msra.mxu0 0.0
        %3779 = vmatpush.msra.mxu0 0.0
        %3780 = vmatpush.msra.mxu0 0.0
        %3781 = vmatpush.msra.mxu0 0.0
        %3782 = vmatpush.msra.mxu0 0.0
        %3783 = vmatpush.msra.mxu0 0.0
        %3784 = vmatpush.msra.mxu0 0.0
        %3785 = vmatpush.msra.mxu0 %v3186
        %3786 = vmatmul.f32.gmra.mxu0 %v3768
        %v3787 = vpop.f32.mrf.mxu0
        %v3788 = vadd.f32 0.0, %v3787
        %3789 = vdwg.mxu0
        %v3791 = vsel %vm995, %v3719, 0
        %3793 = vmatpush.msra.mxu0 0.0
        %3794 = vmatpush.msra.mxu0 0.0
        %3795 = vmatpush.msra.mxu0 0.0
        %3796 = vmatpush.msra.mxu0 0.0
        %3797 = vmatpush.msra.mxu0 0.0
        %3798 = vmatpush.msra.mxu0 0.0
        %3799 = vmatpush.msra.mxu0 0.0
        %3800 = vmatpush.msra.mxu0 0.0
        %3801 = vmatpush.msra.mxu0 0.0
        %3802 = vmatpush.msra.mxu0 0.0
        %3803 = vmatpush.msra.mxu0 0.0
        %3804 = vmatpush.msra.mxu0 0.0
        %3805 = vmatpush.msra.mxu0 0.0
        %3806 = vmatpush.msra.mxu0 0.0
        %3807 = vmatpush.msra.mxu0 0.0
        %3808 = vmatpush.msra.mxu0 %v3187
        %3809 = vmatmul.f32.gmra.mxu0 %v3791
        %v3810 = vpop.f32.mrf.mxu0
        %v3811 = vadd.f32 0.0, %v3810
        %3812 = vdwg.mxu0
        %v3814 = vsel %vm995, %v3742, 0
        %3816 = vmatpush.msra.mxu0 0.0
        %3817 = vmatpush.msra.mxu0 0.0
        %3818 = vmatpush.msra.mxu0 0.0
        %3819 = vmatpush.msra.mxu0 0.0
        %3820 = vmatpush.msra.mxu0 0.0
        %3821 = vmatpush.msra.mxu0 0.0
        %3822 = vmatpush.msra.mxu0 0.0
        %3823 = vmatpush.msra.mxu0 0.0
        %3824 = vmatpush.msra.mxu0 0.0
        %3825 = vmatpush.msra.mxu0 0.0
        %3826 = vmatpush.msra.mxu0 0.0
        %3827 = vmatpush.msra.mxu0 0.0
        %3828 = vmatpush.msra.mxu0 0.0
        %3829 = vmatpush.msra.mxu0 0.0
        %3830 = vmatpush.msra.mxu0 0.0
        %3831 = vmatpush.msra.mxu0 %v3188
        %3832 = vmatmul.f32.gmra.mxu0 %v3814
        %v3833 = vpop.f32.mrf.mxu0
        %v3834 = vadd.f32 0.0, %v3833
        %3835 = vdwg.mxu0
        %v3837 = vsel %vm995, %v3765, 0
        %3839 = vmatpush.msra.mxu0 0.0
        %3840 = vmatpush.msra.mxu0 0.0
        %3841 = vmatpush.msra.mxu0 0.0
        %3842 = vmatpush.msra.mxu0 0.0
        %3843 = vmatpush.msra.mxu0 0.0
        %3844 = vmatpush.msra.mxu0 0.0
        %3845 = vmatpush.msra.mxu0 0.0
        %3846 = vmatpush.msra.mxu0 0.0
        %3847 = vmatpush.msra.mxu0 0.0
        %3848 = vmatpush.msra.mxu0 0.0
        %3849 = vmatpush.msra.mxu0 0.0
        %3850 = vmatpush.msra.mxu0 0.0
        %3851 = vmatpush.msra.mxu0 0.0
        %3852 = vmatpush.msra.mxu0 0.0
        %3853 = vmatpush.msra.mxu0 0.0
        %3854 = vmatpush.msra.mxu0 %v3189
        %3855 = vmatmul.f32.gmra.mxu0 %v3837
        %v3856 = vpop.f32.mrf.mxu0
        %v3857 = vadd.f32 0.0, %v3856
        %3858 = vdwg.mxu0
        %v3859 = vsel %vm727, %v3788, 0.0
        %v3860 = vsel %vm727, %v3811, 0.0
        %v3861 = vadd.f32 %v3859, %v3860
        %v3862 = vsel %vm727, %v3834, 0.0
        %v3863 = vadd.f32 %v3861, %v3862
        %v3864 = vsel %vm727, %v3857, 0.0
        %v3865 = vadd.f32 %v3863, %v3864
        %v3867 = vperm.slane %v3191, 0
        %v3869 = vadd.f32 %v3865, %v3867
        %v3870 = vadd.f32 %v3118, %v3869
        %s3871 = scalar_lea.vmem %s10, 3
        %v3872 = vld [vmem:[%s3871] sm:$0x1]
        %s3873 = scalar_lea.vmem %s11, 3
        %v3874 = vld [vmem:[%s3873] sm:$0x1]
        %v3875 = vsel %vm727, %v3870, 0.0
        %3876 = vadd.xlane.f32.xlu0 %v3875
        %v3877 = vpop.xlane.xlu0 %3876
        %v3878 = vmul.f32 %v3877, %v1411
        %v3879 = vsub.f32 %v3870, %v3878
        %v3880 = vmul.f32 %v3879, %v3879
        %v3881 = vsel %vm727, %v3880, 0.0
        %3882 = vadd.xlane.f32.xlu0 %v3881
        %v3883 = vpop.xlane.xlu0 %3882
        %v3884 = vmul.f32 %v3883, %v1411
        %v3885 = vadd.f32 %v3884, 1e-05
        %v3886 = vrsqrt.pop %v3885
        %v3887 = vmul.f32 %v3886, %v3885
        %v3888 = vmul.f32 %v3887, %v3886
        %v3889 = vmul.f32 0.5, %v3888
        %v3890 = vsub.f32 1.5, %v3889
        %v3891 = vmul.f32 %v3886, %v3890
        %vm3892 = vweird.f32 %v3885
        %vm3893 = vweird.f32 %v3886
        %vm3894 = vmor %vm3892, %vm3893
        %v3895 = vsel %vm3894, %v3886, %v3891
        %v3896 = vmul.f32 %v3879, %v3895
        %v3898 = vperm.slane %v3872, 0
        %v3900 = vmul.f32 %v3896, %v3898
        %v3902 = vperm.slane %v3874, 0
        %v3904 = vadd.f32 %v3900, %v3902
        %s3905 = scalar_lea.vmem %s12, 32
        %v3906 = vld [vmem:[%s3905] sm:$0xff]
        %v3907 = vld [vmem:[%s3905 + $0x8] sm:$0xff]
        %v3908 = vld [vmem:[%s3905 + $0x10] sm:$0xff]
        %v3909 = vld [vmem:[%s3905 + $0x18] sm:$0xff]
        %s3910 = scalar_lea.vmem %s13, 1
        %v3911 = vld [vmem:[%s3910] sm:$0x1]
        %v3913 = vperm.slane %v3911, 0
        %v3916 = vsel %vm727, %v3904, 0
        %3918 = vmatpush.msra.mxu0 0.0
        %3919 = vmatpush.msra.mxu0 0.0
        %3920 = vmatpush.msra.mxu0 0.0
        %3921 = vmatpush.msra.mxu0 0.0
        %3922 = vmatpush.msra.mxu0 0.0
        %3923 = vmatpush.msra.mxu0 0.0
        %3924 = vmatpush.msra.mxu0 0.0
        %3925 = vmatpush.msra.mxu0 0.0
        %3926 = vmatpush.msra.mxu0 0.0
        %3927 = vmatpush.msra.mxu0 0.0
        %3928 = vmatpush.msra.mxu0 0.0
        %3929 = vmatpush.msra.mxu0 0.0
        %3930 = vmatpush.msra.mxu0 %v3909
        %3931 = vmatpush.msra.mxu0 %v3908
        %3932 = vmatpush.msra.mxu0 %v3907
        %3933 = vmatpush.msra.mxu0 %v3906
        %3934 = vmatmul.f32.gmra.mxu0 %v3916
        %v3935 = vpop.f32.mrf.mxu0
        %v3936 = vadd.f32 %v3913, %v3935
        %3937 = vdwg.mxu0
        %v3938 = vmax.f32 %v3936, 0.0
        %s3939 = scalar_lea.vmem %s14, 64
        %v3940 = vld [vmem:[%s3939] sm:$0xff]
        %v3941 = vld [vmem:[%s3939 + $0x8] sm:$0xff]
        %v3942 = vld [vmem:[%s3939 + $0x10] sm:$0xff]
        %v3943 = vld [vmem:[%s3939 + $0x18] sm:$0xff]
        %v3944 = vld [vmem:[%s3939 + $0x20] sm:$0xff]
        %v3945 = vld [vmem:[%s3939 + $0x28] sm:$0xff]
        %v3946 = vld [vmem:[%s3939 + $0x30] sm:$0xff]
        %v3947 = vld [vmem:[%s3939 + $0x38] sm:$0xff]
        %s3948 = scalar_lea.vmem %s15, 1
        %v3949 = vld [vmem:[%s3948] sm:$0x1]
        %v3951 = vperm.slane %v3949, 0
        %v3954 = vsel %vm2272, %v3938, 0
        %3956 = vmatpush.msra.mxu0 0.0
        %3957 = vmatpush.msra.mxu0 0.0
        %3958 = vmatpush.msra.mxu0 0.0
        %3959 = vmatpush.msra.mxu0 0.0
        %3960 = vmatpush.msra.mxu0 0.0
        %3961 = vmatpush.msra.mxu0 0.0
        %3962 = vmatpush.msra.mxu0 0.0
        %3963 = vmatpush.msra.mxu0 0.0
        %3964 = vmatpush.msra.mxu0 %v3947
        %3965 = vmatpush.msra.mxu0 %v3946
        %3966 = vmatpush.msra.mxu0 %v3945
        %3967 = vmatpush.msra.mxu0 %v3944
        %3968 = vmatpush.msra.mxu0 %v3943
        %3969 = vmatpush.msra.mxu0 %v3942
        %3970 = vmatpush.msra.mxu0 %v3941
        %3971 = vmatpush.msra.mxu0 %v3940
        %3972 = vmatmul.f32.gmra.mxu0 %v3954
        %v3973 = vpop.f32.mrf.mxu0
        %v3974 = vadd.f32 %v3951, %v3973
        %3975 = vdwg.mxu0
        %v3976 = vadd.f32 %v3904, %v3974
        %s3977 = scalar_lea.vmem %s16, 1
        %v3978 = vld [vmem:[%s3977] sm:$0x1]
        %s3979 = scalar_lea.vmem %s17, 1
        %v3980 = vld [vmem:[%s3979] sm:$0x1]
        %v3981 = vsel %vm727, %v3976, 0.0
        %3982 = vadd.xlane.f32.xlu0 %v3981
        %v3983 = vpop.xlane.xlu0 %3982
        %v3984 = vmul.f32 %v3983, %v1411
        %v3985 = vsub.f32 %v3976, %v3984
        %v3986 = vmul.f32 %v3985, %v3985
        %v3987 = vsel %vm727, %v3986, 0.0
        %3988 = vadd.xlane.f32.xlu0 %v3987
        %v3989 = vpop.xlane.xlu0 %3988
        %v3990 = vmul.f32 %v3989, %v1411
        %v3991 = vadd.f32 %v3990, 1e-05
        %v3992 = vrsqrt.pop %v3991
        %v3993 = vmul.f32 %v3992, %v3991
        %v3994 = vmul.f32 %v3993, %v3992
        %v3995 = vmul.f32 0.5, %v3994
        %v3996 = vsub.f32 1.5, %v3995
        %v3997 = vmul.f32 %v3992, %v3996
        %vm3998 = vweird.f32 %v3991
        %vm3999 = vweird.f32 %v3992
        %vm4000 = vmor %vm3998, %vm3999
        %v4001 = vsel %vm4000, %v3992, %v3997
        %v4002 = vmul.f32 %v3985, %v4001
        %v4004 = vperm.slane %v3978, 0
        %v4006 = vmul.f32 %v4002, %v4004
        %v4008 = vperm.slane %v3980, 0
        %v4010 = vadd.f32 %v4006, %v4008
        %v4011 = vld [vmem:[%s18] sm:$0x1]
        %v4012 = vld [vmem:[%s19] sm:$0x1]
        %v4013 = vsel %vm727, %v4010, 0.0
        %4014 = vadd.xlane.f32.xlu0 %v4013
        %v4015 = vpop.xlane.xlu0 %4014
        %v4016 = vmul.f32 %v4015, %v1411
        %v4017 = vsub.f32 %v4010, %v4016
        %v4018 = vmul.f32 %v4017, %v4017
        %v4019 = vsel %vm727, %v4018, 0.0
        %4020 = vadd.xlane.f32.xlu0 %v4019
        %v4021 = vpop.xlane.xlu0 %4020
        %v4022 = vmul.f32 %v4021, %v1411
        %v4023 = vadd.f32 %v4022, 1e-05
        %v4024 = vrsqrt.pop %v4023
        %v4025 = vmul.f32 %v4024, %v4023
        %v4026 = vmul.f32 %v4025, %v4024
        %v4027 = vmul.f32 0.5, %v4026
        %v4028 = vsub.f32 1.5, %v4027
        %v4029 = vmul.f32 %v4024, %v4028
        %vm4030 = vweird.f32 %v4023
        %vm4031 = vweird.f32 %v4024
        %vm4032 = vmor %vm4030, %vm4031
        %v4033 = vsel %vm4032, %v4024, %v4029
        %v4034 = vmul.f32 %v4017, %v4033
        %v4036 = vperm.slane %v4011, 0
        %v4038 = vmul.f32 %v4034, %v4036
        %v4040 = vperm.slane %v4012, 0
        %v4042 = vadd.f32 %v4038, %v4040
        %4043 = vst.msk [vmem:[%s633] sm:$0xff] %vm727, %v4042
        %s4044 = sand.u32 %s472, 1
        %s4045 = scalar_lea.sflag [#allocation3], %s4044
        %s4046 = sand.u32 %s472, 1
        %s4047 = smul.addr %s4046, 8
        %s4048 = scalar_lea.vmem [#allocation2], %s4047
        // Predicated region
        $region101: #{decoder_forward.1} parent=99 // pred_check
          %p4049 = pneg %p482
        $region102: #{decoder_forward.1} parent=99 // pred_check_branch
          %4051 = sbr.rel (%p4049) target = $region104
        $region103: #{decoder_forward.1} parent=99 // pred_region
          %4053 = vsyncadd %s4045, 0
          %s4054 = smul.addr %s34, 8
          %s4055 = scalar_lea.hbm %s20, %s4054
          %s4057 = sshll.u32 %s4048, 4
          %s4058 = int_to_ptr.vmem [resolvable:$true] %s4057
          %s4059 = sshll.u32 %s4055, 4
          %s4060 = int_to_ptr.hbm [resolvable:$true] %s4059
          %4062 = dma.vmem_to_hbm [thread:$0]  %s4058, 128, %s4060, %s4045
        $region104: #{decoder_forward.1} parent=99 // pred_fallthru
          _
      $region100: #{decoder_forward.1} parent=5 // pred_fallthru
        _
      %p4063 = scmp.le.s32.totalorder 2, %s29
      // Predicated region
      $region105: #{decoder_forward.1} parent=5 // pred_check
        %p4064 = pneg %p4063
      $region106: #{decoder_forward.1} parent=5 // pred_check_branch
        %4066 = sbr.rel (%p4064) target = $region108
      $region107: #{decoder_forward.1} parent=5 // pred_region
        %s4067 = ssub.s32 %s29, 2
        // Predicated region
        $region109: #{decoder_forward.1} parent=107 // pred_check
          %p4068 = pneg %p488
        $region110: #{decoder_forward.1} parent=107 // pred_check_branch
          %4070 = sbr.rel (%p4068) target = $region112
        $region111: #{decoder_forward.1} parent=107 // pred_region
          %s4071 = sand.u32 %s473, 1
          %s4072 = scalar_lea.sflag [#allocation3], %s4071
          %s4073 = sand.u32 %s473, 1
          %s4074 = smul.addr %s4073, 8
          %s4075 = scalar_lea.vmem [#allocation2], %s4074
          %4077 = dma.done %s4072, 128
        $region112: #{decoder_forward.1} parent=107 // pred_fallthru
          _
      $region108: #{decoder_forward.1} parent=5 // pred_fallthru
        _
    $region6: #{decoder_forward.1} parent=1 // loop_footer
      %s33 = sadd.s32 1, %s29
    $region7: #{decoder_forward.1} parent=1 // loop_footer_branch
      %28 = sbr.rel target = $region3
    $region8: #{decoder_forward.1} parent=1 // loop_exit
      _
    %4078 = vsyncpa [#allocation3], 1
    %s4079 = scalar_lea.sflag [#allocation3], 1
    %4080 = vsyncpa %s4079, 1

</llo_original>
